<compile_context>
chip_gen: v6e
topology: v6e:2x2x1
jax: 0.10.0
libtpu: 0.0.40
codegen_flags: <defaults>
</compile_context>

<pallas_src>
import jax
import jax.numpy as jnp
from jax.experimental import pallas as pl
from jax.experimental.pallas import tpu as pltpu

EPS = 1e-5   # nn.BatchNorm2d default eps
LANE = 128


def _make_conv_stats_kernel(W, Cin, S_out, Cout_pad):
    """Pass-1 kernel: per-image conv (9 shifted matmuls) + BN partial sums."""
    Wp = W + 2

    def kernel(x_ref, w_ref, mask_ref, y_ref, stats_ref):
        # x_ref:     (S_ext, Cin)       flattened zero-padded image (row-major over (H+2, W+2))
        # w_ref:     (9*Cin, Cout_pad)  conv weights, tap-major (tap = dy*3+dx)
        # mask_ref:  (S_out, 1)         1.0 on real output columns, 0.0 on the 2 junk cols/row
        # y_ref:     (S_out, Cout_pad)  "wide" conv output (junk cols kept; cropped on host)
        # stats_ref: (2, Cout_pad)      per-image [sum ; sum_of_squares] over valid positions
        acc = jnp.zeros((S_out, Cout_pad), jnp.float32)
        for dy in range(3):
            for dx in range(3):
                off = dy * Wp + dx                      # flat spatial shift of this tap
                tap = dy * 3 + dx
                xs = x_ref[pl.ds(off, S_out), :]        # (S_out, Cin) contiguous slice
                wt = w_ref[pl.ds(tap * Cin, Cin), :]    # (Cin, Cout_pad)
                acc = acc + jnp.dot(xs, wt, preferred_element_type=jnp.float32)
        y_ref[...] = acc
        yv = acc * mask_ref[...]                        # zero out junk columns for the stats
        s1 = jnp.sum(yv, axis=0, keepdims=True)         # (1, Cout_pad)
        s2 = jnp.sum(yv * yv, axis=0, keepdims=True)    # (1, Cout_pad)
        stats_ref[...] = jnp.concatenate([s1, s2], axis=0)

    return kernel


def _bn_relu_kernel(y_ref, scale_ref, shift_ref, o_ref):
    # y_ref: (tile_m, Cout_pad); scale/shift: (1, Cout_pad) resident across grid steps.
    o_ref[...] = jnp.maximum(y_ref[...] * scale_ref[...] + shift_ref[...], 0.0)


def _pick_tile(m, target=512):
    """Largest tile <= target that divides m and is sublane (8) aligned; fallback: m."""
    for cand in range(min(m, target), 7, -1):
        if m % cand == 0 and cand % 8 == 0:
            return cand
    return m


@jax.jit
def conv_block_forward(x_nchw, conv_w, gamma, beta):
    """x_nchw: (N, Cin, H, W); conv_w: (Cout, Cin, 3, 3); gamma, beta: (Cout,)."""
    N, Cin, H, W = x_nchw.shape
    Cout = conv_w.shape[0]
    Cout_pad = ((Cout + LANE - 1) // LANE) * LANE
    Wp = W + 2
    S_pad = (H + 2) * Wp            # flattened padded-image rows
    S_out = H * Wp                  # "wide" output rows (2 junk columns per image row)
    extra = 2 * Wp + 2              # >= max tap offset, keeps every shifted slice in bounds
    S_ext = S_pad + extra

    # ---- layout plumbing (NCHW boundary kept for PyTorch parity; a full NHWC network
    #      would drop these two transposes entirely) ----
    x_nhwc = jnp.transpose(x_nchw, (0, 2, 3, 1)).astype(jnp.float32)
    x_padded = jnp.pad(x_nhwc, ((0, 0), (1, 1), (1, 1), (0, 0)))
    x_flat = jnp.pad(x_padded.reshape(N, S_pad, Cin), ((0, 0), (0, extra), (0, 0)))

    # (Cout, Cin, kh, kw) -> (kh, kw, Cin, Cout) -> (9*Cin, Cout_pad); pad channels are zero.
    w_mat = jnp.transpose(conv_w, (2, 3, 1, 0)).reshape(9 * Cin, Cout).astype(jnp.float32)
    w_mat = jnp.pad(w_mat, ((0, 0), (0, Cout_pad - Cout)))
    # NOTE: for production, casting x_flat / w_mat to bf16 (keeping the f32 MXU accumulate
    # and f32 BN math) halves DMA bytes on v5e/v6e/v7x; kept f32 here for exact parity.

    # validity mask over the wide output rows (column index within padded width < W)
    col = jnp.arange(S_out, dtype=jnp.int32) % Wp
    mask = (col < W).astype(jnp.float32).reshape(S_out, 1)

    # ---- pass 1: conv + BN partial stats; grid over batch, 'parallel' (megacore-safe) ----
    conv_kernel = _make_conv_stats_kernel(W, Cin, S_out, Cout_pad)
    y_wide, stats = pl.pallas_call(
        conv_kernel,
        grid=(N,),
        in_specs=[
            pl.BlockSpec((None, S_ext, Cin), lambda n: (n, 0, 0)),
            pl.BlockSpec((9 * Cin, Cout_pad), lambda n: (0, 0)),
            pl.BlockSpec((S_out, 1), lambda n: (0, 0)),
        ],
        out_specs=[
            pl.BlockSpec((None, S_out, Cout_pad), lambda n: (n, 0, 0)),
            pl.BlockSpec((None, 2, Cout_pad), lambda n: (n, 0, 0)),
        ],
        out_shape=[
            jax.ShapeDtypeStruct((N, S_out, Cout_pad), jnp.float32),
            jax.ShapeDtypeStruct((N, 2, Cout_pad), jnp.float32),
        ],
        compiler_params=pltpu.CompilerParams(
            dimension_semantics=("parallel",),
            vmem_limit_bytes=32 * 1024 * 1024,
        ),
        cost_estimate=pl.CostEstimate(
            flops=2 * N * S_out * 9 * Cin * Cout_pad,
            transcendentals=0,
            bytes_accessed=4 * (N * S_ext * Cin + 9 * Cin * Cout_pad
                                + N * S_out * Cout_pad + N * 2 * Cout_pad),
        ),
    )(x_flat, w_mat, mask)

    # ---- tiny per-channel reduction + folding BN into scale/shift (plain JAX, O(Cout)) ----
    count = jnp.float32(N * H * W)
    sums = jnp.sum(stats[:, 0, :], axis=0)
    sqs = jnp.sum(stats[:, 1, :], axis=0)
    mean = sums / count
    var = jnp.maximum(sqs / count - mean * mean, 0.0)    # biased variance (training-mode BN)
    inv = jax.lax.rsqrt(var + EPS)
    gamma_p = jnp.pad(gamma.astype(jnp.float32), (0, Cout_pad - Cout))   # pad with 0, not 1
    beta_p = jnp.pad(beta.astype(jnp.float32), (0, Cout_pad - Cout))
    scale = (gamma_p * inv).reshape(1, Cout_pad)
    shift = (beta_p - mean * gamma_p * inv).reshape(1, Cout_pad)

    # ---- pass 2: fused normalize + ReLU over lane-dense, 8-aligned M tiles ('parallel') ----
    M = N * S_out
    tile_m = _pick_tile(M)
    y2 = y_wide.reshape(M, Cout_pad)
    out_wide = pl.pallas_call(
        _bn_relu_kernel,
        grid=(M // tile_m,),
        in_specs=[
            pl.BlockSpec((tile_m, Cout_pad), lambda i: (i, 0)),
            pl.BlockSpec((1, Cout_pad), lambda i: (0, 0)),
            pl.BlockSpec((1, Cout_pad), lambda i: (0, 0)),
        ],
        out_specs=pl.BlockSpec((tile_m, Cout_pad), lambda i: (i, 0)),
        out_shape=jax.ShapeDtypeStruct((M, Cout_pad), jnp.float32),
        compiler_params=pltpu.CompilerParams(
            dimension_semantics=("parallel",),
            vmem_limit_bytes=32 * 1024 * 1024,
        ),
        cost_estimate=pl.CostEstimate(
            flops=2 * M * Cout_pad,
            transcendentals=0,
            bytes_accessed=4 * (2 * M * Cout_pad + 2 * Cout_pad),
        ),
    )(y2, scale, shift)

    # crop the junk columns and the padded channels, then back to NCHW
    out_nhwc = out_wide.reshape(N, H, Wp, Cout_pad)[:, :, :W, :Cout]
    return jnp.transpose(out_nhwc, (0, 3, 1, 2))


def reference_forward(x, w, gamma, beta):
    """Pure-JAX reference matching PyTorch ConvBlock.forward in training mode."""
    y = jax.lax.conv_general_dilated(
        x.astype(jnp.float32), w.astype(jnp.float32),
        window_strides=(1, 1), padding="SAME",
        dimension_numbers=("NCHW", "OIHW", "NCHW"))
    mean = jnp.mean(y, axis=(0, 2, 3), keepdims=True)
    var = jnp.mean((y - mean) ** 2, axis=(0, 2, 3), keepdims=True)   # biased
    yn = (y - mean) * jax.lax.rsqrt(var + EPS)
    yn = yn * gamma.reshape(1, -1, 1, 1) + beta.reshape(1, -1, 1, 1)
    return jnp.maximum(yn, 0.0)


if __name__ == "__main__":
    key = jax.random.PRNGKey(0)
    k_x, k_w, k_g, k_b = jax.random.split(key, 4)

    N, Cin, Cout, H, W = 2, 4, 8, 16, 16
    x = jax.random.normal(k_x, (N, Cin, H, W), dtype=jnp.float32)
    conv_w = 0.1 * jax.random.normal(k_w, (Cout, Cin, 3, 3), dtype=jnp.float32)
    gamma = 1.0 + 0.1 * jax.random.normal(k_g, (Cout,), dtype=jnp.float32)
    beta = 0.1 * jax.random.normal(k_b, (Cout,), dtype=jnp.float32)

    out = jax.block_until_ready(conv_block_forward(x, conv_w, gamma, beta))
    ref = jax.block_until_ready(reference_forward(x, conv_w, gamma, beta))

    assert out.shape == (N, Cout, H, W)
    err = float(jnp.max(jnp.abs(out - ref)))
    assert jnp.allclose(out, ref, atol=1e-4, rtol=1e-4), err

    print("KERNEL_OK")
</pallas_src>

<mosaic_0001>
module attributes {stable_mosaic.version = 11 : i64} {
  func.func @kernel(%arg0: i32, %arg1: memref<1x362x4xf32, #tpu.memory_space<vmem>>, %arg2: memref<36x128xf32, #tpu.memory_space<vmem>>, %arg3: memref<288x1xf32, #tpu.memory_space<vmem>>, %arg4: memref<1x288x128xf32, #tpu.memory_space<vmem>>, %arg5: memref<1x2x128xf32, #tpu.memory_space<vmem>>) attributes {dimension_semantics = [#tpu.dimension_semantics<parallel>], iteration_bounds = array<i64: 2>, scalar_prefetch = 0 : i64, scratch_operands = 0 : i64, tpu.core_type = #tpu.core_type<tc>, window_params = [{transform_indices = @transform_0, window_bounds = array<i64: 1, 362, 4>}, {pipeline_mode = #tpu.pipeline_mode<synchronous>, transform_indices = @transform_1, window_bounds = array<i64: 36, 128>}, {pipeline_mode = #tpu.pipeline_mode<synchronous>, transform_indices = @transform_2, window_bounds = array<i64: 288, 1>}, {transform_indices = @transform_3, window_bounds = array<i64: 1, 288, 128>}, {transform_indices = @transform_4, window_bounds = array<i64: 1, 2, 128>}]} {
    %cst = arith.constant 0.000000e+00 : f32
    %0 = vector.broadcast %cst : f32 to vector<288x128xf32>
    %c0 = arith.constant 0 : index
    %c0_0 = arith.constant 0 : index
    %c0_1 = arith.constant 0 : index
    %1 = vector.load %arg1[%c0, %c0_0, %c0_1] : memref<1x362x4xf32, #tpu.memory_space<vmem>>, vector<1x288x4xf32>
    %2 = vector.shape_cast %1 : vector<1x288x4xf32> to vector<288x4xf32>
    %c0_2 = arith.constant 0 : index
    %c0_3 = arith.constant 0 : index
    %3 = vector.load %arg2[%c0_2, %c0_3] : memref<36x128xf32, #tpu.memory_space<vmem>>, vector<4x128xf32>
    %cst_4 = arith.constant dense<0.000000e+00> : vector<288x128xf32>
    %4 = tpu.matmul %2, %3, %cst_4 {dimension_numbers = #tpu.dot_dimension_numbers<[1], [0], [0], [1], [0, 0, 1, 1], [], []>} : vector<288x4xf32>, vector<4x128xf32>, vector<288x128xf32> -> vector<288x128xf32>
    %5 = arith.addf %0, %4 : vector<288x128xf32>
    %c0_5 = arith.constant 0 : index
    %c1 = arith.constant 1 : index
    %c0_6 = arith.constant 0 : index
    %6 = vector.load %arg1[%c0_5, %c1, %c0_6] : memref<1x362x4xf32, #tpu.memory_space<vmem>>, vector<1x288x4xf32>
    %7 = vector.shape_cast %6 : vector<1x288x4xf32> to vector<288x4xf32>
    %c4 = arith.constant 4 : index
    %c0_7 = arith.constant 0 : index
    %8 = vector.load %arg2[%c4, %c0_7] : memref<36x128xf32, #tpu.memory_space<vmem>>, vector<4x128xf32>
    %cst_8 = arith.constant dense<0.000000e+00> : vector<288x128xf32>
    %9 = tpu.matmul %7, %8, %cst_8 {dimension_numbers = #tpu.dot_dimension_numbers<[1], [0], [0], [1], [0, 0, 1, 1], [], []>} : vector<288x4xf32>, vector<4x128xf32>, vector<288x128xf32> -> vector<288x128xf32>
    %10 = arith.addf %5, %9 : vector<288x128xf32>
    %c0_9 = arith.constant 0 : index
    %c2 = arith.constant 2 : index
    %c0_10 = arith.constant 0 : index
    %11 = vector.load %arg1[%c0_9, %c2, %c0_10] : memref<1x362x4xf32, #tpu.memory_space<vmem>>, vector<1x288x4xf32>
    %12 = vector.shape_cast %11 : vector<1x288x4xf32> to vector<288x4xf32>
    %c8 = arith.constant 8 : index
    %c0_11 = arith.constant 0 : index
    %13 = vector.load %arg2[%c8, %c0_11] : memref<36x128xf32, #tpu.memory_space<vmem>>, vector<4x128xf32>
    %cst_12 = arith.constant dense<0.000000e+00> : vector<288x128xf32>
    %14 = tpu.matmul %12, %13, %cst_12 {dimension_numbers = #tpu.dot_dimension_numbers<[1], [0], [0], [1], [0, 0, 1, 1], [], []>} : vector<288x4xf32>, vector<4x128xf32>, vector<288x128xf32> -> vector<288x128xf32>
    %15 = arith.addf %10, %14 : vector<288x128xf32>
    %c0_13 = arith.constant 0 : index
    %c18 = arith.constant 18 : index
    %c0_14 = arith.constant 0 : index
    %16 = vector.load %arg1[%c0_13, %c18, %c0_14] : memref<1x362x4xf32, #tpu.memory_space<vmem>>, vector<1x288x4xf32>
    %17 = vector.shape_cast %16 : vector<1x288x4xf32> to vector<288x4xf32>
    %c12 = arith.constant 12 : index
    %c0_15 = arith.constant 0 : index
    %18 = vector.load %arg2[%c12, %c0_15] : memref<36x128xf32, #tpu.memory_space<vmem>>, vector<4x128xf32>
    %cst_16 = arith.constant dense<0.000000e+00> : vector<288x128xf32>
    %19 = tpu.matmul %17, %18, %cst_16 {dimension_numbers = #tpu.dot_dimension_numbers<[1], [0], [0], [1], [0, 0, 1, 1], [], []>} : vector<288x4xf32>, vector<4x128xf32>, vector<288x128xf32> -> vector<288x128xf32>
    %20 = arith.addf %15, %19 : vector<288x128xf32>
    %c0_17 = arith.constant 0 : index
    %c19 = arith.constant 19 : index
    %c0_18 = arith.constant 0 : index
    %21 = vector.load %arg1[%c0_17, %c19, %c0_18] : memref<1x362x4xf32, #tpu.memory_space<vmem>>, vector<1x288x4xf32>
    %22 = vector.shape_cast %21 : vector<1x288x4xf32> to vector<288x4xf32>
    %c16 = arith.constant 16 : index
    %c0_19 = arith.constant 0 : index
    %23 = vector.load %arg2[%c16, %c0_19] : memref<36x128xf32, #tpu.memory_space<vmem>>, vector<4x128xf32>
    %cst_20 = arith.constant dense<0.000000e+00> : vector<288x128xf32>
    %24 = tpu.matmul %22, %23, %cst_20 {dimension_numbers = #tpu.dot_dimension_numbers<[1], [0], [0], [1], [0, 0, 1, 1], [], []>} : vector<288x4xf32>, vector<4x128xf32>, vector<288x128xf32> -> vector<288x128xf32>
    %25 = arith.addf %20, %24 : vector<288x128xf32>
    %c0_21 = arith.constant 0 : index
    %c20 = arith.constant 20 : index
    %c0_22 = arith.constant 0 : index
    %26 = vector.load %arg1[%c0_21, %c20, %c0_22] : memref<1x362x4xf32, #tpu.memory_space<vmem>>, vector<1x288x4xf32>
    %27 = vector.shape_cast %26 : vector<1x288x4xf32> to vector<288x4xf32>
    %c20_23 = arith.constant 20 : index
    %c0_24 = arith.constant 0 : index
    %28 = vector.load %arg2[%c20_23, %c0_24] : memref<36x128xf32, #tpu.memory_space<vmem>>, vector<4x128xf32>
    %cst_25 = arith.constant dense<0.000000e+00> : vector<288x128xf32>
    %29 = tpu.matmul %27, %28, %cst_25 {dimension_numbers = #tpu.dot_dimension_numbers<[1], [0], [0], [1], [0, 0, 1, 1], [], []>} : vector<288x4xf32>, vector<4x128xf32>, vector<288x128xf32> -> vector<288x128xf32>
    %30 = arith.addf %25, %29 : vector<288x128xf32>
    %c0_26 = arith.constant 0 : index
    %c36 = arith.constant 36 : index
    %c0_27 = arith.constant 0 : index
    %31 = vector.load %arg1[%c0_26, %c36, %c0_27] : memref<1x362x4xf32, #tpu.memory_space<vmem>>, vector<1x288x4xf32>
    %32 = vector.shape_cast %31 : vector<1x288x4xf32> to vector<288x4xf32>
    %c24 = arith.constant 24 : index
    %c0_28 = arith.constant 0 : index
    %33 = vector.load %arg2[%c24, %c0_28] : memref<36x128xf32, #tpu.memory_space<vmem>>, vector<4x128xf32>
    %cst_29 = arith.constant dense<0.000000e+00> : vector<288x128xf32>
    %34 = tpu.matmul %32, %33, %cst_29 {dimension_numbers = #tpu.dot_dimension_numbers<[1], [0], [0], [1], [0, 0, 1, 1], [], []>} : vector<288x4xf32>, vector<4x128xf32>, vector<288x128xf32> -> vector<288x128xf32>
    %35 = arith.addf %30, %34 : vector<288x128xf32>
    %c0_30 = arith.constant 0 : index
    %c37 = arith.constant 37 : index
    %c0_31 = arith.constant 0 : index
    %36 = vector.load %arg1[%c0_30, %c37, %c0_31] : memref<1x362x4xf32, #tpu.memory_space<vmem>>, vector<1x288x4xf32>
    %37 = vector.shape_cast %36 : vector<1x288x4xf32> to vector<288x4xf32>
    %c28 = arith.constant 28 : index
    %c0_32 = arith.constant 0 : index
    %38 = vector.load %arg2[%c28, %c0_32] : memref<36x128xf32, #tpu.memory_space<vmem>>, vector<4x128xf32>
    %cst_33 = arith.constant dense<0.000000e+00> : vector<288x128xf32>
    %39 = tpu.matmul %37, %38, %cst_33 {dimension_numbers = #tpu.dot_dimension_numbers<[1], [0], [0], [1], [0, 0, 1, 1], [], []>} : vector<288x4xf32>, vector<4x128xf32>, vector<288x128xf32> -> vector<288x128xf32>
    %40 = arith.addf %35, %39 : vector<288x128xf32>
    %c0_34 = arith.constant 0 : index
    %c38 = arith.constant 38 : index
    %c0_35 = arith.constant 0 : index
    %41 = vector.load %arg1[%c0_34, %c38, %c0_35] : memref<1x362x4xf32, #tpu.memory_space<vmem>>, vector<1x288x4xf32>
    %42 = vector.shape_cast %41 : vector<1x288x4xf32> to vector<288x4xf32>
    %c32 = arith.constant 32 : index
    %c0_36 = arith.constant 0 : index
    %43 = vector.load %arg2[%c32, %c0_36] : memref<36x128xf32, #tpu.memory_space<vmem>>, vector<4x128xf32>
    %cst_37 = arith.constant dense<0.000000e+00> : vector<288x128xf32>
    %44 = tpu.matmul %42, %43, %cst_37 {dimension_numbers = #tpu.dot_dimension_numbers<[1], [0], [0], [1], [0, 0, 1, 1], [], []>} : vector<288x4xf32>, vector<4x128xf32>, vector<288x128xf32> -> vector<288x128xf32>
    %45 = arith.addf %40, %44 : vector<288x128xf32>
    %c0_38 = arith.constant 0 : index
    %c0_39 = arith.constant 0 : index
    %c0_40 = arith.constant 0 : index
    %46 = vector.load %arg4[%c0_38, %c0_39, %c0_40] : memref<1x288x128xf32, #tpu.memory_space<vmem>>, vector<1x288x128xf32>
    %47 = vector.shape_cast %46 : vector<1x288x128xf32> to vector<288x128xf32>
    %48 = vector.shape_cast %45 : vector<288x128xf32> to vector<1x288x128xf32>
    tpu.vector_store %arg4[%c0_38, %c0_39, %c0_40], %48 {strides = array<i32>} : memref<1x288x128xf32, #tpu.memory_space<vmem>>, vector<1x288x128xf32>,
    %c0_41 = arith.constant 0 : index
    %c0_42 = arith.constant 0 : index
    %49 = vector.load %arg3[%c0_41, %c0_42] : memref<288x1xf32, #tpu.memory_space<vmem>>, vector<288x1xf32>
    %50 = vector.broadcast %49 : vector<288x1xf32> to vector<288x128xf32>
    %51 = arith.mulf %45, %50 : vector<288x128xf32>
    %cst_43 = arith.constant dense<0.000000e+00> : vector<128xf32>
    %52 = vector.multi_reduction <add>, %51, %cst_43 [0] : vector<288x128xf32> to vector<128xf32>
    %53 = vector.shape_cast %52 : vector<128xf32> to vector<1x128xf32>
    %54 = arith.mulf %51, %51 : vector<288x128xf32>
    %cst_44 = arith.constant dense<0.000000e+00> : vector<128xf32>
    %55 = vector.multi_reduction <add>, %54, %cst_44 [0] : vector<288x128xf32> to vector<128xf32>
    %56 = vector.shape_cast %55 : vector<128xf32> to vector<1x128xf32>
    %57 = tpu.concatenate %53, %56 in 0 : vector<1x128xf32>, vector<1x128xf32> -> vector<2x128xf32>
    %c0_45 = arith.constant 0 : index
    %c0_46 = arith.constant 0 : index
    %c0_47 = arith.constant 0 : index
    %58 = vector.load %arg5[%c0_45, %c0_46, %c0_47] : memref<1x2x128xf32, #tpu.memory_space<vmem>>, vector<1x2x128xf32>
    %59 = vector.shape_cast %58 : vector<1x2x128xf32> to vector<2x128xf32>
    %60 = vector.shape_cast %57 : vector<2x128xf32> to vector<1x2x128xf32>
    tpu.vector_store %arg5[%c0_45, %c0_46, %c0_47], %60 {strides = array<i32>} : memref<1x2x128xf32, #tpu.memory_space<vmem>>, vector<1x2x128xf32>,
    return
  }
  func.func @transform_0(%arg0: i32) -> (i32, i32, i32) {
    %c0_i32 = arith.constant 0 : i32
    %c0_i32_0 = arith.constant 0 : i32
    %c0_i32_1 = arith.constant 0 : i32
    return %arg0, %c0_i32, %c0_i32_0 : i32, i32, i32
  }
  func.func @transform_1(%arg0: i32) -> (i32, i32) {
    %c0_i32 = arith.constant 0 : i32
    %c0_i32_0 = arith.constant 0 : i32
    %c0_i32_1 = arith.constant 0 : i32
    return %c0_i32, %c0_i32_0 : i32, i32
  }
  func.func @transform_2(%arg0: i32) -> (i32, i32) {
    %c0_i32 = arith.constant 0 : i32
    %c0_i32_0 = arith.constant 0 : i32
    %c0_i32_1 = arith.constant 0 : i32
    return %c0_i32, %c0_i32_0 : i32, i32
  }
  func.func @transform_3(%arg0: i32) -> (i32, i32, i32) {
    %c0_i32 = arith.constant 0 : i32
    %c0_i32_0 = arith.constant 0 : i32
    %c0_i32_1 = arith.constant 0 : i32
    return %arg0, %c0_i32, %c0_i32_0 : i32, i32, i32
  }
  func.func @transform_4(%arg0: i32) -> (i32, i32, i32) {
    %c0_i32 = arith.constant 0 : i32
    %c0_i32_0 = arith.constant 0 : i32
    %c0_i32_1 = arith.constant 0 : i32
    return %arg0, %c0_i32, %c0_i32_0 : i32, i32, i32
  }
}

module attributes {stable_mosaic.version = 11 : i64} {
  func.func @_bn_relu_kernel(%arg0: i32, %arg1: memref<288x128xf32, #tpu.memory_space<vmem>>, %arg2: memref<1x128xf32, #tpu.memory_space<vmem>>, %arg3: memref<1x128xf32, #tpu.memory_space<vmem>>, %arg4: memref<288x128xf32, #tpu.memory_space<vmem>>) attributes {dimension_semantics = [#tpu.dimension_semantics<parallel>], iteration_bounds = array<i64: 2>, scalar_prefetch = 0 : i64, scratch_operands = 0 : i64, tpu.core_type = #tpu.core_type<tc>, window_params = [{transform_indices = @transform_0, window_bounds = array<i64: 288, 128>}, {pipeline_mode = #tpu.pipeline_mode<synchronous>, transform_indices = @transform_1, window_bounds = array<i64: 1, 128>}, {pipeline_mode = #tpu.pipeline_mode<synchronous>, transform_indices = @transform_2, window_bounds = array<i64: 1, 128>}, {transform_indices = @transform_3, window_bounds = array<i64: 288, 128>}]} {
    %c0 = arith.constant 0 : index
    %c0_0 = arith.constant 0 : index
    %0 = vector.load %arg1[%c0, %c0_0] : memref<288x128xf32, #tpu.memory_space<vmem>>, vector<288x128xf32>
    %c0_1 = arith.constant 0 : index
    %c0_2 = arith.constant 0 : index
    %1 = vector.load %arg2[%c0_1, %c0_2] : memref<1x128xf32, #tpu.memory_space<vmem>>, vector<1x128xf32>
    %2 = vector.broadcast %1 : vector<1x128xf32> to vector<288x128xf32>
    %3 = arith.mulf %0, %2 : vector<288x128xf32>
    %c0_3 = arith.constant 0 : index
    %c0_4 = arith.constant 0 : index
    %4 = vector.load %arg3[%c0_3, %c0_4] : memref<1x128xf32, #tpu.memory_space<vmem>>, vector<1x128xf32>
    %5 = vector.broadcast %4 : vector<1x128xf32> to vector<288x128xf32>
    %6 = arith.addf %3, %5 : vector<288x128xf32>
    %cst = arith.constant 0.000000e+00 : f32
    %7 = vector.broadcast %cst : f32 to vector<288x128xf32>
    %8 = arith.maximumf %6, %7 : vector<288x128xf32>
    %c0_5 = arith.constant 0 : index
    %c0_6 = arith.constant 0 : index
    %9 = vector.load %arg4[%c0_5, %c0_6] : memref<288x128xf32, #tpu.memory_space<vmem>>, vector<288x128xf32>
    tpu.vector_store %arg4[%c0_5, %c0_6], %8 {strides = array<i32>} : memref<288x128xf32, #tpu.memory_space<vmem>>, vector<288x128xf32>,
    return
  }
  func.func @transform_0(%arg0: i32) -> (i32, i32) {
    %c0_i32 = arith.constant 0 : i32
    %c0_i32_0 = arith.constant 0 : i32
    return %arg0, %c0_i32 : i32, i32
  }
  func.func @transform_1(%arg0: i32) -> (i32, i32) {
    %c0_i32 = arith.constant 0 : i32
    %c0_i32_0 = arith.constant 0 : i32
    %c0_i32_1 = arith.constant 0 : i32
    return %c0_i32, %c0_i32_0 : i32, i32
  }
  func.func @transform_2(%arg0: i32) -> (i32, i32) {
    %c0_i32 = arith.constant 0 : i32
    %c0_i32_0 = arith.constant 0 : i32
    %c0_i32_1 = arith.constant 0 : i32
    return %c0_i32, %c0_i32_0 : i32, i32
  }
  func.func @transform_3(%arg0: i32) -> (i32, i32) {
    %c0_i32 = arith.constant 0 : i32
    %c0_i32_0 = arith.constant 0 : i32
    return %arg0, %c0_i32 : i32, i32
  }
}

</mosaic_0001>

<llo_original>
// kernel: conv_block_forward.3
$region0: #{conv_block_forward.3}
  #allocation0 [shape = 'u32[]', space=smem, size = 0x4, offset = 0x4, fixed_abs, tag = 'smem constant byte address 0x4 - core index']
  #allocation1 [shape = 'u32[144,128]{1,0:T(1,128)}', space=vmem, size = 0x12000, scoped, tag = 'internal scratch']
  %s0 = inlined_call_operand.vmem [shape: f32[576,128], index: 0, kind: input, shape index: {}]
  %s1 = inlined_call_operand.vmem [shape: f32[1,128], index: 1, kind: input, shape index: {}]
  %s2 = inlined_call_operand.vmem [shape: f32[1,128], index: 2, kind: input, shape index: {}]
  %s3 = inlined_call_operand.vmem [shape: f32[576,128], index: 3, kind: output, shape index: {}]
  %s4 = sld [smem:[#allocation0]]
  $region45: #{conv_block_forward.3} parent=0
    _
  %s6 = ssub.s32 1, %s4
  %s7 = scalar_select 0, %s6, %s4
  loop: start=0, step=1, limit=4
  $region2: #{conv_block_forward.3} parent=0 // loop_pre_header
    _
  $region3: #{conv_block_forward.3} parent=0 // loop_header
    %s9 = sphi 0, %s13
    %p10 = scmp.ge.s32.totalorder %s9, 4
    %s19 = sphi 0, %s21
    %s22 = sphi 0, %s19
    %s23 = sphi 0, %s22
    %s39 = sphi 0, %s23
    %s43 = sphi 0, %s43
    %s45 = sphi 0, %s43
    %s46 = sphi 0, %s45
    %s60 = sphi 0, %s46
    %s64 = sphi 0, %s64
    %s66 = sphi 0, %s64
    %s67 = sphi 0, %s66
    %s81 = sphi 0, %s67
    %s87 = sphi 0, %s89
    %s90 = sphi 0, %s87
    %s91 = sphi 0, %s90
    %s107 = sphi 0, %s91
  $region4: #{conv_block_forward.3} parent=0 // loop_header_branch
    %12 = sbr.rel (%p10) target = $region8
  $region5: #{conv_block_forward.3} parent=0 // loop_body
    %s14 = ssub.s32 %s9, 1
    %s15 = ssub.s32 %s9, 2
    %s16 = sadd.s32 %s9, 1
    %s17 = ssub.s32 %s9, %s16
    %p18 = scmp.eq.s32.totalorder %s17, 0
    %s20 = sadd.s32 %s19, 1
    %s21 = scalar_select %p18, %s19, %s20
    %p24 = pneg %p18
    %p25 = scmp.eq.s32.totalorder %s9, 1
    %p26 = por %p24, %p25
    %p27 = scmp.ne.s32.totalorder %s19, %s22
    %p28 = scmp.eq.s32.totalorder %s9, 0
    %p29 = por %p27, %p28
    %p30 = scmp.ne.s32.totalorder %s19, %s22
    %p31 = scmp.eq.s32.totalorder %s14, 1
    %p32 = por %p30, %p31
    %p33 = scmp.ne.s32.totalorder %s22, %s23
    %p34 = scmp.eq.s32.totalorder %s14, 0
    %p35 = por %p33, %p34
    %p36 = scmp.ne.s32.totalorder %s22, %s23
    %p37 = scmp.eq.s32.totalorder %s15, 1
    %p38 = por %p36, %p37
    %p40 = scmp.ne.s32.totalorder %s23, %s39
    %p41 = scmp.eq.s32.totalorder %s15, 0
    %p42 = por %p40, %p41
    %s44 = sadd.s32 %s43, 1
    %p47 = scmp.eq.s32.totalorder %s9, 1
    %p48 = scmp.ne.s32.totalorder %s43, %s45
    %p49 = scmp.eq.s32.totalorder %s9, 0
    %p50 = por %p48, %p49
    %p51 = scmp.ne.s32.totalorder %s43, %s45
    %p52 = scmp.eq.s32.totalorder %s14, 1
    %p53 = por %p51, %p52
    %p54 = scmp.ne.s32.totalorder %s45, %s46
    %p55 = scmp.eq.s32.totalorder %s14, 0
    %p56 = por %p54, %p55
    %p57 = scmp.ne.s32.totalorder %s45, %s46
    %p58 = scmp.eq.s32.totalorder %s15, 1
    %p59 = por %p57, %p58
    %p61 = scmp.ne.s32.totalorder %s46, %s60
    %p62 = scmp.eq.s32.totalorder %s15, 0
    %p63 = por %p61, %p62
    %s65 = sadd.s32 %s64, 1
    %p68 = scmp.eq.s32.totalorder %s9, 1
    %p69 = scmp.ne.s32.totalorder %s64, %s66
    %p70 = scmp.eq.s32.totalorder %s9, 0
    %p71 = por %p69, %p70
    %p72 = scmp.ne.s32.totalorder %s64, %s66
    %p73 = scmp.eq.s32.totalorder %s14, 1
    %p74 = por %p72, %p73
    %p75 = scmp.ne.s32.totalorder %s66, %s67
    %p76 = scmp.eq.s32.totalorder %s14, 0
    %p77 = por %p75, %p76
    %p78 = scmp.ne.s32.totalorder %s66, %s67
    %p79 = scmp.eq.s32.totalorder %s15, 1
    %p80 = por %p78, %p79
    %p82 = scmp.ne.s32.totalorder %s67, %s81
    %p83 = scmp.eq.s32.totalorder %s15, 0
    %p84 = por %p82, %p83
    %s85 = ssub.s32 %s9, %s16
    %p86 = scmp.eq.s32.totalorder %s85, 0
    %s88 = sadd.s32 %s87, 1
    %s89 = scalar_select %p86, %s87, %s88
    %p92 = pneg %p86
    %p93 = scmp.eq.s32.totalorder %s9, 1
    %p94 = por %p92, %p93
    %p95 = scmp.ne.s32.totalorder %s87, %s90
    %p96 = scmp.eq.s32.totalorder %s9, 0
    %p97 = por %p95, %p96
    %p98 = scmp.ne.s32.totalorder %s87, %s90
    %p99 = scmp.eq.s32.totalorder %s14, 1
    %p100 = por %p98, %p99
    %p101 = scmp.ne.s32.totalorder %s90, %s91
    %p102 = scmp.eq.s32.totalorder %s14, 0
    %p103 = por %p101, %p102
    %p104 = scmp.ne.s32.totalorder %s90, %s91
    %p105 = scmp.eq.s32.totalorder %s15, 1
    %p106 = por %p104, %p105
    %p108 = scmp.ne.s32.totalorder %s91, %s107
    %p109 = scmp.eq.s32.totalorder %s15, 0
    %p110 = por %p108, %p109
    %p111 = scmp.le.s32.totalorder 1, %s9
    %p112 = scmp.lt.s32.totalorder %s9, 3
    %p113 = pnand %p111, %p112
    %p114 = pneg %p113
    // Predicated region
    $region9: #{conv_block_forward.3} parent=5 // pred_check
      _
    $region10: #{conv_block_forward.3} parent=5 // pred_check_branch
      %116 = sbr.rel (%p113) target = $region12
    $region11: #{conv_block_forward.3} parent=5 // pred_region
      %s117 = ssub.s32 %s9, 1
      // Predicated region
      $region13: #{conv_block_forward.3} parent=11 // pred_check
        %p118 = pneg %p56
      $region14: #{conv_block_forward.3} parent=11 // pred_check_branch
        %120 = sbr.rel (%p118) target = $region16
      $region15: #{conv_block_forward.3} parent=11 // pred_region
        _
      $region16: #{conv_block_forward.3} parent=11 // pred_fallthru
        _
      // Predicated region
      $region17: #{conv_block_forward.3} parent=11 // pred_check
        %p121 = pneg %p77
      $region18: #{conv_block_forward.3} parent=11 // pred_check_branch
        %123 = sbr.rel (%p121) target = $region20
      $region19: #{conv_block_forward.3} parent=11 // pred_region
        _
      $region20: #{conv_block_forward.3} parent=11 // pred_fallthru
        _
    $region12: #{conv_block_forward.3} parent=5 // pred_fallthru
      _
    %p124 = scmp.lt.s32.totalorder %s9, 2
    // Predicated region
    $region21: #{conv_block_forward.3} parent=5 // pred_check
      %p125 = pneg %p124
    $region22: #{conv_block_forward.3} parent=5 // pred_check_branch
      %127 = sbr.rel (%p125) target = $region24
    $region23: #{conv_block_forward.3} parent=5 // pred_region
      // Predicated region
      $region25: #{conv_block_forward.3} parent=23 // pred_check
        %p128 = pneg %p29
      $region26: #{conv_block_forward.3} parent=23 // pred_check_branch
        %130 = sbr.rel (%p128) target = $region28
      $region27: #{conv_block_forward.3} parent=23 // pred_region
        %s131 = smul.u32 36, %s9
        %p132 = scmp.lt.s32.totalorder %s131, 71
        %s133 = scalar_select %p132, %s131, 71
        %s134 = smul.addr %s133, 8
        %s135 = scalar_lea.vmem %s0, %s134
        %s136 = smul.u32 36, %s9
      $region28: #{conv_block_forward.3} parent=23 // pred_fallthru
        _
    $region24: #{conv_block_forward.3} parent=5 // pred_fallthru
      _
    %p137 = scmp.le.s32.totalorder 1, %s9
    %p138 = scmp.lt.s32.totalorder %s9, 3
    %p139 = pnand %p137, %p138
    %p140 = pneg %p139
    // Predicated region
    $region29: #{conv_block_forward.3} parent=5 // pred_check
      _
    $region30: #{conv_block_forward.3} parent=5 // pred_check_branch
      %142 = sbr.rel (%p139) target = $region32
    $region31: #{conv_block_forward.3} parent=5 // pred_region
      %s143 = ssub.s32 %s9, 1
      %s144 = smul.u32 36, %s14
      %p145 = scmp.lt.s32.totalorder %s144, 71
      %s146 = scalar_select %p145, %s144, 71
      %s147 = smul.addr %s146, 8
      %s148 = scalar_lea.vmem %s0, %s147
      %p149 = pneg %p35
      %p150 = pneg %p32
      %p151 = pneg %p56
      %p152 = pneg %p53
      %p153 = pneg %p77
      %p154 = pneg %p74
      %p155 = pneg %p103
      %p156 = pneg %p100
      %s157 = smul.u32 36, %s14
      %p158 = scmp.lt.s32.totalorder %s157, 71
      %s159 = scalar_select %p158, %s157, 71
      %s160 = smul.addr %s159, 8
      %s161 = scalar_lea.vmem %s3, %s160
      %s162 = smul.u32 36, %s14
      %p163 = scmp.lt.s32.totalorder %s162, 71
      %s164 = scalar_select %p163, %s162, 71
      %s165 = smul.addr %s164, 8
      %s166 = scalar_lea.vmem %s0, %s165
      %s167 = smul.u32 36, %s14
      %s168 = smul.u32 36, %s14
      %p169 = scmp.lt.s32.totalorder %s168, 71
      %s170 = scalar_select %p169, %s168, 71
      %s171 = smul.addr %s170, 8
      %s172 = scalar_lea.vmem %s3, %s171
      %s173 = smul.u32 36, %s14
      %v174 = vld [vmem:[%s166] sm:$0xff]
      %v175 = vld [vmem:[%s166 + $0x8] sm:$0xff]
      %v176 = vld [vmem:[%s166 + $0x10] sm:$0xff]
      %v177 = vld [vmem:[%s166 + $0x18] sm:$0xff]
      %v178 = vld [vmem:[%s166 + $0x20] sm:$0xff]
      %v179 = vld [vmem:[%s166 + $0x28] sm:$0xff]
      %v180 = vld [vmem:[%s166 + $0x30] sm:$0xff]
      %v181 = vld [vmem:[%s166 + $0x38] sm:$0xff]
      %v182 = vld [vmem:[%s166 + $0x40] sm:$0xff]
      %v183 = vld [vmem:[%s166 + $0x48] sm:$0xff]
      %v184 = vld [vmem:[%s166 + $0x50] sm:$0xff]
      %v185 = vld [vmem:[%s166 + $0x58] sm:$0xff]
      %v186 = vld [vmem:[%s166 + $0x60] sm:$0xff]
      %v187 = vld [vmem:[%s166 + $0x68] sm:$0xff]
      %v188 = vld [vmem:[%s166 + $0x70] sm:$0xff]
      %v189 = vld [vmem:[%s166 + $0x78] sm:$0xff]
      %v190 = vld [vmem:[%s166 + $0x80] sm:$0xff]
      %v191 = vld [vmem:[%s166 + $0x88] sm:$0xff]
      %v192 = vld [vmem:[%s166 + $0x90] sm:$0xff]
      %v193 = vld [vmem:[%s166 + $0x98] sm:$0xff]
      %v194 = vld [vmem:[%s166 + $0xa0] sm:$0xff]
      %v195 = vld [vmem:[%s166 + $0xa8] sm:$0xff]
      %v196 = vld [vmem:[%s166 + $0xb0] sm:$0xff]
      %v197 = vld [vmem:[%s166 + $0xb8] sm:$0xff]
      %v198 = vld [vmem:[%s166 + $0xc0] sm:$0xff]
      %v199 = vld [vmem:[%s166 + $0xc8] sm:$0xff]
      %v200 = vld [vmem:[%s166 + $0xd0] sm:$0xff]
      %v201 = vld [vmem:[%s166 + $0xd8] sm:$0xff]
      %v202 = vld [vmem:[%s166 + $0xe0] sm:$0xff]
      %v203 = vld [vmem:[%s166 + $0xe8] sm:$0xff]
      %v204 = vld [vmem:[%s166 + $0xf0] sm:$0xff]
      %v205 = vld [vmem:[%s166 + $0xf8] sm:$0xff]
      %v206 = vld [vmem:[%s166 + $0x100] sm:$0xff]
      %v207 = vld [vmem:[%s166 + $0x108] sm:$0xff]
      %v208 = vld [vmem:[%s166 + $0x110] sm:$0xff]
      %v209 = vld [vmem:[%s166 + $0x118] sm:$0xff]
      %v210 = vld [vmem:[%s1] sm:$0x1]
      %v212 = vlaneseq
      %v213 = vshrl.u32 %v212, 7
      %v214 = vsub.s32 0, %v213
      %v215 = vrot.slane %v210, %v214
      %v217 = vmul.f32 %v174, %v215
      %v218 = vmul.f32 %v175, %v215
      %v219 = vmul.f32 %v176, %v215
      %v220 = vmul.f32 %v177, %v215
      %v221 = vmul.f32 %v178, %v215
      %v222 = vmul.f32 %v179, %v215
      %v223 = vmul.f32 %v180, %v215
      %v224 = vmul.f32 %v181, %v215
      %v225 = vmul.f32 %v182, %v215
      %v226 = vmul.f32 %v183, %v215
      %v227 = vmul.f32 %v184, %v215
      %v228 = vmul.f32 %v185, %v215
      %v229 = vmul.f32 %v186, %v215
      %v230 = vmul.f32 %v187, %v215
      %v231 = vmul.f32 %v188, %v215
      %v232 = vmul.f32 %v189, %v215
      %v233 = vmul.f32 %v190, %v215
      %v234 = vmul.f32 %v191, %v215
      %v235 = vmul.f32 %v192, %v215
      %v236 = vmul.f32 %v193, %v215
      %v237 = vmul.f32 %v194, %v215
      %v238 = vmul.f32 %v195, %v215
      %v239 = vmul.f32 %v196, %v215
      %v240 = vmul.f32 %v197, %v215
      %v241 = vmul.f32 %v198, %v215
      %v242 = vmul.f32 %v199, %v215
      %v243 = vmul.f32 %v200, %v215
      %v244 = vmul.f32 %v201, %v215
      %v245 = vmul.f32 %v202, %v215
      %v246 = vmul.f32 %v203, %v215
      %v247 = vmul.f32 %v204, %v215
      %v248 = vmul.f32 %v205, %v215
      %v249 = vmul.f32 %v206, %v215
      %v250 = vmul.f32 %v207, %v215
      %v251 = vmul.f32 %v208, %v215
      %v252 = vmul.f32 %v209, %v215
      %v253 = vld [vmem:[%s2] sm:$0x1]
      %v255 = vlaneseq
      %v256 = vshrl.u32 %v255, 7
      %v257 = vsub.s32 0, %v256
      %v258 = vrot.slane %v253, %v257
      %v260 = vadd.f32 %v217, %v258
      %v261 = vadd.f32 %v218, %v258
      %v262 = vadd.f32 %v219, %v258
      %v263 = vadd.f32 %v220, %v258
      %v264 = vadd.f32 %v221, %v258
      %v265 = vadd.f32 %v222, %v258
      %v266 = vadd.f32 %v223, %v258
      %v267 = vadd.f32 %v224, %v258
      %v268 = vadd.f32 %v225, %v258
      %v269 = vadd.f32 %v226, %v258
      %v270 = vadd.f32 %v227, %v258
      %v271 = vadd.f32 %v228, %v258
      %v272 = vadd.f32 %v229, %v258
      %v273 = vadd.f32 %v230, %v258
      %v274 = vadd.f32 %v231, %v258
      %v275 = vadd.f32 %v232, %v258
      %v276 = vadd.f32 %v233, %v258
      %v277 = vadd.f32 %v234, %v258
      %v278 = vadd.f32 %v235, %v258
      %v279 = vadd.f32 %v236, %v258
      %v280 = vadd.f32 %v237, %v258
      %v281 = vadd.f32 %v238, %v258
      %v282 = vadd.f32 %v239, %v258
      %v283 = vadd.f32 %v240, %v258
      %v284 = vadd.f32 %v241, %v258
      %v285 = vadd.f32 %v242, %v258
      %v286 = vadd.f32 %v243, %v258
      %v287 = vadd.f32 %v244, %v258
      %v288 = vadd.f32 %v245, %v258
      %v289 = vadd.f32 %v246, %v258
      %v290 = vadd.f32 %v247, %v258
      %v291 = vadd.f32 %v248, %v258
      %v292 = vadd.f32 %v249, %v258
      %v293 = vadd.f32 %v250, %v258
      %v294 = vadd.f32 %v251, %v258
      %v295 = vadd.f32 %v252, %v258
      %v296 = vmax.f32 %v260, 0.0
      %v297 = vmax.f32 %v261, 0.0
      %v298 = vmax.f32 %v262, 0.0
      %v299 = vmax.f32 %v263, 0.0
      %v300 = vmax.f32 %v264, 0.0
      %v301 = vmax.f32 %v265, 0.0
      %v302 = vmax.f32 %v266, 0.0
      %v303 = vmax.f32 %v267, 0.0
      %v304 = vmax.f32 %v268, 0.0
      %v305 = vmax.f32 %v269, 0.0
      %v306 = vmax.f32 %v270, 0.0
      %v307 = vmax.f32 %v271, 0.0
      %v308 = vmax.f32 %v272, 0.0
      %v309 = vmax.f32 %v273, 0.0
      %v310 = vmax.f32 %v274, 0.0
      %v311 = vmax.f32 %v275, 0.0
      %v312 = vmax.f32 %v276, 0.0
      %v313 = vmax.f32 %v277, 0.0
      %v314 = vmax.f32 %v278, 0.0
      %v315 = vmax.f32 %v279, 0.0
      %v316 = vmax.f32 %v280, 0.0
      %v317 = vmax.f32 %v281, 0.0
      %v318 = vmax.f32 %v282, 0.0
      %v319 = vmax.f32 %v283, 0.0
      %v320 = vmax.f32 %v284, 0.0
      %v321 = vmax.f32 %v285, 0.0
      %v322 = vmax.f32 %v286, 0.0
      %v323 = vmax.f32 %v287, 0.0
      %v324 = vmax.f32 %v288, 0.0
      %v325 = vmax.f32 %v289, 0.0
      %v326 = vmax.f32 %v290, 0.0
      %v327 = vmax.f32 %v291, 0.0
      %v328 = vmax.f32 %v292, 0.0
      %v329 = vmax.f32 %v293, 0.0
      %v330 = vmax.f32 %v294, 0.0
      %v331 = vmax.f32 %v295, 0.0
      %332 = vst [vmem:[%s172] sm:$0xff] %v296
      %333 = vst [vmem:[%s172 + $0x8] sm:$0xff] %v297
      %334 = vst [vmem:[%s172 + $0x10] sm:$0xff] %v298
      %335 = vst [vmem:[%s172 + $0x18] sm:$0xff] %v299
      %336 = vst [vmem:[%s172 + $0x20] sm:$0xff] %v300
      %337 = vst [vmem:[%s172 + $0x28] sm:$0xff] %v301
      %338 = vst [vmem:[%s172 + $0x30] sm:$0xff] %v302
      %339 = vst [vmem:[%s172 + $0x38] sm:$0xff] %v303
      %340 = vst [vmem:[%s172 + $0x40] sm:$0xff] %v304
      %341 = vst [vmem:[%s172 + $0x48] sm:$0xff] %v305
      %342 = vst [vmem:[%s172 + $0x50] sm:$0xff] %v306
      %343 = vst [vmem:[%s172 + $0x58] sm:$0xff] %v307
      %344 = vst [vmem:[%s172 + $0x60] sm:$0xff] %v308
      %345 = vst [vmem:[%s172 + $0x68] sm:$0xff] %v309
      %346 = vst [vmem:[%s172 + $0x70] sm:$0xff] %v310
      %347 = vst [vmem:[%s172 + $0x78] sm:$0xff] %v311
      %348 = vst [vmem:[%s172 + $0x80] sm:$0xff] %v312
      %349 = vst [vmem:[%s172 + $0x88] sm:$0xff] %v313
      %350 = vst [vmem:[%s172 + $0x90] sm:$0xff] %v314
      %351 = vst [vmem:[%s172 + $0x98] sm:$0xff] %v315
      %352 = vst [vmem:[%s172 + $0xa0] sm:$0xff] %v316
      %353 = vst [vmem:[%s172 + $0xa8] sm:$0xff] %v317
      %354 = vst [vmem:[%s172 + $0xb0] sm:$0xff] %v318
      %355 = vst [vmem:[%s172 + $0xb8] sm:$0xff] %v319
      %356 = vst [vmem:[%s172 + $0xc0] sm:$0xff] %v320
      %357 = vst [vmem:[%s172 + $0xc8] sm:$0xff] %v321
      %358 = vst [vmem:[%s172 + $0xd0] sm:$0xff] %v322
      %359 = vst [vmem:[%s172 + $0xd8] sm:$0xff] %v323
      %360 = vst [vmem:[%s172 + $0xe0] sm:$0xff] %v324
      %361 = vst [vmem:[%s172 + $0xe8] sm:$0xff] %v325
      %362 = vst [vmem:[%s172 + $0xf0] sm:$0xff] %v326
      %363 = vst [vmem:[%s172 + $0xf8] sm:$0xff] %v327
      %364 = vst [vmem:[%s172 + $0x100] sm:$0xff] %v328
      %365 = vst [vmem:[%s172 + $0x108] sm:$0xff] %v329
      %366 = vst [vmem:[%s172 + $0x110] sm:$0xff] %v330
      %367 = vst [vmem:[%s172 + $0x118] sm:$0xff] %v331
      %s368 = smul.u32 36, %s14
      %p369 = scmp.lt.s32.totalorder %s368, 71
      %s370 = scalar_select %p369, %s368, 71
      %s371 = smul.addr %s370, 8
      %s372 = scalar_lea.vmem %s3, %s371
      // Predicated region
      $region33: #{conv_block_forward.3} parent=31 // pred_check
        %p373 = pneg %p100
      $region34: #{conv_block_forward.3} parent=31 // pred_check_branch
        %375 = sbr.rel (%p373) target = $region36
      $region35: #{conv_block_forward.3} parent=31 // pred_region
        %s376 = smul.u32 36, %s14
      $region36: #{conv_block_forward.3} parent=31 // pred_fallthru
        _
    $region32: #{conv_block_forward.3} parent=5 // pred_fallthru
      _
    %p377 = scmp.le.s32.totalorder 2, %s9
    // Predicated region
    $region37: #{conv_block_forward.3} parent=5 // pred_check
      %p378 = pneg %p377
    $region38: #{conv_block_forward.3} parent=5 // pred_check_branch
      %380 = sbr.rel (%p378) target = $region40
    $region39: #{conv_block_forward.3} parent=5 // pred_region
      %s381 = ssub.s32 %s9, 2
      // Predicated region
      $region41: #{conv_block_forward.3} parent=39 // pred_check
        %p382 = pneg %p106
      $region42: #{conv_block_forward.3} parent=39 // pred_check_branch
        %384 = sbr.rel (%p382) target = $region44
      $region43: #{conv_block_forward.3} parent=39 // pred_region
        %s385 = smul.u32 36, %s15
        %p386 = scmp.lt.s32.totalorder %s385, 71
        %s387 = scalar_select %p386, %s385, 71
        %s388 = smul.addr %s387, 8
        %s389 = scalar_lea.vmem %s3, %s388
      $region44: #{conv_block_forward.3} parent=39 // pred_fallthru
        _
    $region40: #{conv_block_forward.3} parent=5 // pred_fallthru
      _
  $region6: #{conv_block_forward.3} parent=0 // loop_footer
    %s13 = sadd.s32 1, %s9
  $region7: #{conv_block_forward.3} parent=0 // loop_footer_branch
    %8 = sbr.rel target = $region3
  $region8: #{conv_block_forward.3} parent=0 // loop_exit
    _

// kernel: conv_block_forward.2
$region0: #{conv_block_forward.2}
  #allocation0 [shape = 'u32[]', space=smem, size = 0x4, offset = 0x4, fixed_abs, tag = 'smem constant byte address 0x4 - core index']
  #allocation1 [shape = 'u32[144,128]{1,0:T(1,128)}', space=vmem, size = 0x12000, scoped, tag = 'internal scratch']
  %s0 = inlined_call_operand.vmem [shape: f32[2,362,4], index: 0, kind: input, shape index: {}]
  %s1 = inlined_call_operand.vmem [shape: f32[36,128], index: 1, kind: input, shape index: {}]
  %s2 = inlined_call_operand.vmem [shape: f32[288,1], index: 2, kind: input, shape index: {}]
  %s3 = inlined_call_operand.vmem [shape: f32[2,288,128], index: 3, kind: output, shape index: {0}]
  %s4 = inlined_call_operand.vmem [shape: f32[2,2,128], index: 4, kind: output, shape index: {1}]
  %5 = xla_tuple %s3, %s4
  %s6 = sld [smem:[#allocation0]]
  $region53: #{conv_block_forward.2} parent=0
    _
  %s8 = ssub.s32 1, %s6
  %s9 = scalar_select 0, %s8, %s6
  loop: start=0, step=1, limit=4
  $region2: #{conv_block_forward.2} parent=0 // loop_pre_header
    _
  $region3: #{conv_block_forward.2} parent=0 // loop_header
    %s11 = sphi 0, %s15
    %p12 = scmp.ge.s32.totalorder %s11, 4
    %s21 = sphi 0, %s23
    %s24 = sphi 0, %s21
    %s25 = sphi 0, %s24
    %s41 = sphi 0, %s25
    %s45 = sphi 0, %s45
    %s47 = sphi 0, %s45
    %s48 = sphi 0, %s47
    %s62 = sphi 0, %s48
    %s66 = sphi 0, %s66
    %s68 = sphi 0, %s66
    %s69 = sphi 0, %s68
    %s83 = sphi 0, %s69
    %s89 = sphi 0, %s91
    %s92 = sphi 0, %s89
    %s93 = sphi 0, %s92
    %s109 = sphi 0, %s93
    %s115 = sphi 0, %s117
    %s118 = sphi 0, %s115
    %s119 = sphi 0, %s118
    %s135 = sphi 0, %s119
  $region4: #{conv_block_forward.2} parent=0 // loop_header_branch
    %14 = sbr.rel (%p12) target = $region8
  $region5: #{conv_block_forward.2} parent=0 // loop_body
    %s16 = ssub.s32 %s11, 1
    %s17 = ssub.s32 %s11, 2
    %s18 = sadd.s32 %s11, 1
    %s19 = ssub.s32 %s11, %s18
    %p20 = scmp.eq.s32.totalorder %s19, 0
    %s22 = sadd.s32 %s21, 1
    %s23 = scalar_select %p20, %s21, %s22
    %p26 = pneg %p20
    %p27 = scmp.eq.s32.totalorder %s11, 1
    %p28 = por %p26, %p27
    %p29 = scmp.ne.s32.totalorder %s21, %s24
    %p30 = scmp.eq.s32.totalorder %s11, 0
    %p31 = por %p29, %p30
    %p32 = scmp.ne.s32.totalorder %s21, %s24
    %p33 = scmp.eq.s32.totalorder %s16, 1
    %p34 = por %p32, %p33
    %p35 = scmp.ne.s32.totalorder %s24, %s25
    %p36 = scmp.eq.s32.totalorder %s16, 0
    %p37 = por %p35, %p36
    %p38 = scmp.ne.s32.totalorder %s24, %s25
    %p39 = scmp.eq.s32.totalorder %s17, 1
    %p40 = por %p38, %p39
    %p42 = scmp.ne.s32.totalorder %s25, %s41
    %p43 = scmp.eq.s32.totalorder %s17, 0
    %p44 = por %p42, %p43
    %s46 = sadd.s32 %s45, 1
    %p49 = scmp.eq.s32.totalorder %s11, 1
    %p50 = scmp.ne.s32.totalorder %s45, %s47
    %p51 = scmp.eq.s32.totalorder %s11, 0
    %p52 = por %p50, %p51
    %p53 = scmp.ne.s32.totalorder %s45, %s47
    %p54 = scmp.eq.s32.totalorder %s16, 1
    %p55 = por %p53, %p54
    %p56 = scmp.ne.s32.totalorder %s47, %s48
    %p57 = scmp.eq.s32.totalorder %s16, 0
    %p58 = por %p56, %p57
    %p59 = scmp.ne.s32.totalorder %s47, %s48
    %p60 = scmp.eq.s32.totalorder %s17, 1
    %p61 = por %p59, %p60
    %p63 = scmp.ne.s32.totalorder %s48, %s62
    %p64 = scmp.eq.s32.totalorder %s17, 0
    %p65 = por %p63, %p64
    %s67 = sadd.s32 %s66, 1
    %p70 = scmp.eq.s32.totalorder %s11, 1
    %p71 = scmp.ne.s32.totalorder %s66, %s68
    %p72 = scmp.eq.s32.totalorder %s11, 0
    %p73 = por %p71, %p72
    %p74 = scmp.ne.s32.totalorder %s66, %s68
    %p75 = scmp.eq.s32.totalorder %s16, 1
    %p76 = por %p74, %p75
    %p77 = scmp.ne.s32.totalorder %s68, %s69
    %p78 = scmp.eq.s32.totalorder %s16, 0
    %p79 = por %p77, %p78
    %p80 = scmp.ne.s32.totalorder %s68, %s69
    %p81 = scmp.eq.s32.totalorder %s17, 1
    %p82 = por %p80, %p81
    %p84 = scmp.ne.s32.totalorder %s69, %s83
    %p85 = scmp.eq.s32.totalorder %s17, 0
    %p86 = por %p84, %p85
    %s87 = ssub.s32 %s11, %s18
    %p88 = scmp.eq.s32.totalorder %s87, 0
    %s90 = sadd.s32 %s89, 1
    %s91 = scalar_select %p88, %s89, %s90
    %p94 = pneg %p88
    %p95 = scmp.eq.s32.totalorder %s11, 1
    %p96 = por %p94, %p95
    %p97 = scmp.ne.s32.totalorder %s89, %s92
    %p98 = scmp.eq.s32.totalorder %s11, 0
    %p99 = por %p97, %p98
    %p100 = scmp.ne.s32.totalorder %s89, %s92
    %p101 = scmp.eq.s32.totalorder %s16, 1
    %p102 = por %p100, %p101
    %p103 = scmp.ne.s32.totalorder %s92, %s93
    %p104 = scmp.eq.s32.totalorder %s16, 0
    %p105 = por %p103, %p104
    %p106 = scmp.ne.s32.totalorder %s92, %s93
    %p107 = scmp.eq.s32.totalorder %s17, 1
    %p108 = por %p106, %p107
    %p110 = scmp.ne.s32.totalorder %s93, %s109
    %p111 = scmp.eq.s32.totalorder %s17, 0
    %p112 = por %p110, %p111
    %s113 = ssub.s32 %s11, %s18
    %p114 = scmp.eq.s32.totalorder %s113, 0
    %s116 = sadd.s32 %s115, 1
    %s117 = scalar_select %p114, %s115, %s116
    %p120 = pneg %p114
    %p121 = scmp.eq.s32.totalorder %s11, 1
    %p122 = por %p120, %p121
    %p123 = scmp.ne.s32.totalorder %s115, %s118
    %p124 = scmp.eq.s32.totalorder %s11, 0
    %p125 = por %p123, %p124
    %p126 = scmp.ne.s32.totalorder %s115, %s118
    %p127 = scmp.eq.s32.totalorder %s16, 1
    %p128 = por %p126, %p127
    %p129 = scmp.ne.s32.totalorder %s118, %s119
    %p130 = scmp.eq.s32.totalorder %s16, 0
    %p131 = por %p129, %p130
    %p132 = scmp.ne.s32.totalorder %s118, %s119
    %p133 = scmp.eq.s32.totalorder %s17, 1
    %p134 = por %p132, %p133
    %p136 = scmp.ne.s32.totalorder %s119, %s135
    %p137 = scmp.eq.s32.totalorder %s17, 0
    %p138 = por %p136, %p137
    %p139 = scmp.le.s32.totalorder 1, %s11
    %p140 = scmp.lt.s32.totalorder %s11, 3
    %p141 = pnand %p139, %p140
    %p142 = pneg %p141
    // Predicated region
    $region9: #{conv_block_forward.2} parent=5 // pred_check
      _
    $region10: #{conv_block_forward.2} parent=5 // pred_check_branch
      %144 = sbr.rel (%p141) target = $region12
    $region11: #{conv_block_forward.2} parent=5 // pred_region
      %s145 = ssub.s32 %s11, 1
      // Predicated region
      $region13: #{conv_block_forward.2} parent=11 // pred_check
        %p146 = pneg %p58
      $region14: #{conv_block_forward.2} parent=11 // pred_check_branch
        %148 = sbr.rel (%p146) target = $region16
      $region15: #{conv_block_forward.2} parent=11 // pred_region
        _
      $region16: #{conv_block_forward.2} parent=11 // pred_fallthru
        _
      // Predicated region
      $region17: #{conv_block_forward.2} parent=11 // pred_check
        %p149 = pneg %p79
      $region18: #{conv_block_forward.2} parent=11 // pred_check_branch
        %151 = sbr.rel (%p149) target = $region20
      $region19: #{conv_block_forward.2} parent=11 // pred_region
        _
      $region20: #{conv_block_forward.2} parent=11 // pred_fallthru
        _
    $region12: #{conv_block_forward.2} parent=5 // pred_fallthru
      _
    %p152 = scmp.lt.s32.totalorder %s11, 2
    // Predicated region
    $region21: #{conv_block_forward.2} parent=5 // pred_check
      %p153 = pneg %p152
    $region22: #{conv_block_forward.2} parent=5 // pred_check_branch
      %155 = sbr.rel (%p153) target = $region24
    $region23: #{conv_block_forward.2} parent=5 // pred_region
      // Predicated region
      $region25: #{conv_block_forward.2} parent=23 // pred_check
        %p156 = pneg %p31
      $region26: #{conv_block_forward.2} parent=23 // pred_check_branch
        %158 = sbr.rel (%p156) target = $region28
      $region27: #{conv_block_forward.2} parent=23 // pred_region
        %p159 = scmp.lt.s32.totalorder %s11, 1
        %s160 = scalar_select %p159, %s11, 1
        %s161 = smul.addr %s160, 46
        %s162 = smul.addr %s161, 8
        %s163 = scalar_lea.vmem %s0, %s162
      $region28: #{conv_block_forward.2} parent=23 // pred_fallthru
        _
    $region24: #{conv_block_forward.2} parent=5 // pred_fallthru
      _
    %p164 = scmp.le.s32.totalorder 1, %s11
    %p165 = scmp.lt.s32.totalorder %s11, 3
    %p166 = pnand %p164, %p165
    %p167 = pneg %p166
    // Predicated region
    $region29: #{conv_block_forward.2} parent=5 // pred_check
      _
    $region30: #{conv_block_forward.2} parent=5 // pred_check_branch
      %169 = sbr.rel (%p166) target = $region32
    $region31: #{conv_block_forward.2} parent=5 // pred_region
      %s170 = ssub.s32 %s11, 1
      %p171 = scmp.lt.s32.totalorder %s16, 1
      %s172 = scalar_select %p171, %s16, 1
      %s173 = smul.addr %s172, 46
      %s174 = smul.addr %s173, 8
      %s175 = scalar_lea.vmem %s0, %s174
      %p176 = pneg %p37
      %p177 = pneg %p34
      %p178 = pneg %p58
      %p179 = pneg %p55
      %p180 = pneg %p79
      %p181 = pneg %p76
      %p182 = pneg %p105
      %p183 = pneg %p102
      %p184 = scmp.lt.s32.totalorder %s16, 1
      %s185 = scalar_select %p184, %s16, 1
      %s186 = smul.addr %s185, 36
      %s187 = smul.addr %s186, 8
      %s188 = scalar_lea.vmem %s3, %s187
      %p189 = pneg %p131
      %p190 = pneg %p128
      %p191 = scmp.lt.s32.totalorder %s16, 1
      %s192 = scalar_select %p191, %s16, 1
      %s193 = smul.addr %s192, 2
      %s194 = scalar_lea.vmem %s4, %s193
      %p195 = scmp.lt.s32.totalorder %s16, 1
      %s196 = scalar_select %p195, %s16, 1
      %s197 = smul.addr %s196, 46
      %s198 = smul.addr %s197, 8
      %s199 = scalar_lea.vmem %s0, %s198
      %p200 = scmp.lt.s32.totalorder %s16, 1
      %s201 = scalar_select %p200, %s16, 1
      %s202 = smul.addr %s201, 36
      %s203 = smul.addr %s202, 8
      %s204 = scalar_lea.vmem %s3, %s203
      %p205 = scmp.lt.s32.totalorder %s16, 1
      %s206 = scalar_select %p205, %s16, 1
      %s207 = smul.addr %s206, 2
      %s208 = scalar_lea.vmem %s4, %s207
      %v209 = vld [vmem:[%s199] sm:$0xff]
      %v210 = vld [vmem:[%s199 + $0x8] sm:$0xff]
      %v211 = vld [vmem:[%s199 + $0x10] sm:$0xff]
      %v212 = vld [vmem:[%s199 + $0x18] sm:$0xff]
      %v213 = vld [vmem:[%s199 + $0x20] sm:$0xff]
      %v214 = vld [vmem:[%s199 + $0x28] sm:$0xff]
      %v215 = vld [vmem:[%s199 + $0x30] sm:$0xff]
      %v216 = vld [vmem:[%s199 + $0x38] sm:$0xff]
      %v217 = vld [vmem:[%s199 + $0x40] sm:$0xff]
      %v218 = vld [vmem:[%s199 + $0x48] sm:$0xff]
      %v219 = vld [vmem:[%s199 + $0x50] sm:$0xff]
      %v220 = vld [vmem:[%s199 + $0x58] sm:$0xff]
      %v221 = vld [vmem:[%s199 + $0x60] sm:$0xff]
      %v222 = vld [vmem:[%s199 + $0x68] sm:$0xff]
      %v223 = vld [vmem:[%s199 + $0x70] sm:$0xff]
      %v224 = vld [vmem:[%s199 + $0x78] sm:$0xff]
      %v225 = vld [vmem:[%s199 + $0x80] sm:$0xff]
      %v226 = vld [vmem:[%s199 + $0x88] sm:$0xff]
      %v227 = vld [vmem:[%s199 + $0x90] sm:$0xff]
      %v228 = vld [vmem:[%s199 + $0x98] sm:$0xff]
      %v229 = vld [vmem:[%s199 + $0xa0] sm:$0xff]
      %v230 = vld [vmem:[%s199 + $0xa8] sm:$0xff]
      %v231 = vld [vmem:[%s199 + $0xb0] sm:$0xff]
      %v232 = vld [vmem:[%s199 + $0xb8] sm:$0xff]
      %v233 = vld [vmem:[%s199 + $0xc0] sm:$0xff]
      %v234 = vld [vmem:[%s199 + $0xc8] sm:$0xff]
      %v235 = vld [vmem:[%s199 + $0xd0] sm:$0xff]
      %v236 = vld [vmem:[%s199 + $0xd8] sm:$0xff]
      %v237 = vld [vmem:[%s199 + $0xe0] sm:$0xff]
      %v238 = vld [vmem:[%s199 + $0xe8] sm:$0xff]
      %v239 = vld [vmem:[%s199 + $0xf0] sm:$0xff]
      %v240 = vld [vmem:[%s199 + $0xf8] sm:$0xff]
      %v241 = vld [vmem:[%s199 + $0x100] sm:$0xff]
      %v242 = vld [vmem:[%s199 + $0x108] sm:$0xff]
      %v243 = vld [vmem:[%s199 + $0x110] sm:$0xff]
      %v244 = vld [vmem:[%s199 + $0x118] sm:$0xff]
      %v245 = vld [vmem:[%s1] sm:$0xf]
      %v246 = vld [vmem:[%s199 + $0x1] sm:$0xff]
      %v247 = vld [vmem:[%s199 + $0x9] sm:$0xff]
      %v248 = vld [vmem:[%s199 + $0x11] sm:$0xff]
      %v249 = vld [vmem:[%s199 + $0x19] sm:$0xff]
      %v250 = vld [vmem:[%s199 + $0x21] sm:$0xff]
      %v251 = vld [vmem:[%s199 + $0x29] sm:$0xff]
      %v252 = vld [vmem:[%s199 + $0x31] sm:$0xff]
      %v253 = vld [vmem:[%s199 + $0x39] sm:$0xff]
      %v254 = vld [vmem:[%s199 + $0x41] sm:$0xff]
      %v255 = vld [vmem:[%s199 + $0x49] sm:$0xff]
      %v256 = vld [vmem:[%s199 + $0x51] sm:$0xff]
      %v257 = vld [vmem:[%s199 + $0x59] sm:$0xff]
      %v258 = vld [vmem:[%s199 + $0x61] sm:$0xff]
      %v259 = vld [vmem:[%s199 + $0x69] sm:$0xff]
      %v260 = vld [vmem:[%s199 + $0x71] sm:$0xff]
      %v261 = vld [vmem:[%s199 + $0x79] sm:$0xff]
      %v262 = vld [vmem:[%s199 + $0x81] sm:$0xff]
      %v263 = vld [vmem:[%s199 + $0x89] sm:$0xff]
      %v264 = vld [vmem:[%s199 + $0x91] sm:$0xff]
      %v265 = vld [vmem:[%s199 + $0x99] sm:$0xff]
      %v266 = vld [vmem:[%s199 + $0xa1] sm:$0xff]
      %v267 = vld [vmem:[%s199 + $0xa9] sm:$0xff]
      %v268 = vld [vmem:[%s199 + $0xb1] sm:$0xff]
      %v269 = vld [vmem:[%s199 + $0xb9] sm:$0xff]
      %v270 = vld [vmem:[%s199 + $0xc1] sm:$0xff]
      %v271 = vld [vmem:[%s199 + $0xc9] sm:$0xff]
      %v272 = vld [vmem:[%s199 + $0xd1] sm:$0xff]
      %v273 = vld [vmem:[%s199 + $0xd9] sm:$0xff]
      %v274 = vld [vmem:[%s199 + $0xe1] sm:$0xff]
      %v275 = vld [vmem:[%s199 + $0xe9] sm:$0xff]
      %v276 = vld [vmem:[%s199 + $0xf1] sm:$0xff]
      %v277 = vld [vmem:[%s199 + $0xf9] sm:$0xff]
      %v278 = vld [vmem:[%s199 + $0x101] sm:$0xff]
      %v279 = vld [vmem:[%s199 + $0x109] sm:$0xff]
      %v280 = vld [vmem:[%s199 + $0x111] sm:$0xff]
      %v281 = vld [vmem:[%s199 + $0x119] sm:$0xff]
      %v282 = vld [vmem:[%s1 + $0x4] sm:$0xf]
      %vm283 = vcmask 31744
      %v285 = vsel %vm283, %v246, 0
      %v288 = vsel %vm283, %v247, 0
      %v291 = vsel %vm283, %v248, 0
      %v294 = vsel %vm283, %v249, 0
      %v297 = vsel %vm283, %v250, 0
      %v300 = vsel %vm283, %v251, 0
      %v303 = vsel %vm283, %v252, 0
      %v306 = vsel %vm283, %v253, 0
      %v309 = vsel %vm283, %v254, 0
      %v312 = vsel %vm283, %v255, 0
      %v315 = vsel %vm283, %v256, 0
      %v318 = vsel %vm283, %v257, 0
      %v321 = vsel %vm283, %v258, 0
      %v324 = vsel %vm283, %v259, 0
      %v327 = vsel %vm283, %v260, 0
      %v330 = vsel %vm283, %v261, 0
      %v333 = vsel %vm283, %v262, 0
      %v336 = vsel %vm283, %v263, 0
      %v339 = vsel %vm283, %v264, 0
      %v342 = vsel %vm283, %v265, 0
      %v345 = vsel %vm283, %v266, 0
      %v348 = vsel %vm283, %v267, 0
      %v351 = vsel %vm283, %v268, 0
      %v354 = vsel %vm283, %v269, 0
      %v357 = vsel %vm283, %v270, 0
      %v360 = vsel %vm283, %v271, 0
      %v363 = vsel %vm283, %v272, 0
      %v366 = vsel %vm283, %v273, 0
      %v369 = vsel %vm283, %v274, 0
      %v372 = vsel %vm283, %v275, 0
      %v375 = vsel %vm283, %v276, 0
      %v378 = vsel %vm283, %v277, 0
      %v381 = vsel %vm283, %v278, 0
      %v384 = vsel %vm283, %v279, 0
      %v387 = vsel %vm283, %v280, 0
      %v390 = vsel %vm283, %v281, 0
      %vm392 = vcmask 1043456
      %v394 = vsel %vm392, %v282, 0
      %396 = vmatprep.subr.mxu0 0.0
      %397 = vmatpush1.msra.mxu0 0.0
      %398 = vmatprep.subr.mxu0 0.0
      %399 = vmatpush1.msra.mxu0 0.0
      %400 = vmatprep.subr.mxu0 0.0
      %401 = vmatpush1.msra.mxu0 0.0
      %402 = vmatprep.subr.mxu0 0.0
      %403 = vmatpush1.msra.mxu0 0.0
      %404 = vmatprep.subr.mxu0 0.0
      %405 = vmatpush1.msra.mxu0 0.0
      %406 = vmatprep.subr.mxu0 0.0
      %407 = vmatpush1.msra.mxu0 0.0
      %408 = vmatprep.subr.mxu0 0.0
      %409 = vmatpush1.msra.mxu0 0.0
      %410 = vmatprep.subr.mxu0 0.0
      %411 = vmatpush1.msra.mxu0 0.0
      %412 = vmatprep.subr.mxu0 0.0
      %413 = vmatpush1.msra.mxu0 0.0
      %414 = vmatprep.subr.mxu0 0.0
      %415 = vmatpush1.msra.mxu0 0.0
      %416 = vmatprep.subr.mxu0 0.0
      %417 = vmatpush1.msra.mxu0 0.0
      %418 = vmatprep.subr.mxu0 0.0
      %419 = vmatpush1.msra.mxu0 0.0
      %420 = vmatprep.subr.mxu0 0.0
      %421 = vmatpush1.msra.mxu0 0.0
      %422 = vmatprep.subr.mxu0 0.0
      %423 = vmatpush1.msra.mxu0 0.0
      %424 = vmatprep.subr.mxu0 0.0
      %425 = vmatpush1.msra.mxu0 0.0
      %426 = vmatprep.subr.mxu0 0.0
      %427 = vmatpush1.msra.mxu0 %v394
      %428 = vmatprep.subr.mxu0 0.0
      %429 = vmatpush2.msra.mxu0 0.0
      %430 = vmatprep.subr.mxu0 0.0
      %431 = vmatpush2.msra.mxu0 0.0
      %432 = vmatprep.subr.mxu0 0.0
      %433 = vmatpush2.msra.mxu0 0.0
      %434 = vmatprep.subr.mxu0 0.0
      %435 = vmatpush2.msra.mxu0 0.0
      %436 = vmatprep.subr.mxu0 0.0
      %437 = vmatpush2.msra.mxu0 0.0
      %438 = vmatprep.subr.mxu0 0.0
      %439 = vmatpush2.msra.mxu0 0.0
      %440 = vmatprep.subr.mxu0 0.0
      %441 = vmatpush2.msra.mxu0 0.0
      %442 = vmatprep.subr.mxu0 0.0
      %443 = vmatpush2.msra.mxu0 0.0
      %444 = vmatprep.subr.mxu0 0.0
      %445 = vmatpush2.msra.mxu0 0.0
      %446 = vmatprep.subr.mxu0 0.0
      %447 = vmatpush2.msra.mxu0 0.0
      %448 = vmatprep.subr.mxu0 0.0
      %449 = vmatpush2.msra.mxu0 0.0
      %450 = vmatprep.subr.mxu0 0.0
      %451 = vmatpush2.msra.mxu0 0.0
      %452 = vmatprep.subr.mxu0 0.0
      %453 = vmatpush2.msra.mxu0 0.0
      %454 = vmatprep.subr.mxu0 0.0
      %455 = vmatpush2.msra.mxu0 0.0
      %456 = vmatprep.subr.mxu0 0.0
      %457 = vmatpush2.msra.mxu0 0.0
      %458 = vmatprep.subr.mxu0 0.0
      %459 = vmatpush2.msra.mxu0 0.0
      %460 = vmatprep.mubr.f32.mxu0 0.0
      %461 = vmatmul.mubr.f32.gmra.mxu0 %v285
      %v462 = vpop.f32.mrf.mxu0
      %v463 = vadd.f32 0.0, %v462
      %v464 = vpop.f32.mrf.mxu0
      %465 = vmatprep.mubr.f32.mxu0 0.0
      %466 = vmatmul.mubr.f32.gmra.mxu0 %v288
      %v467 = vpop.f32.mrf.mxu0
      %v468 = vadd.f32 0.0, %v467
      %v469 = vpop.f32.mrf.mxu0
      %470 = vmatprep.mubr.f32.mxu0 0.0
      %471 = vmatmul.mubr.f32.gmra.mxu0 %v291
      %v472 = vpop.f32.mrf.mxu0
      %v473 = vadd.f32 0.0, %v472
      %v474 = vpop.f32.mrf.mxu0
      %475 = vmatprep.mubr.f32.mxu0 0.0
      %476 = vmatmul.mubr.f32.gmra.mxu0 %v294
      %v477 = vpop.f32.mrf.mxu0
      %v478 = vadd.f32 0.0, %v477
      %v479 = vpop.f32.mrf.mxu0
      %480 = vmatprep.mubr.f32.mxu0 0.0
      %481 = vmatmul.mubr.f32.gmra.mxu0 %v297
      %v482 = vpop.f32.mrf.mxu0
      %v483 = vadd.f32 0.0, %v482
      %v484 = vpop.f32.mrf.mxu0
      %485 = vmatprep.mubr.f32.mxu0 0.0
      %486 = vmatmul.mubr.f32.gmra.mxu0 %v300
      %v487 = vpop.f32.mrf.mxu0
      %v488 = vadd.f32 0.0, %v487
      %v489 = vpop.f32.mrf.mxu0
      %490 = vmatprep.mubr.f32.mxu0 0.0
      %491 = vmatmul.mubr.f32.gmra.mxu0 %v303
      %v492 = vpop.f32.mrf.mxu0
      %v493 = vadd.f32 0.0, %v492
      %v494 = vpop.f32.mrf.mxu0
      %495 = vmatprep.mubr.f32.mxu0 0.0
      %496 = vmatmul.mubr.f32.gmra.mxu0 %v306
      %v497 = vpop.f32.mrf.mxu0
      %v498 = vadd.f32 0.0, %v497
      %v499 = vpop.f32.mrf.mxu0
      %500 = vmatprep.mubr.f32.mxu0 0.0
      %501 = vmatmul.mubr.f32.gmra.mxu0 %v309
      %v502 = vpop.f32.mrf.mxu0
      %v503 = vadd.f32 0.0, %v502
      %v504 = vpop.f32.mrf.mxu0
      %505 = vmatprep.mubr.f32.mxu0 0.0
      %506 = vmatmul.mubr.f32.gmra.mxu0 %v312
      %v507 = vpop.f32.mrf.mxu0
      %v508 = vadd.f32 0.0, %v507
      %v509 = vpop.f32.mrf.mxu0
      %510 = vmatprep.mubr.f32.mxu0 0.0
      %511 = vmatmul.mubr.f32.gmra.mxu0 %v315
      %v512 = vpop.f32.mrf.mxu0
      %v513 = vadd.f32 0.0, %v512
      %v514 = vpop.f32.mrf.mxu0
      %515 = vmatprep.mubr.f32.mxu0 0.0
      %516 = vmatmul.mubr.f32.gmra.mxu0 %v318
      %v517 = vpop.f32.mrf.mxu0
      %v518 = vadd.f32 0.0, %v517
      %v519 = vpop.f32.mrf.mxu0
      %520 = vmatprep.mubr.f32.mxu0 0.0
      %521 = vmatmul.mubr.f32.gmra.mxu0 %v321
      %v522 = vpop.f32.mrf.mxu0
      %v523 = vadd.f32 0.0, %v522
      %v524 = vpop.f32.mrf.mxu0
      %525 = vmatprep.mubr.f32.mxu0 0.0
      %526 = vmatmul.mubr.f32.gmra.mxu0 %v324
      %v527 = vpop.f32.mrf.mxu0
      %v528 = vadd.f32 0.0, %v527
      %v529 = vpop.f32.mrf.mxu0
      %530 = vmatprep.mubr.f32.mxu0 0.0
      %531 = vmatmul.mubr.f32.gmra.mxu0 %v327
      %v532 = vpop.f32.mrf.mxu0
      %v533 = vadd.f32 0.0, %v532
      %v534 = vpop.f32.mrf.mxu0
      %535 = vmatprep.mubr.f32.mxu0 0.0
      %536 = vmatmul.mubr.f32.gmra.mxu0 %v330
      %v537 = vpop.f32.mrf.mxu0
      %v538 = vadd.f32 0.0, %v537
      %v539 = vpop.f32.mrf.mxu0
      %540 = vmatprep.mubr.f32.mxu0 0.0
      %541 = vmatmul.mubr.f32.gmra.mxu0 %v333
      %v542 = vpop.f32.mrf.mxu0
      %v543 = vadd.f32 0.0, %v542
      %v544 = vpop.f32.mrf.mxu0
      %545 = vmatprep.mubr.f32.mxu0 0.0
      %546 = vmatmul.mubr.f32.gmra.mxu0 %v336
      %v547 = vpop.f32.mrf.mxu0
      %v548 = vadd.f32 0.0, %v547
      %v549 = vpop.f32.mrf.mxu0
      %550 = vmatprep.mubr.f32.mxu0 0.0
      %551 = vmatmul.mubr.f32.gmra.mxu0 %v339
      %v552 = vpop.f32.mrf.mxu0
      %v553 = vadd.f32 0.0, %v552
      %v554 = vpop.f32.mrf.mxu0
      %555 = vmatprep.mubr.f32.mxu0 0.0
      %556 = vmatmul.mubr.f32.gmra.mxu0 %v342
      %v557 = vpop.f32.mrf.mxu0
      %v558 = vadd.f32 0.0, %v557
      %v559 = vpop.f32.mrf.mxu0
      %560 = vmatprep.mubr.f32.mxu0 0.0
      %561 = vmatmul.mubr.f32.gmra.mxu0 %v345
      %v562 = vpop.f32.mrf.mxu0
      %v563 = vadd.f32 0.0, %v562
      %v564 = vpop.f32.mrf.mxu0
      %565 = vmatprep.mubr.f32.mxu0 0.0
      %566 = vmatmul.mubr.f32.gmra.mxu0 %v348
      %v567 = vpop.f32.mrf.mxu0
      %v568 = vadd.f32 0.0, %v567
      %v569 = vpop.f32.mrf.mxu0
      %570 = vmatprep.mubr.f32.mxu0 0.0
      %571 = vmatmul.mubr.f32.gmra.mxu0 %v351
      %v572 = vpop.f32.mrf.mxu0
      %v573 = vadd.f32 0.0, %v572
      %v574 = vpop.f32.mrf.mxu0
      %575 = vmatprep.mubr.f32.mxu0 0.0
      %576 = vmatmul.mubr.f32.gmra.mxu0 %v354
      %v577 = vpop.f32.mrf.mxu0
      %v578 = vadd.f32 0.0, %v577
      %v579 = vpop.f32.mrf.mxu0
      %580 = vmatprep.mubr.f32.mxu0 0.0
      %581 = vmatmul.mubr.f32.gmra.mxu0 %v357
      %v582 = vpop.f32.mrf.mxu0
      %v583 = vadd.f32 0.0, %v582
      %v584 = vpop.f32.mrf.mxu0
      %585 = vmatprep.mubr.f32.mxu0 0.0
      %586 = vmatmul.mubr.f32.gmra.mxu0 %v360
      %v587 = vpop.f32.mrf.mxu0
      %v588 = vadd.f32 0.0, %v587
      %v589 = vpop.f32.mrf.mxu0
      %590 = vmatprep.mubr.f32.mxu0 0.0
      %591 = vmatmul.mubr.f32.gmra.mxu0 %v363
      %v592 = vpop.f32.mrf.mxu0
      %v593 = vadd.f32 0.0, %v592
      %v594 = vpop.f32.mrf.mxu0
      %595 = vmatprep.mubr.f32.mxu0 0.0
      %596 = vmatmul.mubr.f32.gmra.mxu0 %v366
      %v597 = vpop.f32.mrf.mxu0
      %v598 = vadd.f32 0.0, %v597
      %v599 = vpop.f32.mrf.mxu0
      %600 = vmatprep.mubr.f32.mxu0 0.0
      %601 = vmatmul.mubr.f32.gmra.mxu0 %v369
      %v602 = vpop.f32.mrf.mxu0
      %v603 = vadd.f32 0.0, %v602
      %v604 = vpop.f32.mrf.mxu0
      %605 = vmatprep.mubr.f32.mxu0 0.0
      %606 = vmatmul.mubr.f32.gmra.mxu0 %v372
      %v607 = vpop.f32.mrf.mxu0
      %v608 = vadd.f32 0.0, %v607
      %v609 = vpop.f32.mrf.mxu0
      %610 = vmatprep.mubr.f32.mxu0 0.0
      %611 = vmatmul.mubr.f32.gmra.mxu0 %v375
      %v612 = vpop.f32.mrf.mxu0
      %v613 = vadd.f32 0.0, %v612
      %v614 = vpop.f32.mrf.mxu0
      %615 = vmatprep.mubr.f32.mxu0 0.0
      %616 = vmatmul.mubr.f32.gmra.mxu0 %v378
      %v617 = vpop.f32.mrf.mxu0
      %v618 = vadd.f32 0.0, %v617
      %v619 = vpop.f32.mrf.mxu0
      %620 = vmatprep.mubr.f32.mxu0 0.0
      %621 = vmatmul.mubr.f32.gmra.mxu0 %v381
      %v622 = vpop.f32.mrf.mxu0
      %v623 = vadd.f32 0.0, %v622
      %v624 = vpop.f32.mrf.mxu0
      %625 = vmatprep.mubr.f32.mxu0 0.0
      %626 = vmatmul.mubr.f32.gmra.mxu0 %v384
      %v627 = vpop.f32.mrf.mxu0
      %v628 = vadd.f32 0.0, %v627
      %v629 = vpop.f32.mrf.mxu0
      %630 = vmatprep.mubr.f32.mxu0 0.0
      %631 = vmatmul.mubr.f32.gmra.mxu0 %v387
      %v632 = vpop.f32.mrf.mxu0
      %v633 = vadd.f32 0.0, %v632
      %v634 = vpop.f32.mrf.mxu0
      %635 = vmatprep.mubr.f32.mxu0 0.0
      %636 = vmatmul.mubr.f32.gmra.mxu0 %v390
      %v637 = vpop.f32.mrf.mxu0
      %v638 = vadd.f32 0.0, %v637
      %v639 = vpop.f32.mrf.mxu0
      %640 = vdwg.mxu0
      %v642 = vsel %vm283, %v209, 0
      %v645 = vsel %vm283, %v210, 0
      %v648 = vsel %vm283, %v211, 0
      %v651 = vsel %vm283, %v212, 0
      %v654 = vsel %vm283, %v213, 0
      %v657 = vsel %vm283, %v214, 0
      %v660 = vsel %vm283, %v215, 0
      %v663 = vsel %vm283, %v216, 0
      %v666 = vsel %vm283, %v217, 0
      %v669 = vsel %vm283, %v218, 0
      %v672 = vsel %vm283, %v219, 0
      %v675 = vsel %vm283, %v220, 0
      %v678 = vsel %vm283, %v221, 0
      %v681 = vsel %vm283, %v222, 0
      %v684 = vsel %vm283, %v223, 0
      %v687 = vsel %vm283, %v224, 0
      %v690 = vsel %vm283, %v225, 0
      %v693 = vsel %vm283, %v226, 0
      %v696 = vsel %vm283, %v227, 0
      %v699 = vsel %vm283, %v228, 0
      %v702 = vsel %vm283, %v229, 0
      %v705 = vsel %vm283, %v230, 0
      %v708 = vsel %vm283, %v231, 0
      %v711 = vsel %vm283, %v232, 0
      %v714 = vsel %vm283, %v233, 0
      %v717 = vsel %vm283, %v234, 0
      %v720 = vsel %vm283, %v235, 0
      %v723 = vsel %vm283, %v236, 0
      %v726 = vsel %vm283, %v237, 0
      %v729 = vsel %vm283, %v238, 0
      %v732 = vsel %vm283, %v239, 0
      %v735 = vsel %vm283, %v240, 0
      %v738 = vsel %vm283, %v241, 0
      %v741 = vsel %vm283, %v242, 0
      %v744 = vsel %vm283, %v243, 0
      %v747 = vsel %vm283, %v244, 0
      %v750 = vsel %vm392, %v245, 0
      %752 = vmatprep.subr.mxu0 0.0
      %753 = vmatpush1.msra.mxu0 0.0
      %754 = vmatprep.subr.mxu0 0.0
      %755 = vmatpush1.msra.mxu0 0.0
      %756 = vmatprep.subr.mxu0 0.0
      %757 = vmatpush1.msra.mxu0 0.0
      %758 = vmatprep.subr.mxu0 0.0
      %759 = vmatpush1.msra.mxu0 0.0
      %760 = vmatprep.subr.mxu0 0.0
      %761 = vmatpush1.msra.mxu0 0.0
      %762 = vmatprep.subr.mxu0 0.0
      %763 = vmatpush1.msra.mxu0 0.0
      %764 = vmatprep.subr.mxu0 0.0
      %765 = vmatpush1.msra.mxu0 0.0
      %766 = vmatprep.subr.mxu0 0.0
      %767 = vmatpush1.msra.mxu0 0.0
      %768 = vmatprep.subr.mxu0 0.0
      %769 = vmatpush1.msra.mxu0 0.0
      %770 = vmatprep.subr.mxu0 0.0
      %771 = vmatpush1.msra.mxu0 0.0
      %772 = vmatprep.subr.mxu0 0.0
      %773 = vmatpush1.msra.mxu0 0.0
      %774 = vmatprep.subr.mxu0 0.0
      %775 = vmatpush1.msra.mxu0 0.0
      %776 = vmatprep.subr.mxu0 0.0
      %777 = vmatpush1.msra.mxu0 0.0
      %778 = vmatprep.subr.mxu0 0.0
      %779 = vmatpush1.msra.mxu0 0.0
      %780 = vmatprep.subr.mxu0 0.0
      %781 = vmatpush1.msra.mxu0 0.0
      %782 = vmatprep.subr.mxu0 0.0
      %783 = vmatpush1.msra.mxu0 %v750
      %784 = vmatprep.subr.mxu0 0.0
      %785 = vmatpush2.msra.mxu0 0.0
      %786 = vmatprep.subr.mxu0 0.0
      %787 = vmatpush2.msra.mxu0 0.0
      %788 = vmatprep.subr.mxu0 0.0
      %789 = vmatpush2.msra.mxu0 0.0
      %790 = vmatprep.subr.mxu0 0.0
      %791 = vmatpush2.msra.mxu0 0.0
      %792 = vmatprep.subr.mxu0 0.0
      %793 = vmatpush2.msra.mxu0 0.0
      %794 = vmatprep.subr.mxu0 0.0
      %795 = vmatpush2.msra.mxu0 0.0
      %796 = vmatprep.subr.mxu0 0.0
      %797 = vmatpush2.msra.mxu0 0.0
      %798 = vmatprep.subr.mxu0 0.0
      %799 = vmatpush2.msra.mxu0 0.0
      %800 = vmatprep.subr.mxu0 0.0
      %801 = vmatpush2.msra.mxu0 0.0
      %802 = vmatprep.subr.mxu0 0.0
      %803 = vmatpush2.msra.mxu0 0.0
      %804 = vmatprep.subr.mxu0 0.0
      %805 = vmatpush2.msra.mxu0 0.0
      %806 = vmatprep.subr.mxu0 0.0
      %807 = vmatpush2.msra.mxu0 0.0
      %808 = vmatprep.subr.mxu0 0.0
      %809 = vmatpush2.msra.mxu0 0.0
      %810 = vmatprep.subr.mxu0 0.0
      %811 = vmatpush2.msra.mxu0 0.0
      %812 = vmatprep.subr.mxu0 0.0
      %813 = vmatpush2.msra.mxu0 0.0
      %814 = vmatprep.subr.mxu0 0.0
      %815 = vmatpush2.msra.mxu0 0.0
      %816 = vmatprep.mubr.f32.mxu0 0.0
      %817 = vmatmul.mubr.f32.gmra.mxu0 %v642
      %v818 = vpop.f32.mrf.mxu0
      %v819 = vadd.f32 %v463, %v818
      %v820 = vpop.f32.mrf.mxu0
      %821 = vmatprep.mubr.f32.mxu0 0.0
      %822 = vmatmul.mubr.f32.gmra.mxu0 %v645
      %v823 = vpop.f32.mrf.mxu0
      %v824 = vadd.f32 %v468, %v823
      %v825 = vpop.f32.mrf.mxu0
      %826 = vmatprep.mubr.f32.mxu0 0.0
      %827 = vmatmul.mubr.f32.gmra.mxu0 %v648
      %v828 = vpop.f32.mrf.mxu0
      %v829 = vadd.f32 %v473, %v828
      %v830 = vpop.f32.mrf.mxu0
      %831 = vmatprep.mubr.f32.mxu0 0.0
      %832 = vmatmul.mubr.f32.gmra.mxu0 %v651
      %v833 = vpop.f32.mrf.mxu0
      %v834 = vadd.f32 %v478, %v833
      %v835 = vpop.f32.mrf.mxu0
      %836 = vmatprep.mubr.f32.mxu0 0.0
      %837 = vmatmul.mubr.f32.gmra.mxu0 %v654
      %v838 = vpop.f32.mrf.mxu0
      %v839 = vadd.f32 %v483, %v838
      %v840 = vpop.f32.mrf.mxu0
      %841 = vmatprep.mubr.f32.mxu0 0.0
      %842 = vmatmul.mubr.f32.gmra.mxu0 %v657
      %v843 = vpop.f32.mrf.mxu0
      %v844 = vadd.f32 %v488, %v843
      %v845 = vpop.f32.mrf.mxu0
      %846 = vmatprep.mubr.f32.mxu0 0.0
      %847 = vmatmul.mubr.f32.gmra.mxu0 %v660
      %v848 = vpop.f32.mrf.mxu0
      %v849 = vadd.f32 %v493, %v848
      %v850 = vpop.f32.mrf.mxu0
      %851 = vmatprep.mubr.f32.mxu0 0.0
      %852 = vmatmul.mubr.f32.gmra.mxu0 %v663
      %v853 = vpop.f32.mrf.mxu0
      %v854 = vadd.f32 %v498, %v853
      %v855 = vpop.f32.mrf.mxu0
      %856 = vmatprep.mubr.f32.mxu0 0.0
      %857 = vmatmul.mubr.f32.gmra.mxu0 %v666
      %v858 = vpop.f32.mrf.mxu0
      %v859 = vadd.f32 %v503, %v858
      %v860 = vpop.f32.mrf.mxu0
      %861 = vmatprep.mubr.f32.mxu0 0.0
      %862 = vmatmul.mubr.f32.gmra.mxu0 %v669
      %v863 = vpop.f32.mrf.mxu0
      %v864 = vadd.f32 %v508, %v863
      %v865 = vpop.f32.mrf.mxu0
      %866 = vmatprep.mubr.f32.mxu0 0.0
      %867 = vmatmul.mubr.f32.gmra.mxu0 %v672
      %v868 = vpop.f32.mrf.mxu0
      %v869 = vadd.f32 %v513, %v868
      %v870 = vpop.f32.mrf.mxu0
      %871 = vmatprep.mubr.f32.mxu0 0.0
      %872 = vmatmul.mubr.f32.gmra.mxu0 %v675
      %v873 = vpop.f32.mrf.mxu0
      %v874 = vadd.f32 %v518, %v873
      %v875 = vpop.f32.mrf.mxu0
      %876 = vmatprep.mubr.f32.mxu0 0.0
      %877 = vmatmul.mubr.f32.gmra.mxu0 %v678
      %v878 = vpop.f32.mrf.mxu0
      %v879 = vadd.f32 %v523, %v878
      %v880 = vpop.f32.mrf.mxu0
      %881 = vmatprep.mubr.f32.mxu0 0.0
      %882 = vmatmul.mubr.f32.gmra.mxu0 %v681
      %v883 = vpop.f32.mrf.mxu0
      %v884 = vadd.f32 %v528, %v883
      %v885 = vpop.f32.mrf.mxu0
      %886 = vmatprep.mubr.f32.mxu0 0.0
      %887 = vmatmul.mubr.f32.gmra.mxu0 %v684
      %v888 = vpop.f32.mrf.mxu0
      %v889 = vadd.f32 %v533, %v888
      %v890 = vpop.f32.mrf.mxu0
      %891 = vmatprep.mubr.f32.mxu0 0.0
      %892 = vmatmul.mubr.f32.gmra.mxu0 %v687
      %v893 = vpop.f32.mrf.mxu0
      %v894 = vadd.f32 %v538, %v893
      %v895 = vpop.f32.mrf.mxu0
      %896 = vmatprep.mubr.f32.mxu0 0.0
      %897 = vmatmul.mubr.f32.gmra.mxu0 %v690
      %v898 = vpop.f32.mrf.mxu0
      %v899 = vadd.f32 %v543, %v898
      %v900 = vpop.f32.mrf.mxu0
      %901 = vmatprep.mubr.f32.mxu0 0.0
      %902 = vmatmul.mubr.f32.gmra.mxu0 %v693
      %v903 = vpop.f32.mrf.mxu0
      %v904 = vadd.f32 %v548, %v903
      %v905 = vpop.f32.mrf.mxu0
      %906 = vmatprep.mubr.f32.mxu0 0.0
      %907 = vmatmul.mubr.f32.gmra.mxu0 %v696
      %v908 = vpop.f32.mrf.mxu0
      %v909 = vadd.f32 %v553, %v908
      %v910 = vpop.f32.mrf.mxu0
      %911 = vmatprep.mubr.f32.mxu0 0.0
      %912 = vmatmul.mubr.f32.gmra.mxu0 %v699
      %v913 = vpop.f32.mrf.mxu0
      %v914 = vadd.f32 %v558, %v913
      %v915 = vpop.f32.mrf.mxu0
      %916 = vmatprep.mubr.f32.mxu0 0.0
      %917 = vmatmul.mubr.f32.gmra.mxu0 %v702
      %v918 = vpop.f32.mrf.mxu0
      %v919 = vadd.f32 %v563, %v918
      %v920 = vpop.f32.mrf.mxu0
      %921 = vmatprep.mubr.f32.mxu0 0.0
      %922 = vmatmul.mubr.f32.gmra.mxu0 %v705
      %v923 = vpop.f32.mrf.mxu0
      %v924 = vadd.f32 %v568, %v923
      %v925 = vpop.f32.mrf.mxu0
      %926 = vmatprep.mubr.f32.mxu0 0.0
      %927 = vmatmul.mubr.f32.gmra.mxu0 %v708
      %v928 = vpop.f32.mrf.mxu0
      %v929 = vadd.f32 %v573, %v928
      %v930 = vpop.f32.mrf.mxu0
      %931 = vmatprep.mubr.f32.mxu0 0.0
      %932 = vmatmul.mubr.f32.gmra.mxu0 %v711
      %v933 = vpop.f32.mrf.mxu0
      %v934 = vadd.f32 %v578, %v933
      %v935 = vpop.f32.mrf.mxu0
      %936 = vmatprep.mubr.f32.mxu0 0.0
      %937 = vmatmul.mubr.f32.gmra.mxu0 %v714
      %v938 = vpop.f32.mrf.mxu0
      %v939 = vadd.f32 %v583, %v938
      %v940 = vpop.f32.mrf.mxu0
      %941 = vmatprep.mubr.f32.mxu0 0.0
      %942 = vmatmul.mubr.f32.gmra.mxu0 %v717
      %v943 = vpop.f32.mrf.mxu0
      %v944 = vadd.f32 %v588, %v943
      %v945 = vpop.f32.mrf.mxu0
      %946 = vmatprep.mubr.f32.mxu0 0.0
      %947 = vmatmul.mubr.f32.gmra.mxu0 %v720
      %v948 = vpop.f32.mrf.mxu0
      %v949 = vadd.f32 %v593, %v948
      %v950 = vpop.f32.mrf.mxu0
      %951 = vmatprep.mubr.f32.mxu0 0.0
      %952 = vmatmul.mubr.f32.gmra.mxu0 %v723
      %v953 = vpop.f32.mrf.mxu0
      %v954 = vadd.f32 %v598, %v953
      %v955 = vpop.f32.mrf.mxu0
      %956 = vmatprep.mubr.f32.mxu0 0.0
      %957 = vmatmul.mubr.f32.gmra.mxu0 %v726
      %v958 = vpop.f32.mrf.mxu0
      %v959 = vadd.f32 %v603, %v958
      %v960 = vpop.f32.mrf.mxu0
      %961 = vmatprep.mubr.f32.mxu0 0.0
      %962 = vmatmul.mubr.f32.gmra.mxu0 %v729
      %v963 = vpop.f32.mrf.mxu0
      %v964 = vadd.f32 %v608, %v963
      %v965 = vpop.f32.mrf.mxu0
      %966 = vmatprep.mubr.f32.mxu0 0.0
      %967 = vmatmul.mubr.f32.gmra.mxu0 %v732
      %v968 = vpop.f32.mrf.mxu0
      %v969 = vadd.f32 %v613, %v968
      %v970 = vpop.f32.mrf.mxu0
      %971 = vmatprep.mubr.f32.mxu0 0.0
      %972 = vmatmul.mubr.f32.gmra.mxu0 %v735
      %v973 = vpop.f32.mrf.mxu0
      %v974 = vadd.f32 %v618, %v973
      %v975 = vpop.f32.mrf.mxu0
      %976 = vmatprep.mubr.f32.mxu0 0.0
      %977 = vmatmul.mubr.f32.gmra.mxu0 %v738
      %v978 = vpop.f32.mrf.mxu0
      %v979 = vadd.f32 %v623, %v978
      %v980 = vpop.f32.mrf.mxu0
      %981 = vmatprep.mubr.f32.mxu0 0.0
      %982 = vmatmul.mubr.f32.gmra.mxu0 %v741
      %v983 = vpop.f32.mrf.mxu0
      %v984 = vadd.f32 %v628, %v983
      %v985 = vpop.f32.mrf.mxu0
      %986 = vmatprep.mubr.f32.mxu0 0.0
      %987 = vmatmul.mubr.f32.gmra.mxu0 %v744
      %v988 = vpop.f32.mrf.mxu0
      %v989 = vadd.f32 %v633, %v988
      %v990 = vpop.f32.mrf.mxu0
      %991 = vmatprep.mubr.f32.mxu0 0.0
      %992 = vmatmul.mubr.f32.gmra.mxu0 %v747
      %v993 = vpop.f32.mrf.mxu0
      %v994 = vadd.f32 %v638, %v993
      %v995 = vpop.f32.mrf.mxu0
      %996 = vdwg.mxu0
      %v997 = vld [vmem:[%s199 + $0x2] sm:$0xff]
      %v998 = vld [vmem:[%s199 + $0xa] sm:$0xff]
      %v999 = vld [vmem:[%s199 + $0x12] sm:$0xff]
      %v1000 = vld [vmem:[%s199 + $0x1a] sm:$0xff]
      %v1001 = vld [vmem:[%s199 + $0x22] sm:$0xff]
      %v1002 = vld [vmem:[%s199 + $0x2a] sm:$0xff]
      %v1003 = vld [vmem:[%s199 + $0x32] sm:$0xff]
      %v1004 = vld [vmem:[%s199 + $0x3a] sm:$0xff]
      %v1005 = vld [vmem:[%s199 + $0x42] sm:$0xff]
      %v1006 = vld [vmem:[%s199 + $0x4a] sm:$0xff]
      %v1007 = vld [vmem:[%s199 + $0x52] sm:$0xff]
      %v1008 = vld [vmem:[%s199 + $0x5a] sm:$0xff]
      %v1009 = vld [vmem:[%s199 + $0x62] sm:$0xff]
      %v1010 = vld [vmem:[%s199 + $0x6a] sm:$0xff]
      %v1011 = vld [vmem:[%s199 + $0x72] sm:$0xff]
      %v1012 = vld [vmem:[%s199 + $0x7a] sm:$0xff]
      %v1013 = vld [vmem:[%s199 + $0x82] sm:$0xff]
      %v1014 = vld [vmem:[%s199 + $0x8a] sm:$0xff]
      %v1015 = vld [vmem:[%s199 + $0x92] sm:$0xff]
      %v1016 = vld [vmem:[%s199 + $0x9a] sm:$0xff]
      %v1017 = vld [vmem:[%s199 + $0xa2] sm:$0xff]
      %v1018 = vld [vmem:[%s199 + $0xaa] sm:$0xff]
      %v1019 = vld [vmem:[%s199 + $0xb2] sm:$0xff]
      %v1020 = vld [vmem:[%s199 + $0xba] sm:$0xff]
      %v1021 = vld [vmem:[%s199 + $0xc2] sm:$0xff]
      %v1022 = vld [vmem:[%s199 + $0xca] sm:$0xff]
      %v1023 = vld [vmem:[%s199 + $0xd2] sm:$0xff]
      %v1024 = vld [vmem:[%s199 + $0xda] sm:$0xff]
      %v1025 = vld [vmem:[%s199 + $0xe2] sm:$0xff]
      %v1026 = vld [vmem:[%s199 + $0xea] sm:$0xff]
      %v1027 = vld [vmem:[%s199 + $0xf2] sm:$0xff]
      %v1028 = vld [vmem:[%s199 + $0xfa] sm:$0xff]
      %v1029 = vld [vmem:[%s199 + $0x102] sm:$0xff]
      %v1030 = vld [vmem:[%s199 + $0x10a] sm:$0xff]
      %v1031 = vld [vmem:[%s199 + $0x112] sm:$0xff]
      %v1032 = vld [vmem:[%s199 + $0x11a] sm:$0xff]
      %v1033 = vld [vmem:[%s1 + $0x8] sm:$0xf]
      %v1035 = vsel %vm283, %v997, 0
      %v1038 = vsel %vm283, %v998, 0
      %v1041 = vsel %vm283, %v999, 0
      %v1044 = vsel %vm283, %v1000, 0
      %v1047 = vsel %vm283, %v1001, 0
      %v1050 = vsel %vm283, %v1002, 0
      %v1053 = vsel %vm283, %v1003, 0
      %v1056 = vsel %vm283, %v1004, 0
      %v1059 = vsel %vm283, %v1005, 0
      %v1062 = vsel %vm283, %v1006, 0
      %v1065 = vsel %vm283, %v1007, 0
      %v1068 = vsel %vm283, %v1008, 0
      %v1071 = vsel %vm283, %v1009, 0
      %v1074 = vsel %vm283, %v1010, 0
      %v1077 = vsel %vm283, %v1011, 0
      %v1080 = vsel %vm283, %v1012, 0
      %v1083 = vsel %vm283, %v1013, 0
      %v1086 = vsel %vm283, %v1014, 0
      %v1089 = vsel %vm283, %v1015, 0
      %v1092 = vsel %vm283, %v1016, 0
      %v1095 = vsel %vm283, %v1017, 0
      %v1098 = vsel %vm283, %v1018, 0
      %v1101 = vsel %vm283, %v1019, 0
      %v1104 = vsel %vm283, %v1020, 0
      %v1107 = vsel %vm283, %v1021, 0
      %v1110 = vsel %vm283, %v1022, 0
      %v1113 = vsel %vm283, %v1023, 0
      %v1116 = vsel %vm283, %v1024, 0
      %v1119 = vsel %vm283, %v1025, 0
      %v1122 = vsel %vm283, %v1026, 0
      %v1125 = vsel %vm283, %v1027, 0
      %v1128 = vsel %vm283, %v1028, 0
      %v1131 = vsel %vm283, %v1029, 0
      %v1134 = vsel %vm283, %v1030, 0
      %v1137 = vsel %vm283, %v1031, 0
      %v1140 = vsel %vm283, %v1032, 0
      %v1143 = vsel %vm392, %v1033, 0
      %1145 = vmatprep.subr.mxu0 0.0
      %1146 = vmatpush1.msra.mxu0 0.0
      %1147 = vmatprep.subr.mxu0 0.0
      %1148 = vmatpush1.msra.mxu0 0.0
      %1149 = vmatprep.subr.mxu0 0.0
      %1150 = vmatpush1.msra.mxu0 0.0
      %1151 = vmatprep.subr.mxu0 0.0
      %1152 = vmatpush1.msra.mxu0 0.0
      %1153 = vmatprep.subr.mxu0 0.0
      %1154 = vmatpush1.msra.mxu0 0.0
      %1155 = vmatprep.subr.mxu0 0.0
      %1156 = vmatpush1.msra.mxu0 0.0
      %1157 = vmatprep.subr.mxu0 0.0
      %1158 = vmatpush1.msra.mxu0 0.0
      %1159 = vmatprep.subr.mxu0 0.0
      %1160 = vmatpush1.msra.mxu0 0.0
      %1161 = vmatprep.subr.mxu0 0.0
      %1162 = vmatpush1.msra.mxu0 0.0
      %1163 = vmatprep.subr.mxu0 0.0
      %1164 = vmatpush1.msra.mxu0 0.0
      %1165 = vmatprep.subr.mxu0 0.0
      %1166 = vmatpush1.msra.mxu0 0.0
      %1167 = vmatprep.subr.mxu0 0.0
      %1168 = vmatpush1.msra.mxu0 0.0
      %1169 = vmatprep.subr.mxu0 0.0
      %1170 = vmatpush1.msra.mxu0 0.0
      %1171 = vmatprep.subr.mxu0 0.0
      %1172 = vmatpush1.msra.mxu0 0.0
      %1173 = vmatprep.subr.mxu0 0.0
      %1174 = vmatpush1.msra.mxu0 0.0
      %1175 = vmatprep.subr.mxu0 0.0
      %1176 = vmatpush1.msra.mxu0 %v1143
      %1177 = vmatprep.subr.mxu0 0.0
      %1178 = vmatpush2.msra.mxu0 0.0
      %1179 = vmatprep.subr.mxu0 0.0
      %1180 = vmatpush2.msra.mxu0 0.0
      %1181 = vmatprep.subr.mxu0 0.0
      %1182 = vmatpush2.msra.mxu0 0.0
      %1183 = vmatprep.subr.mxu0 0.0
      %1184 = vmatpush2.msra.mxu0 0.0
      %1185 = vmatprep.subr.mxu0 0.0
      %1186 = vmatpush2.msra.mxu0 0.0
      %1187 = vmatprep.subr.mxu0 0.0
      %1188 = vmatpush2.msra.mxu0 0.0
      %1189 = vmatprep.subr.mxu0 0.0
      %1190 = vmatpush2.msra.mxu0 0.0
      %1191 = vmatprep.subr.mxu0 0.0
      %1192 = vmatpush2.msra.mxu0 0.0
      %1193 = vmatprep.subr.mxu0 0.0
      %1194 = vmatpush2.msra.mxu0 0.0
      %1195 = vmatprep.subr.mxu0 0.0
      %1196 = vmatpush2.msra.mxu0 0.0
      %1197 = vmatprep.subr.mxu0 0.0
      %1198 = vmatpush2.msra.mxu0 0.0
      %1199 = vmatprep.subr.mxu0 0.0
      %1200 = vmatpush2.msra.mxu0 0.0
      %1201 = vmatprep.subr.mxu0 0.0
      %1202 = vmatpush2.msra.mxu0 0.0
      %1203 = vmatprep.subr.mxu0 0.0
      %1204 = vmatpush2.msra.mxu0 0.0
      %1205 = vmatprep.subr.mxu0 0.0
      %1206 = vmatpush2.msra.mxu0 0.0
      %1207 = vmatprep.subr.mxu0 0.0
      %1208 = vmatpush2.msra.mxu0 0.0
      %1209 = vmatprep.mubr.f32.mxu0 0.0
      %1210 = vmatmul.mubr.f32.gmra.mxu0 %v1035
      %v1211 = vpop.f32.mrf.mxu0
      %v1212 = vadd.f32 0.0, %v1211
      %v1213 = vpop.f32.mrf.mxu0
      %1214 = vmatprep.mubr.f32.mxu0 0.0
      %1215 = vmatmul.mubr.f32.gmra.mxu0 %v1038
      %v1216 = vpop.f32.mrf.mxu0
      %v1217 = vadd.f32 0.0, %v1216
      %v1218 = vpop.f32.mrf.mxu0
      %1219 = vmatprep.mubr.f32.mxu0 0.0
      %1220 = vmatmul.mubr.f32.gmra.mxu0 %v1041
      %v1221 = vpop.f32.mrf.mxu0
      %v1222 = vadd.f32 0.0, %v1221
      %v1223 = vpop.f32.mrf.mxu0
      %1224 = vmatprep.mubr.f32.mxu0 0.0
      %1225 = vmatmul.mubr.f32.gmra.mxu0 %v1044
      %v1226 = vpop.f32.mrf.mxu0
      %v1227 = vadd.f32 0.0, %v1226
      %v1228 = vpop.f32.mrf.mxu0
      %1229 = vmatprep.mubr.f32.mxu0 0.0
      %1230 = vmatmul.mubr.f32.gmra.mxu0 %v1047
      %v1231 = vpop.f32.mrf.mxu0
      %v1232 = vadd.f32 0.0, %v1231
      %v1233 = vpop.f32.mrf.mxu0
      %1234 = vmatprep.mubr.f32.mxu0 0.0
      %1235 = vmatmul.mubr.f32.gmra.mxu0 %v1050
      %v1236 = vpop.f32.mrf.mxu0
      %v1237 = vadd.f32 0.0, %v1236
      %v1238 = vpop.f32.mrf.mxu0
      %1239 = vmatprep.mubr.f32.mxu0 0.0
      %1240 = vmatmul.mubr.f32.gmra.mxu0 %v1053
      %v1241 = vpop.f32.mrf.mxu0
      %v1242 = vadd.f32 0.0, %v1241
      %v1243 = vpop.f32.mrf.mxu0
      %1244 = vmatprep.mubr.f32.mxu0 0.0
      %1245 = vmatmul.mubr.f32.gmra.mxu0 %v1056
      %v1246 = vpop.f32.mrf.mxu0
      %v1247 = vadd.f32 0.0, %v1246
      %v1248 = vpop.f32.mrf.mxu0
      %1249 = vmatprep.mubr.f32.mxu0 0.0
      %1250 = vmatmul.mubr.f32.gmra.mxu0 %v1059
      %v1251 = vpop.f32.mrf.mxu0
      %v1252 = vadd.f32 0.0, %v1251
      %v1253 = vpop.f32.mrf.mxu0
      %1254 = vmatprep.mubr.f32.mxu0 0.0
      %1255 = vmatmul.mubr.f32.gmra.mxu0 %v1062
      %v1256 = vpop.f32.mrf.mxu0
      %v1257 = vadd.f32 0.0, %v1256
      %v1258 = vpop.f32.mrf.mxu0
      %1259 = vmatprep.mubr.f32.mxu0 0.0
      %1260 = vmatmul.mubr.f32.gmra.mxu0 %v1065
      %v1261 = vpop.f32.mrf.mxu0
      %v1262 = vadd.f32 0.0, %v1261
      %v1263 = vpop.f32.mrf.mxu0
      %1264 = vmatprep.mubr.f32.mxu0 0.0
      %1265 = vmatmul.mubr.f32.gmra.mxu0 %v1068
      %v1266 = vpop.f32.mrf.mxu0
      %v1267 = vadd.f32 0.0, %v1266
      %v1268 = vpop.f32.mrf.mxu0
      %1269 = vmatprep.mubr.f32.mxu0 0.0
      %1270 = vmatmul.mubr.f32.gmra.mxu0 %v1071
      %v1271 = vpop.f32.mrf.mxu0
      %v1272 = vadd.f32 0.0, %v1271
      %v1273 = vpop.f32.mrf.mxu0
      %1274 = vmatprep.mubr.f32.mxu0 0.0
      %1275 = vmatmul.mubr.f32.gmra.mxu0 %v1074
      %v1276 = vpop.f32.mrf.mxu0
      %v1277 = vadd.f32 0.0, %v1276
      %v1278 = vpop.f32.mrf.mxu0
      %1279 = vmatprep.mubr.f32.mxu0 0.0
      %1280 = vmatmul.mubr.f32.gmra.mxu0 %v1077
      %v1281 = vpop.f32.mrf.mxu0
      %v1282 = vadd.f32 0.0, %v1281
      %v1283 = vpop.f32.mrf.mxu0
      %1284 = vmatprep.mubr.f32.mxu0 0.0
      %1285 = vmatmul.mubr.f32.gmra.mxu0 %v1080
      %v1286 = vpop.f32.mrf.mxu0
      %v1287 = vadd.f32 0.0, %v1286
      %v1288 = vpop.f32.mrf.mxu0
      %1289 = vmatprep.mubr.f32.mxu0 0.0
      %1290 = vmatmul.mubr.f32.gmra.mxu0 %v1083
      %v1291 = vpop.f32.mrf.mxu0
      %v1292 = vadd.f32 0.0, %v1291
      %v1293 = vpop.f32.mrf.mxu0
      %1294 = vmatprep.mubr.f32.mxu0 0.0
      %1295 = vmatmul.mubr.f32.gmra.mxu0 %v1086
      %v1296 = vpop.f32.mrf.mxu0
      %v1297 = vadd.f32 0.0, %v1296
      %v1298 = vpop.f32.mrf.mxu0
      %1299 = vmatprep.mubr.f32.mxu0 0.0
      %1300 = vmatmul.mubr.f32.gmra.mxu0 %v1089
      %v1301 = vpop.f32.mrf.mxu0
      %v1302 = vadd.f32 0.0, %v1301
      %v1303 = vpop.f32.mrf.mxu0
      %1304 = vmatprep.mubr.f32.mxu0 0.0
      %1305 = vmatmul.mubr.f32.gmra.mxu0 %v1092
      %v1306 = vpop.f32.mrf.mxu0
      %v1307 = vadd.f32 0.0, %v1306
      %v1308 = vpop.f32.mrf.mxu0
      %1309 = vmatprep.mubr.f32.mxu0 0.0
      %1310 = vmatmul.mubr.f32.gmra.mxu0 %v1095
      %v1311 = vpop.f32.mrf.mxu0
      %v1312 = vadd.f32 0.0, %v1311
      %v1313 = vpop.f32.mrf.mxu0
      %1314 = vmatprep.mubr.f32.mxu0 0.0
      %1315 = vmatmul.mubr.f32.gmra.mxu0 %v1098
      %v1316 = vpop.f32.mrf.mxu0
      %v1317 = vadd.f32 0.0, %v1316
      %v1318 = vpop.f32.mrf.mxu0
      %1319 = vmatprep.mubr.f32.mxu0 0.0
      %1320 = vmatmul.mubr.f32.gmra.mxu0 %v1101
      %v1321 = vpop.f32.mrf.mxu0
      %v1322 = vadd.f32 0.0, %v1321
      %v1323 = vpop.f32.mrf.mxu0
      %1324 = vmatprep.mubr.f32.mxu0 0.0
      %1325 = vmatmul.mubr.f32.gmra.mxu0 %v1104
      %v1326 = vpop.f32.mrf.mxu0
      %v1327 = vadd.f32 0.0, %v1326
      %v1328 = vpop.f32.mrf.mxu0
      %1329 = vmatprep.mubr.f32.mxu0 0.0
      %1330 = vmatmul.mubr.f32.gmra.mxu0 %v1107
      %v1331 = vpop.f32.mrf.mxu0
      %v1332 = vadd.f32 0.0, %v1331
      %v1333 = vpop.f32.mrf.mxu0
      %1334 = vmatprep.mubr.f32.mxu0 0.0
      %1335 = vmatmul.mubr.f32.gmra.mxu0 %v1110
      %v1336 = vpop.f32.mrf.mxu0
      %v1337 = vadd.f32 0.0, %v1336
      %v1338 = vpop.f32.mrf.mxu0
      %1339 = vmatprep.mubr.f32.mxu0 0.0
      %1340 = vmatmul.mubr.f32.gmra.mxu0 %v1113
      %v1341 = vpop.f32.mrf.mxu0
      %v1342 = vadd.f32 0.0, %v1341
      %v1343 = vpop.f32.mrf.mxu0
      %1344 = vmatprep.mubr.f32.mxu0 0.0
      %1345 = vmatmul.mubr.f32.gmra.mxu0 %v1116
      %v1346 = vpop.f32.mrf.mxu0
      %v1347 = vadd.f32 0.0, %v1346
      %v1348 = vpop.f32.mrf.mxu0
      %1349 = vmatprep.mubr.f32.mxu0 0.0
      %1350 = vmatmul.mubr.f32.gmra.mxu0 %v1119
      %v1351 = vpop.f32.mrf.mxu0
      %v1352 = vadd.f32 0.0, %v1351
      %v1353 = vpop.f32.mrf.mxu0
      %1354 = vmatprep.mubr.f32.mxu0 0.0
      %1355 = vmatmul.mubr.f32.gmra.mxu0 %v1122
      %v1356 = vpop.f32.mrf.mxu0
      %v1357 = vadd.f32 0.0, %v1356
      %v1358 = vpop.f32.mrf.mxu0
      %1359 = vmatprep.mubr.f32.mxu0 0.0
      %1360 = vmatmul.mubr.f32.gmra.mxu0 %v1125
      %v1361 = vpop.f32.mrf.mxu0
      %v1362 = vadd.f32 0.0, %v1361
      %v1363 = vpop.f32.mrf.mxu0
      %1364 = vmatprep.mubr.f32.mxu0 0.0
      %1365 = vmatmul.mubr.f32.gmra.mxu0 %v1128
      %v1366 = vpop.f32.mrf.mxu0
      %v1367 = vadd.f32 0.0, %v1366
      %v1368 = vpop.f32.mrf.mxu0
      %1369 = vmatprep.mubr.f32.mxu0 0.0
      %1370 = vmatmul.mubr.f32.gmra.mxu0 %v1131
      %v1371 = vpop.f32.mrf.mxu0
      %v1372 = vadd.f32 0.0, %v1371
      %v1373 = vpop.f32.mrf.mxu0
      %1374 = vmatprep.mubr.f32.mxu0 0.0
      %1375 = vmatmul.mubr.f32.gmra.mxu0 %v1134
      %v1376 = vpop.f32.mrf.mxu0
      %v1377 = vadd.f32 0.0, %v1376
      %v1378 = vpop.f32.mrf.mxu0
      %1379 = vmatprep.mubr.f32.mxu0 0.0
      %1380 = vmatmul.mubr.f32.gmra.mxu0 %v1137
      %v1381 = vpop.f32.mrf.mxu0
      %v1382 = vadd.f32 0.0, %v1381
      %v1383 = vpop.f32.mrf.mxu0
      %1384 = vmatprep.mubr.f32.mxu0 0.0
      %1385 = vmatmul.mubr.f32.gmra.mxu0 %v1140
      %v1386 = vpop.f32.mrf.mxu0
      %v1387 = vadd.f32 0.0, %v1386
      %v1388 = vpop.f32.mrf.mxu0
      %1389 = vdwg.mxu0
      %v1390 = vadd.f32 %v819, %v1212
      %v1391 = vadd.f32 %v824, %v1217
      %v1392 = vadd.f32 %v829, %v1222
      %v1393 = vadd.f32 %v834, %v1227
      %v1394 = vadd.f32 %v839, %v1232
      %v1395 = vadd.f32 %v844, %v1237
      %v1396 = vadd.f32 %v849, %v1242
      %v1397 = vadd.f32 %v854, %v1247
      %v1398 = vadd.f32 %v859, %v1252
      %v1399 = vadd.f32 %v864, %v1257
      %v1400 = vadd.f32 %v869, %v1262
      %v1401 = vadd.f32 %v874, %v1267
      %v1402 = vadd.f32 %v879, %v1272
      %v1403 = vadd.f32 %v884, %v1277
      %v1404 = vadd.f32 %v889, %v1282
      %v1405 = vadd.f32 %v894, %v1287
      %v1406 = vadd.f32 %v899, %v1292
      %v1407 = vadd.f32 %v904, %v1297
      %v1408 = vadd.f32 %v909, %v1302
      %v1409 = vadd.f32 %v914, %v1307
      %v1410 = vadd.f32 %v919, %v1312
      %v1411 = vadd.f32 %v924, %v1317
      %v1412 = vadd.f32 %v929, %v1322
      %v1413 = vadd.f32 %v934, %v1327
      %v1414 = vadd.f32 %v939, %v1332
      %v1415 = vadd.f32 %v944, %v1337
      %v1416 = vadd.f32 %v949, %v1342
      %v1417 = vadd.f32 %v954, %v1347
      %v1418 = vadd.f32 %v959, %v1352
      %v1419 = vadd.f32 %v964, %v1357
      %v1420 = vadd.f32 %v969, %v1362
      %v1421 = vadd.f32 %v974, %v1367
      %v1422 = vadd.f32 %v979, %v1372
      %v1423 = vadd.f32 %v984, %v1377
      %v1424 = vadd.f32 %v989, %v1382
      %v1425 = vadd.f32 %v994, %v1387
      %v1426 = vld [vmem:[%s199 + $0x12] sm:$0xff]
      %v1427 = vld [vmem:[%s199 + $0x1a] sm:$0xff]
      %v1428 = vld [vmem:[%s199 + $0x22] sm:$0xff]
      %v1429 = vld [vmem:[%s199 + $0x2a] sm:$0xff]
      %v1430 = vld [vmem:[%s199 + $0x32] sm:$0xff]
      %v1431 = vld [vmem:[%s199 + $0x3a] sm:$0xff]
      %v1432 = vld [vmem:[%s199 + $0x42] sm:$0xff]
      %v1433 = vld [vmem:[%s199 + $0x4a] sm:$0xff]
      %v1434 = vld [vmem:[%s199 + $0x52] sm:$0xff]
      %v1435 = vld [vmem:[%s199 + $0x5a] sm:$0xff]
      %v1436 = vld [vmem:[%s199 + $0x62] sm:$0xff]
      %v1437 = vld [vmem:[%s199 + $0x6a] sm:$0xff]
      %v1438 = vld [vmem:[%s199 + $0x72] sm:$0xff]
      %v1439 = vld [vmem:[%s199 + $0x7a] sm:$0xff]
      %v1440 = vld [vmem:[%s199 + $0x82] sm:$0xff]
      %v1441 = vld [vmem:[%s199 + $0x8a] sm:$0xff]
      %v1442 = vld [vmem:[%s199 + $0x92] sm:$0xff]
      %v1443 = vld [vmem:[%s199 + $0x9a] sm:$0xff]
      %v1444 = vld [vmem:[%s199 + $0xa2] sm:$0xff]
      %v1445 = vld [vmem:[%s199 + $0xaa] sm:$0xff]
      %v1446 = vld [vmem:[%s199 + $0xb2] sm:$0xff]
      %v1447 = vld [vmem:[%s199 + $0xba] sm:$0xff]
      %v1448 = vld [vmem:[%s199 + $0xc2] sm:$0xff]
      %v1449 = vld [vmem:[%s199 + $0xca] sm:$0xff]
      %v1450 = vld [vmem:[%s199 + $0xd2] sm:$0xff]
      %v1451 = vld [vmem:[%s199 + $0xda] sm:$0xff]
      %v1452 = vld [vmem:[%s199 + $0xe2] sm:$0xff]
      %v1453 = vld [vmem:[%s199 + $0xea] sm:$0xff]
      %v1454 = vld [vmem:[%s199 + $0xf2] sm:$0xff]
      %v1455 = vld [vmem:[%s199 + $0xfa] sm:$0xff]
      %v1456 = vld [vmem:[%s199 + $0x102] sm:$0xff]
      %v1457 = vld [vmem:[%s199 + $0x10a] sm:$0xff]
      %v1458 = vld [vmem:[%s199 + $0x112] sm:$0xff]
      %v1459 = vld [vmem:[%s199 + $0x11a] sm:$0xff]
      %v1460 = vld [vmem:[%s199 + $0x122] sm:$0xff]
      %v1461 = vld [vmem:[%s199 + $0x12a] sm:$0xff]
      %v1462 = vld [vmem:[%s1 + $0xc] sm:$0xf]
      %v1464 = vsel %vm283, %v1426, 0
      %v1467 = vsel %vm283, %v1427, 0
      %v1470 = vsel %vm283, %v1428, 0
      %v1473 = vsel %vm283, %v1429, 0
      %v1476 = vsel %vm283, %v1430, 0
      %v1479 = vsel %vm283, %v1431, 0
      %v1482 = vsel %vm283, %v1432, 0
      %v1485 = vsel %vm283, %v1433, 0
      %v1488 = vsel %vm283, %v1434, 0
      %v1491 = vsel %vm283, %v1435, 0
      %v1494 = vsel %vm283, %v1436, 0
      %v1497 = vsel %vm283, %v1437, 0
      %v1500 = vsel %vm283, %v1438, 0
      %v1503 = vsel %vm283, %v1439, 0
      %v1506 = vsel %vm283, %v1440, 0
      %v1509 = vsel %vm283, %v1441, 0
      %v1512 = vsel %vm283, %v1442, 0
      %v1515 = vsel %vm283, %v1443, 0
      %v1518 = vsel %vm283, %v1444, 0
      %v1521 = vsel %vm283, %v1445, 0
      %v1524 = vsel %vm283, %v1446, 0
      %v1527 = vsel %vm283, %v1447, 0
      %v1530 = vsel %vm283, %v1448, 0
      %v1533 = vsel %vm283, %v1449, 0
      %v1536 = vsel %vm283, %v1450, 0
      %v1539 = vsel %vm283, %v1451, 0
      %v1542 = vsel %vm283, %v1452, 0
      %v1545 = vsel %vm283, %v1453, 0
      %v1548 = vsel %vm283, %v1454, 0
      %v1551 = vsel %vm283, %v1455, 0
      %v1554 = vsel %vm283, %v1456, 0
      %v1557 = vsel %vm283, %v1457, 0
      %v1560 = vsel %vm283, %v1458, 0
      %v1563 = vsel %vm283, %v1459, 0
      %v1566 = vsel %vm283, %v1460, 0
      %v1569 = vsel %vm283, %v1461, 0
      %v1572 = vsel %vm392, %v1462, 0
      %1574 = vmatprep.subr.mxu0 0.0
      %1575 = vmatpush1.msra.mxu0 0.0
      %1576 = vmatprep.subr.mxu0 0.0
      %1577 = vmatpush1.msra.mxu0 0.0
      %1578 = vmatprep.subr.mxu0 0.0
      %1579 = vmatpush1.msra.mxu0 0.0
      %1580 = vmatprep.subr.mxu0 0.0
      %1581 = vmatpush1.msra.mxu0 0.0
      %1582 = vmatprep.subr.mxu0 0.0
      %1583 = vmatpush1.msra.mxu0 0.0
      %1584 = vmatprep.subr.mxu0 0.0
      %1585 = vmatpush1.msra.mxu0 0.0
      %1586 = vmatprep.subr.mxu0 0.0
      %1587 = vmatpush1.msra.mxu0 0.0
      %1588 = vmatprep.subr.mxu0 0.0
      %1589 = vmatpush1.msra.mxu0 0.0
      %1590 = vmatprep.subr.mxu0 0.0
      %1591 = vmatpush1.msra.mxu0 0.0
      %1592 = vmatprep.subr.mxu0 0.0
      %1593 = vmatpush1.msra.mxu0 0.0
      %1594 = vmatprep.subr.mxu0 0.0
      %1595 = vmatpush1.msra.mxu0 0.0
      %1596 = vmatprep.subr.mxu0 0.0
      %1597 = vmatpush1.msra.mxu0 0.0
      %1598 = vmatprep.subr.mxu0 0.0
      %1599 = vmatpush1.msra.mxu0 0.0
      %1600 = vmatprep.subr.mxu0 0.0
      %1601 = vmatpush1.msra.mxu0 0.0
      %1602 = vmatprep.subr.mxu0 0.0
      %1603 = vmatpush1.msra.mxu0 0.0
      %1604 = vmatprep.subr.mxu0 0.0
      %1605 = vmatpush1.msra.mxu0 %v1572
      %1606 = vmatprep.subr.mxu0 0.0
      %1607 = vmatpush2.msra.mxu0 0.0
      %1608 = vmatprep.subr.mxu0 0.0
      %1609 = vmatpush2.msra.mxu0 0.0
      %1610 = vmatprep.subr.mxu0 0.0
      %1611 = vmatpush2.msra.mxu0 0.0
      %1612 = vmatprep.subr.mxu0 0.0
      %1613 = vmatpush2.msra.mxu0 0.0
      %1614 = vmatprep.subr.mxu0 0.0
      %1615 = vmatpush2.msra.mxu0 0.0
      %1616 = vmatprep.subr.mxu0 0.0
      %1617 = vmatpush2.msra.mxu0 0.0
      %1618 = vmatprep.subr.mxu0 0.0
      %1619 = vmatpush2.msra.mxu0 0.0
      %1620 = vmatprep.subr.mxu0 0.0
      %1621 = vmatpush2.msra.mxu0 0.0
      %1622 = vmatprep.subr.mxu0 0.0
      %1623 = vmatpush2.msra.mxu0 0.0
      %1624 = vmatprep.subr.mxu0 0.0
      %1625 = vmatpush2.msra.mxu0 0.0
      %1626 = vmatprep.subr.mxu0 0.0
      %1627 = vmatpush2.msra.mxu0 0.0
      %1628 = vmatprep.subr.mxu0 0.0
      %1629 = vmatpush2.msra.mxu0 0.0
      %1630 = vmatprep.subr.mxu0 0.0
      %1631 = vmatpush2.msra.mxu0 0.0
      %1632 = vmatprep.subr.mxu0 0.0
      %1633 = vmatpush2.msra.mxu0 0.0
      %1634 = vmatprep.subr.mxu0 0.0
      %1635 = vmatpush2.msra.mxu0 0.0
      %1636 = vmatprep.subr.mxu0 0.0
      %1637 = vmatpush2.msra.mxu0 0.0
      %1638 = vmatprep.mubr.f32.mxu0 0.0
      %1639 = vmatmul.mubr.f32.gmra.mxu0 %v1464
      %v1640 = vpop.f32.mrf.mxu0
      %v1641 = vadd.f32 0.0, %v1640
      %v1642 = vpop.f32.mrf.mxu0
      %1643 = vmatprep.mubr.f32.mxu0 0.0
      %1644 = vmatmul.mubr.f32.gmra.mxu0 %v1467
      %v1645 = vpop.f32.mrf.mxu0
      %v1646 = vadd.f32 0.0, %v1645
      %v1647 = vpop.f32.mrf.mxu0
      %1648 = vmatprep.mubr.f32.mxu0 0.0
      %1649 = vmatmul.mubr.f32.gmra.mxu0 %v1470
      %v1650 = vpop.f32.mrf.mxu0
      %v1651 = vadd.f32 0.0, %v1650
      %v1652 = vpop.f32.mrf.mxu0
      %1653 = vmatprep.mubr.f32.mxu0 0.0
      %1654 = vmatmul.mubr.f32.gmra.mxu0 %v1473
      %v1655 = vpop.f32.mrf.mxu0
      %v1656 = vadd.f32 0.0, %v1655
      %v1657 = vpop.f32.mrf.mxu0
      %1658 = vmatprep.mubr.f32.mxu0 0.0
      %1659 = vmatmul.mubr.f32.gmra.mxu0 %v1476
      %v1660 = vpop.f32.mrf.mxu0
      %v1661 = vadd.f32 0.0, %v1660
      %v1662 = vpop.f32.mrf.mxu0
      %1663 = vmatprep.mubr.f32.mxu0 0.0
      %1664 = vmatmul.mubr.f32.gmra.mxu0 %v1479
      %v1665 = vpop.f32.mrf.mxu0
      %v1666 = vadd.f32 0.0, %v1665
      %v1667 = vpop.f32.mrf.mxu0
      %1668 = vmatprep.mubr.f32.mxu0 0.0
      %1669 = vmatmul.mubr.f32.gmra.mxu0 %v1482
      %v1670 = vpop.f32.mrf.mxu0
      %v1671 = vadd.f32 0.0, %v1670
      %v1672 = vpop.f32.mrf.mxu0
      %1673 = vmatprep.mubr.f32.mxu0 0.0
      %1674 = vmatmul.mubr.f32.gmra.mxu0 %v1485
      %v1675 = vpop.f32.mrf.mxu0
      %v1676 = vadd.f32 0.0, %v1675
      %v1677 = vpop.f32.mrf.mxu0
      %1678 = vmatprep.mubr.f32.mxu0 0.0
      %1679 = vmatmul.mubr.f32.gmra.mxu0 %v1488
      %v1680 = vpop.f32.mrf.mxu0
      %v1681 = vadd.f32 0.0, %v1680
      %v1682 = vpop.f32.mrf.mxu0
      %1683 = vmatprep.mubr.f32.mxu0 0.0
      %1684 = vmatmul.mubr.f32.gmra.mxu0 %v1491
      %v1685 = vpop.f32.mrf.mxu0
      %v1686 = vadd.f32 0.0, %v1685
      %v1687 = vpop.f32.mrf.mxu0
      %1688 = vmatprep.mubr.f32.mxu0 0.0
      %1689 = vmatmul.mubr.f32.gmra.mxu0 %v1494
      %v1690 = vpop.f32.mrf.mxu0
      %v1691 = vadd.f32 0.0, %v1690
      %v1692 = vpop.f32.mrf.mxu0
      %1693 = vmatprep.mubr.f32.mxu0 0.0
      %1694 = vmatmul.mubr.f32.gmra.mxu0 %v1497
      %v1695 = vpop.f32.mrf.mxu0
      %v1696 = vadd.f32 0.0, %v1695
      %v1697 = vpop.f32.mrf.mxu0
      %1698 = vmatprep.mubr.f32.mxu0 0.0
      %1699 = vmatmul.mubr.f32.gmra.mxu0 %v1500
      %v1700 = vpop.f32.mrf.mxu0
      %v1701 = vadd.f32 0.0, %v1700
      %v1702 = vpop.f32.mrf.mxu0
      %1703 = vmatprep.mubr.f32.mxu0 0.0
      %1704 = vmatmul.mubr.f32.gmra.mxu0 %v1503
      %v1705 = vpop.f32.mrf.mxu0
      %v1706 = vadd.f32 0.0, %v1705
      %v1707 = vpop.f32.mrf.mxu0
      %1708 = vmatprep.mubr.f32.mxu0 0.0
      %1709 = vmatmul.mubr.f32.gmra.mxu0 %v1506
      %v1710 = vpop.f32.mrf.mxu0
      %v1711 = vadd.f32 0.0, %v1710
      %v1712 = vpop.f32.mrf.mxu0
      %1713 = vmatprep.mubr.f32.mxu0 0.0
      %1714 = vmatmul.mubr.f32.gmra.mxu0 %v1509
      %v1715 = vpop.f32.mrf.mxu0
      %v1716 = vadd.f32 0.0, %v1715
      %v1717 = vpop.f32.mrf.mxu0
      %1718 = vmatprep.mubr.f32.mxu0 0.0
      %1719 = vmatmul.mubr.f32.gmra.mxu0 %v1512
      %v1720 = vpop.f32.mrf.mxu0
      %v1721 = vadd.f32 0.0, %v1720
      %v1722 = vpop.f32.mrf.mxu0
      %1723 = vmatprep.mubr.f32.mxu0 0.0
      %1724 = vmatmul.mubr.f32.gmra.mxu0 %v1515
      %v1725 = vpop.f32.mrf.mxu0
      %v1726 = vadd.f32 0.0, %v1725
      %v1727 = vpop.f32.mrf.mxu0
      %1728 = vmatprep.mubr.f32.mxu0 0.0
      %1729 = vmatmul.mubr.f32.gmra.mxu0 %v1518
      %v1730 = vpop.f32.mrf.mxu0
      %v1731 = vadd.f32 0.0, %v1730
      %v1732 = vpop.f32.mrf.mxu0
      %1733 = vmatprep.mubr.f32.mxu0 0.0
      %1734 = vmatmul.mubr.f32.gmra.mxu0 %v1521
      %v1735 = vpop.f32.mrf.mxu0
      %v1736 = vadd.f32 0.0, %v1735
      %v1737 = vpop.f32.mrf.mxu0
      %1738 = vmatprep.mubr.f32.mxu0 0.0
      %1739 = vmatmul.mubr.f32.gmra.mxu0 %v1524
      %v1740 = vpop.f32.mrf.mxu0
      %v1741 = vadd.f32 0.0, %v1740
      %v1742 = vpop.f32.mrf.mxu0
      %1743 = vmatprep.mubr.f32.mxu0 0.0
      %1744 = vmatmul.mubr.f32.gmra.mxu0 %v1527
      %v1745 = vpop.f32.mrf.mxu0
      %v1746 = vadd.f32 0.0, %v1745
      %v1747 = vpop.f32.mrf.mxu0
      %1748 = vmatprep.mubr.f32.mxu0 0.0
      %1749 = vmatmul.mubr.f32.gmra.mxu0 %v1530
      %v1750 = vpop.f32.mrf.mxu0
      %v1751 = vadd.f32 0.0, %v1750
      %v1752 = vpop.f32.mrf.mxu0
      %1753 = vmatprep.mubr.f32.mxu0 0.0
      %1754 = vmatmul.mubr.f32.gmra.mxu0 %v1533
      %v1755 = vpop.f32.mrf.mxu0
      %v1756 = vadd.f32 0.0, %v1755
      %v1757 = vpop.f32.mrf.mxu0
      %1758 = vmatprep.mubr.f32.mxu0 0.0
      %1759 = vmatmul.mubr.f32.gmra.mxu0 %v1536
      %v1760 = vpop.f32.mrf.mxu0
      %v1761 = vadd.f32 0.0, %v1760
      %v1762 = vpop.f32.mrf.mxu0
      %1763 = vmatprep.mubr.f32.mxu0 0.0
      %1764 = vmatmul.mubr.f32.gmra.mxu0 %v1539
      %v1765 = vpop.f32.mrf.mxu0
      %v1766 = vadd.f32 0.0, %v1765
      %v1767 = vpop.f32.mrf.mxu0
      %1768 = vmatprep.mubr.f32.mxu0 0.0
      %1769 = vmatmul.mubr.f32.gmra.mxu0 %v1542
      %v1770 = vpop.f32.mrf.mxu0
      %v1771 = vadd.f32 0.0, %v1770
      %v1772 = vpop.f32.mrf.mxu0
      %1773 = vmatprep.mubr.f32.mxu0 0.0
      %1774 = vmatmul.mubr.f32.gmra.mxu0 %v1545
      %v1775 = vpop.f32.mrf.mxu0
      %v1776 = vadd.f32 0.0, %v1775
      %v1777 = vpop.f32.mrf.mxu0
      %1778 = vmatprep.mubr.f32.mxu0 0.0
      %1779 = vmatmul.mubr.f32.gmra.mxu0 %v1548
      %v1780 = vpop.f32.mrf.mxu0
      %v1781 = vadd.f32 0.0, %v1780
      %v1782 = vpop.f32.mrf.mxu0
      %1783 = vmatprep.mubr.f32.mxu0 0.0
      %1784 = vmatmul.mubr.f32.gmra.mxu0 %v1551
      %v1785 = vpop.f32.mrf.mxu0
      %v1786 = vadd.f32 0.0, %v1785
      %v1787 = vpop.f32.mrf.mxu0
      %1788 = vmatprep.mubr.f32.mxu0 0.0
      %1789 = vmatmul.mubr.f32.gmra.mxu0 %v1554
      %v1790 = vpop.f32.mrf.mxu0
      %v1791 = vadd.f32 0.0, %v1790
      %v1792 = vpop.f32.mrf.mxu0
      %1793 = vmatprep.mubr.f32.mxu0 0.0
      %1794 = vmatmul.mubr.f32.gmra.mxu0 %v1557
      %v1795 = vpop.f32.mrf.mxu0
      %v1796 = vadd.f32 0.0, %v1795
      %v1797 = vpop.f32.mrf.mxu0
      %1798 = vmatprep.mubr.f32.mxu0 0.0
      %1799 = vmatmul.mubr.f32.gmra.mxu0 %v1560
      %v1800 = vpop.f32.mrf.mxu0
      %v1801 = vadd.f32 0.0, %v1800
      %v1802 = vpop.f32.mrf.mxu0
      %1803 = vmatprep.mubr.f32.mxu0 0.0
      %1804 = vmatmul.mubr.f32.gmra.mxu0 %v1563
      %v1805 = vpop.f32.mrf.mxu0
      %v1806 = vadd.f32 0.0, %v1805
      %v1807 = vpop.f32.mrf.mxu0
      %1808 = vmatprep.mubr.f32.mxu0 0.0
      %1809 = vmatmul.mubr.f32.gmra.mxu0 %v1566
      %v1810 = vpop.f32.mrf.mxu0
      %v1811 = vadd.f32 0.0, %v1810
      %v1812 = vpop.f32.mrf.mxu0
      %1813 = vmatprep.mubr.f32.mxu0 0.0
      %1814 = vmatmul.mubr.f32.gmra.mxu0 %v1569
      %v1815 = vpop.f32.mrf.mxu0
      %v1816 = vadd.f32 0.0, %v1815
      %v1817 = vpop.f32.mrf.mxu0
      %1818 = vdwg.mxu0
      %v1819 = vadd.f32 %v1390, %v1641
      %v1820 = vadd.f32 %v1391, %v1646
      %v1821 = vadd.f32 %v1392, %v1651
      %v1822 = vadd.f32 %v1393, %v1656
      %v1823 = vadd.f32 %v1394, %v1661
      %v1824 = vadd.f32 %v1395, %v1666
      %v1825 = vadd.f32 %v1396, %v1671
      %v1826 = vadd.f32 %v1397, %v1676
      %v1827 = vadd.f32 %v1398, %v1681
      %v1828 = vadd.f32 %v1399, %v1686
      %v1829 = vadd.f32 %v1400, %v1691
      %v1830 = vadd.f32 %v1401, %v1696
      %v1831 = vadd.f32 %v1402, %v1701
      %v1832 = vadd.f32 %v1403, %v1706
      %v1833 = vadd.f32 %v1404, %v1711
      %v1834 = vadd.f32 %v1405, %v1716
      %v1835 = vadd.f32 %v1406, %v1721
      %v1836 = vadd.f32 %v1407, %v1726
      %v1837 = vadd.f32 %v1408, %v1731
      %v1838 = vadd.f32 %v1409, %v1736
      %v1839 = vadd.f32 %v1410, %v1741
      %v1840 = vadd.f32 %v1411, %v1746
      %v1841 = vadd.f32 %v1412, %v1751
      %v1842 = vadd.f32 %v1413, %v1756
      %v1843 = vadd.f32 %v1414, %v1761
      %v1844 = vadd.f32 %v1415, %v1766
      %v1845 = vadd.f32 %v1416, %v1771
      %v1846 = vadd.f32 %v1417, %v1776
      %v1847 = vadd.f32 %v1418, %v1781
      %v1848 = vadd.f32 %v1419, %v1786
      %v1849 = vadd.f32 %v1420, %v1791
      %v1850 = vadd.f32 %v1421, %v1796
      %v1851 = vadd.f32 %v1422, %v1801
      %v1852 = vadd.f32 %v1423, %v1806
      %v1853 = vadd.f32 %v1424, %v1811
      %v1854 = vadd.f32 %v1425, %v1816
      %v1855 = vld [vmem:[%s199 + $0x13] sm:$0xff]
      %v1856 = vld [vmem:[%s199 + $0x1b] sm:$0xff]
      %v1857 = vld [vmem:[%s199 + $0x23] sm:$0xff]
      %v1858 = vld [vmem:[%s199 + $0x2b] sm:$0xff]
      %v1859 = vld [vmem:[%s199 + $0x33] sm:$0xff]
      %v1860 = vld [vmem:[%s199 + $0x3b] sm:$0xff]
      %v1861 = vld [vmem:[%s199 + $0x43] sm:$0xff]
      %v1862 = vld [vmem:[%s199 + $0x4b] sm:$0xff]
      %v1863 = vld [vmem:[%s199 + $0x53] sm:$0xff]
      %v1864 = vld [vmem:[%s199 + $0x5b] sm:$0xff]
      %v1865 = vld [vmem:[%s199 + $0x63] sm:$0xff]
      %v1866 = vld [vmem:[%s199 + $0x6b] sm:$0xff]
      %v1867 = vld [vmem:[%s199 + $0x73] sm:$0xff]
      %v1868 = vld [vmem:[%s199 + $0x7b] sm:$0xff]
      %v1869 = vld [vmem:[%s199 + $0x83] sm:$0xff]
      %v1870 = vld [vmem:[%s199 + $0x8b] sm:$0xff]
      %v1871 = vld [vmem:[%s199 + $0x93] sm:$0xff]
      %v1872 = vld [vmem:[%s199 + $0x9b] sm:$0xff]
      %v1873 = vld [vmem:[%s199 + $0xa3] sm:$0xff]
      %v1874 = vld [vmem:[%s199 + $0xab] sm:$0xff]
      %v1875 = vld [vmem:[%s199 + $0xb3] sm:$0xff]
      %v1876 = vld [vmem:[%s199 + $0xbb] sm:$0xff]
      %v1877 = vld [vmem:[%s199 + $0xc3] sm:$0xff]
      %v1878 = vld [vmem:[%s199 + $0xcb] sm:$0xff]
      %v1879 = vld [vmem:[%s199 + $0xd3] sm:$0xff]
      %v1880 = vld [vmem:[%s199 + $0xdb] sm:$0xff]
      %v1881 = vld [vmem:[%s199 + $0xe3] sm:$0xff]
      %v1882 = vld [vmem:[%s199 + $0xeb] sm:$0xff]
      %v1883 = vld [vmem:[%s199 + $0xf3] sm:$0xff]
      %v1884 = vld [vmem:[%s199 + $0xfb] sm:$0xff]
      %v1885 = vld [vmem:[%s199 + $0x103] sm:$0xff]
      %v1886 = vld [vmem:[%s199 + $0x10b] sm:$0xff]
      %v1887 = vld [vmem:[%s199 + $0x113] sm:$0xff]
      %v1888 = vld [vmem:[%s199 + $0x11b] sm:$0xff]
      %v1889 = vld [vmem:[%s199 + $0x123] sm:$0xff]
      %v1890 = vld [vmem:[%s199 + $0x12b] sm:$0xff]
      %v1891 = vld [vmem:[%s1 + $0x10] sm:$0xf]
      %v1893 = vsel %vm283, %v1855, 0
      %v1896 = vsel %vm283, %v1856, 0
      %v1899 = vsel %vm283, %v1857, 0
      %v1902 = vsel %vm283, %v1858, 0
      %v1905 = vsel %vm283, %v1859, 0
      %v1908 = vsel %vm283, %v1860, 0
      %v1911 = vsel %vm283, %v1861, 0
      %v1914 = vsel %vm283, %v1862, 0
      %v1917 = vsel %vm283, %v1863, 0
      %v1920 = vsel %vm283, %v1864, 0
      %v1923 = vsel %vm283, %v1865, 0
      %v1926 = vsel %vm283, %v1866, 0
      %v1929 = vsel %vm283, %v1867, 0
      %v1932 = vsel %vm283, %v1868, 0
      %v1935 = vsel %vm283, %v1869, 0
      %v1938 = vsel %vm283, %v1870, 0
      %v1941 = vsel %vm283, %v1871, 0
      %v1944 = vsel %vm283, %v1872, 0
      %v1947 = vsel %vm283, %v1873, 0
      %v1950 = vsel %vm283, %v1874, 0
      %v1953 = vsel %vm283, %v1875, 0
      %v1956 = vsel %vm283, %v1876, 0
      %v1959 = vsel %vm283, %v1877, 0
      %v1962 = vsel %vm283, %v1878, 0
      %v1965 = vsel %vm283, %v1879, 0
      %v1968 = vsel %vm283, %v1880, 0
      %v1971 = vsel %vm283, %v1881, 0
      %v1974 = vsel %vm283, %v1882, 0
      %v1977 = vsel %vm283, %v1883, 0
      %v1980 = vsel %vm283, %v1884, 0
      %v1983 = vsel %vm283, %v1885, 0
      %v1986 = vsel %vm283, %v1886, 0
      %v1989 = vsel %vm283, %v1887, 0
      %v1992 = vsel %vm283, %v1888, 0
      %v1995 = vsel %vm283, %v1889, 0
      %v1998 = vsel %vm283, %v1890, 0
      %v2001 = vsel %vm392, %v1891, 0
      %2003 = vmatprep.subr.mxu0 0.0
      %2004 = vmatpush1.msra.mxu0 0.0
      %2005 = vmatprep.subr.mxu0 0.0
      %2006 = vmatpush1.msra.mxu0 0.0
      %2007 = vmatprep.subr.mxu0 0.0
      %2008 = vmatpush1.msra.mxu0 0.0
      %2009 = vmatprep.subr.mxu0 0.0
      %2010 = vmatpush1.msra.mxu0 0.0
      %2011 = vmatprep.subr.mxu0 0.0
      %2012 = vmatpush1.msra.mxu0 0.0
      %2013 = vmatprep.subr.mxu0 0.0
      %2014 = vmatpush1.msra.mxu0 0.0
      %2015 = vmatprep.subr.mxu0 0.0
      %2016 = vmatpush1.msra.mxu0 0.0
      %2017 = vmatprep.subr.mxu0 0.0
      %2018 = vmatpush1.msra.mxu0 0.0
      %2019 = vmatprep.subr.mxu0 0.0
      %2020 = vmatpush1.msra.mxu0 0.0
      %2021 = vmatprep.subr.mxu0 0.0
      %2022 = vmatpush1.msra.mxu0 0.0
      %2023 = vmatprep.subr.mxu0 0.0
      %2024 = vmatpush1.msra.mxu0 0.0
      %2025 = vmatprep.subr.mxu0 0.0
      %2026 = vmatpush1.msra.mxu0 0.0
      %2027 = vmatprep.subr.mxu0 0.0
      %2028 = vmatpush1.msra.mxu0 0.0
      %2029 = vmatprep.subr.mxu0 0.0
      %2030 = vmatpush1.msra.mxu0 0.0
      %2031 = vmatprep.subr.mxu0 0.0
      %2032 = vmatpush1.msra.mxu0 0.0
      %2033 = vmatprep.subr.mxu0 0.0
      %2034 = vmatpush1.msra.mxu0 %v2001
      %2035 = vmatprep.subr.mxu0 0.0
      %2036 = vmatpush2.msra.mxu0 0.0
      %2037 = vmatprep.subr.mxu0 0.0
      %2038 = vmatpush2.msra.mxu0 0.0
      %2039 = vmatprep.subr.mxu0 0.0
      %2040 = vmatpush2.msra.mxu0 0.0
      %2041 = vmatprep.subr.mxu0 0.0
      %2042 = vmatpush2.msra.mxu0 0.0
      %2043 = vmatprep.subr.mxu0 0.0
      %2044 = vmatpush2.msra.mxu0 0.0
      %2045 = vmatprep.subr.mxu0 0.0
      %2046 = vmatpush2.msra.mxu0 0.0
      %2047 = vmatprep.subr.mxu0 0.0
      %2048 = vmatpush2.msra.mxu0 0.0
      %2049 = vmatprep.subr.mxu0 0.0
      %2050 = vmatpush2.msra.mxu0 0.0
      %2051 = vmatprep.subr.mxu0 0.0
      %2052 = vmatpush2.msra.mxu0 0.0
      %2053 = vmatprep.subr.mxu0 0.0
      %2054 = vmatpush2.msra.mxu0 0.0
      %2055 = vmatprep.subr.mxu0 0.0
      %2056 = vmatpush2.msra.mxu0 0.0
      %2057 = vmatprep.subr.mxu0 0.0
      %2058 = vmatpush2.msra.mxu0 0.0
      %2059 = vmatprep.subr.mxu0 0.0
      %2060 = vmatpush2.msra.mxu0 0.0
      %2061 = vmatprep.subr.mxu0 0.0
      %2062 = vmatpush2.msra.mxu0 0.0
      %2063 = vmatprep.subr.mxu0 0.0
      %2064 = vmatpush2.msra.mxu0 0.0
      %2065 = vmatprep.subr.mxu0 0.0
      %2066 = vmatpush2.msra.mxu0 0.0
      %2067 = vmatprep.mubr.f32.mxu0 0.0
      %2068 = vmatmul.mubr.f32.gmra.mxu0 %v1893
      %v2069 = vpop.f32.mrf.mxu0
      %v2070 = vadd.f32 0.0, %v2069
      %v2071 = vpop.f32.mrf.mxu0
      %2072 = vmatprep.mubr.f32.mxu0 0.0
      %2073 = vmatmul.mubr.f32.gmra.mxu0 %v1896
      %v2074 = vpop.f32.mrf.mxu0
      %v2075 = vadd.f32 0.0, %v2074
      %v2076 = vpop.f32.mrf.mxu0
      %2077 = vmatprep.mubr.f32.mxu0 0.0
      %2078 = vmatmul.mubr.f32.gmra.mxu0 %v1899
      %v2079 = vpop.f32.mrf.mxu0
      %v2080 = vadd.f32 0.0, %v2079
      %v2081 = vpop.f32.mrf.mxu0
      %2082 = vmatprep.mubr.f32.mxu0 0.0
      %2083 = vmatmul.mubr.f32.gmra.mxu0 %v1902
      %v2084 = vpop.f32.mrf.mxu0
      %v2085 = vadd.f32 0.0, %v2084
      %v2086 = vpop.f32.mrf.mxu0
      %2087 = vmatprep.mubr.f32.mxu0 0.0
      %2088 = vmatmul.mubr.f32.gmra.mxu0 %v1905
      %v2089 = vpop.f32.mrf.mxu0
      %v2090 = vadd.f32 0.0, %v2089
      %v2091 = vpop.f32.mrf.mxu0
      %2092 = vmatprep.mubr.f32.mxu0 0.0
      %2093 = vmatmul.mubr.f32.gmra.mxu0 %v1908
      %v2094 = vpop.f32.mrf.mxu0
      %v2095 = vadd.f32 0.0, %v2094
      %v2096 = vpop.f32.mrf.mxu0
      %2097 = vmatprep.mubr.f32.mxu0 0.0
      %2098 = vmatmul.mubr.f32.gmra.mxu0 %v1911
      %v2099 = vpop.f32.mrf.mxu0
      %v2100 = vadd.f32 0.0, %v2099
      %v2101 = vpop.f32.mrf.mxu0
      %2102 = vmatprep.mubr.f32.mxu0 0.0
      %2103 = vmatmul.mubr.f32.gmra.mxu0 %v1914
      %v2104 = vpop.f32.mrf.mxu0
      %v2105 = vadd.f32 0.0, %v2104
      %v2106 = vpop.f32.mrf.mxu0
      %2107 = vmatprep.mubr.f32.mxu0 0.0
      %2108 = vmatmul.mubr.f32.gmra.mxu0 %v1917
      %v2109 = vpop.f32.mrf.mxu0
      %v2110 = vadd.f32 0.0, %v2109
      %v2111 = vpop.f32.mrf.mxu0
      %2112 = vmatprep.mubr.f32.mxu0 0.0
      %2113 = vmatmul.mubr.f32.gmra.mxu0 %v1920
      %v2114 = vpop.f32.mrf.mxu0
      %v2115 = vadd.f32 0.0, %v2114
      %v2116 = vpop.f32.mrf.mxu0
      %2117 = vmatprep.mubr.f32.mxu0 0.0
      %2118 = vmatmul.mubr.f32.gmra.mxu0 %v1923
      %v2119 = vpop.f32.mrf.mxu0
      %v2120 = vadd.f32 0.0, %v2119
      %v2121 = vpop.f32.mrf.mxu0
      %2122 = vmatprep.mubr.f32.mxu0 0.0
      %2123 = vmatmul.mubr.f32.gmra.mxu0 %v1926
      %v2124 = vpop.f32.mrf.mxu0
      %v2125 = vadd.f32 0.0, %v2124
      %v2126 = vpop.f32.mrf.mxu0
      %2127 = vmatprep.mubr.f32.mxu0 0.0
      %2128 = vmatmul.mubr.f32.gmra.mxu0 %v1929
      %v2129 = vpop.f32.mrf.mxu0
      %v2130 = vadd.f32 0.0, %v2129
      %v2131 = vpop.f32.mrf.mxu0
      %2132 = vmatprep.mubr.f32.mxu0 0.0
      %2133 = vmatmul.mubr.f32.gmra.mxu0 %v1932
      %v2134 = vpop.f32.mrf.mxu0
      %v2135 = vadd.f32 0.0, %v2134
      %v2136 = vpop.f32.mrf.mxu0
      %2137 = vmatprep.mubr.f32.mxu0 0.0
      %2138 = vmatmul.mubr.f32.gmra.mxu0 %v1935
      %v2139 = vpop.f32.mrf.mxu0
      %v2140 = vadd.f32 0.0, %v2139
      %v2141 = vpop.f32.mrf.mxu0
      %2142 = vmatprep.mubr.f32.mxu0 0.0
      %2143 = vmatmul.mubr.f32.gmra.mxu0 %v1938
      %v2144 = vpop.f32.mrf.mxu0
      %v2145 = vadd.f32 0.0, %v2144
      %v2146 = vpop.f32.mrf.mxu0
      %2147 = vmatprep.mubr.f32.mxu0 0.0
      %2148 = vmatmul.mubr.f32.gmra.mxu0 %v1941
      %v2149 = vpop.f32.mrf.mxu0
      %v2150 = vadd.f32 0.0, %v2149
      %v2151 = vpop.f32.mrf.mxu0
      %2152 = vmatprep.mubr.f32.mxu0 0.0
      %2153 = vmatmul.mubr.f32.gmra.mxu0 %v1944
      %v2154 = vpop.f32.mrf.mxu0
      %v2155 = vadd.f32 0.0, %v2154
      %v2156 = vpop.f32.mrf.mxu0
      %2157 = vmatprep.mubr.f32.mxu0 0.0
      %2158 = vmatmul.mubr.f32.gmra.mxu0 %v1947
      %v2159 = vpop.f32.mrf.mxu0
      %v2160 = vadd.f32 0.0, %v2159
      %v2161 = vpop.f32.mrf.mxu0
      %2162 = vmatprep.mubr.f32.mxu0 0.0
      %2163 = vmatmul.mubr.f32.gmra.mxu0 %v1950
      %v2164 = vpop.f32.mrf.mxu0
      %v2165 = vadd.f32 0.0, %v2164
      %v2166 = vpop.f32.mrf.mxu0
      %2167 = vmatprep.mubr.f32.mxu0 0.0
      %2168 = vmatmul.mubr.f32.gmra.mxu0 %v1953
      %v2169 = vpop.f32.mrf.mxu0
      %v2170 = vadd.f32 0.0, %v2169
      %v2171 = vpop.f32.mrf.mxu0
      %2172 = vmatprep.mubr.f32.mxu0 0.0
      %2173 = vmatmul.mubr.f32.gmra.mxu0 %v1956
      %v2174 = vpop.f32.mrf.mxu0
      %v2175 = vadd.f32 0.0, %v2174
      %v2176 = vpop.f32.mrf.mxu0
      %2177 = vmatprep.mubr.f32.mxu0 0.0
      %2178 = vmatmul.mubr.f32.gmra.mxu0 %v1959
      %v2179 = vpop.f32.mrf.mxu0
      %v2180 = vadd.f32 0.0, %v2179
      %v2181 = vpop.f32.mrf.mxu0
      %2182 = vmatprep.mubr.f32.mxu0 0.0
      %2183 = vmatmul.mubr.f32.gmra.mxu0 %v1962
      %v2184 = vpop.f32.mrf.mxu0
      %v2185 = vadd.f32 0.0, %v2184
      %v2186 = vpop.f32.mrf.mxu0
      %2187 = vmatprep.mubr.f32.mxu0 0.0
      %2188 = vmatmul.mubr.f32.gmra.mxu0 %v1965
      %v2189 = vpop.f32.mrf.mxu0
      %v2190 = vadd.f32 0.0, %v2189
      %v2191 = vpop.f32.mrf.mxu0
      %2192 = vmatprep.mubr.f32.mxu0 0.0
      %2193 = vmatmul.mubr.f32.gmra.mxu0 %v1968
      %v2194 = vpop.f32.mrf.mxu0
      %v2195 = vadd.f32 0.0, %v2194
      %v2196 = vpop.f32.mrf.mxu0
      %2197 = vmatprep.mubr.f32.mxu0 0.0
      %2198 = vmatmul.mubr.f32.gmra.mxu0 %v1971
      %v2199 = vpop.f32.mrf.mxu0
      %v2200 = vadd.f32 0.0, %v2199
      %v2201 = vpop.f32.mrf.mxu0
      %2202 = vmatprep.mubr.f32.mxu0 0.0
      %2203 = vmatmul.mubr.f32.gmra.mxu0 %v1974
      %v2204 = vpop.f32.mrf.mxu0
      %v2205 = vadd.f32 0.0, %v2204
      %v2206 = vpop.f32.mrf.mxu0
      %2207 = vmatprep.mubr.f32.mxu0 0.0
      %2208 = vmatmul.mubr.f32.gmra.mxu0 %v1977
      %v2209 = vpop.f32.mrf.mxu0
      %v2210 = vadd.f32 0.0, %v2209
      %v2211 = vpop.f32.mrf.mxu0
      %2212 = vmatprep.mubr.f32.mxu0 0.0
      %2213 = vmatmul.mubr.f32.gmra.mxu0 %v1980
      %v2214 = vpop.f32.mrf.mxu0
      %v2215 = vadd.f32 0.0, %v2214
      %v2216 = vpop.f32.mrf.mxu0
      %2217 = vmatprep.mubr.f32.mxu0 0.0
      %2218 = vmatmul.mubr.f32.gmra.mxu0 %v1983
      %v2219 = vpop.f32.mrf.mxu0
      %v2220 = vadd.f32 0.0, %v2219
      %v2221 = vpop.f32.mrf.mxu0
      %2222 = vmatprep.mubr.f32.mxu0 0.0
      %2223 = vmatmul.mubr.f32.gmra.mxu0 %v1986
      %v2224 = vpop.f32.mrf.mxu0
      %v2225 = vadd.f32 0.0, %v2224
      %v2226 = vpop.f32.mrf.mxu0
      %2227 = vmatprep.mubr.f32.mxu0 0.0
      %2228 = vmatmul.mubr.f32.gmra.mxu0 %v1989
      %v2229 = vpop.f32.mrf.mxu0
      %v2230 = vadd.f32 0.0, %v2229
      %v2231 = vpop.f32.mrf.mxu0
      %2232 = vmatprep.mubr.f32.mxu0 0.0
      %2233 = vmatmul.mubr.f32.gmra.mxu0 %v1992
      %v2234 = vpop.f32.mrf.mxu0
      %v2235 = vadd.f32 0.0, %v2234
      %v2236 = vpop.f32.mrf.mxu0
      %2237 = vmatprep.mubr.f32.mxu0 0.0
      %2238 = vmatmul.mubr.f32.gmra.mxu0 %v1995
      %v2239 = vpop.f32.mrf.mxu0
      %v2240 = vadd.f32 0.0, %v2239
      %v2241 = vpop.f32.mrf.mxu0
      %2242 = vmatprep.mubr.f32.mxu0 0.0
      %2243 = vmatmul.mubr.f32.gmra.mxu0 %v1998
      %v2244 = vpop.f32.mrf.mxu0
      %v2245 = vadd.f32 0.0, %v2244
      %v2246 = vpop.f32.mrf.mxu0
      %2247 = vdwg.mxu0
      %v2248 = vadd.f32 %v1819, %v2070
      %v2249 = vadd.f32 %v1820, %v2075
      %v2250 = vadd.f32 %v1821, %v2080
      %v2251 = vadd.f32 %v1822, %v2085
      %v2252 = vadd.f32 %v1823, %v2090
      %v2253 = vadd.f32 %v1824, %v2095
      %v2254 = vadd.f32 %v1825, %v2100
      %v2255 = vadd.f32 %v1826, %v2105
      %v2256 = vadd.f32 %v1827, %v2110
      %v2257 = vadd.f32 %v1828, %v2115
      %v2258 = vadd.f32 %v1829, %v2120
      %v2259 = vadd.f32 %v1830, %v2125
      %v2260 = vadd.f32 %v1831, %v2130
      %v2261 = vadd.f32 %v1832, %v2135
      %v2262 = vadd.f32 %v1833, %v2140
      %v2263 = vadd.f32 %v1834, %v2145
      %v2264 = vadd.f32 %v1835, %v2150
      %v2265 = vadd.f32 %v1836, %v2155
      %v2266 = vadd.f32 %v1837, %v2160
      %v2267 = vadd.f32 %v1838, %v2165
      %v2268 = vadd.f32 %v1839, %v2170
      %v2269 = vadd.f32 %v1840, %v2175
      %v2270 = vadd.f32 %v1841, %v2180
      %v2271 = vadd.f32 %v1842, %v2185
      %v2272 = vadd.f32 %v1843, %v2190
      %v2273 = vadd.f32 %v1844, %v2195
      %v2274 = vadd.f32 %v1845, %v2200
      %v2275 = vadd.f32 %v1846, %v2205
      %v2276 = vadd.f32 %v1847, %v2210
      %v2277 = vadd.f32 %v1848, %v2215
      %v2278 = vadd.f32 %v1849, %v2220
      %v2279 = vadd.f32 %v1850, %v2225
      %v2280 = vadd.f32 %v1851, %v2230
      %v2281 = vadd.f32 %v1852, %v2235
      %v2282 = vadd.f32 %v1853, %v2240
      %v2283 = vadd.f32 %v1854, %v2245
      %v2284 = vld [vmem:[%s199 + $0x14] sm:$0xff]
      %v2285 = vld [vmem:[%s199 + $0x1c] sm:$0xff]
      %v2286 = vld [vmem:[%s199 + $0x24] sm:$0xff]
      %v2287 = vld [vmem:[%s199 + $0x2c] sm:$0xff]
      %v2288 = vld [vmem:[%s199 + $0x34] sm:$0xff]
      %v2289 = vld [vmem:[%s199 + $0x3c] sm:$0xff]
      %v2290 = vld [vmem:[%s199 + $0x44] sm:$0xff]
      %v2291 = vld [vmem:[%s199 + $0x4c] sm:$0xff]
      %v2292 = vld [vmem:[%s199 + $0x54] sm:$0xff]
      %v2293 = vld [vmem:[%s199 + $0x5c] sm:$0xff]
      %v2294 = vld [vmem:[%s199 + $0x64] sm:$0xff]
      %v2295 = vld [vmem:[%s199 + $0x6c] sm:$0xff]
      %v2296 = vld [vmem:[%s199 + $0x74] sm:$0xff]
      %v2297 = vld [vmem:[%s199 + $0x7c] sm:$0xff]
      %v2298 = vld [vmem:[%s199 + $0x84] sm:$0xff]
      %v2299 = vld [vmem:[%s199 + $0x8c] sm:$0xff]
      %v2300 = vld [vmem:[%s199 + $0x94] sm:$0xff]
      %v2301 = vld [vmem:[%s199 + $0x9c] sm:$0xff]
      %v2302 = vld [vmem:[%s199 + $0xa4] sm:$0xff]
      %v2303 = vld [vmem:[%s199 + $0xac] sm:$0xff]
      %v2304 = vld [vmem:[%s199 + $0xb4] sm:$0xff]
      %v2305 = vld [vmem:[%s199 + $0xbc] sm:$0xff]
      %v2306 = vld [vmem:[%s199 + $0xc4] sm:$0xff]
      %v2307 = vld [vmem:[%s199 + $0xcc] sm:$0xff]
      %v2308 = vld [vmem:[%s199 + $0xd4] sm:$0xff]
      %v2309 = vld [vmem:[%s199 + $0xdc] sm:$0xff]
      %v2310 = vld [vmem:[%s199 + $0xe4] sm:$0xff]
      %v2311 = vld [vmem:[%s199 + $0xec] sm:$0xff]
      %v2312 = vld [vmem:[%s199 + $0xf4] sm:$0xff]
      %v2313 = vld [vmem:[%s199 + $0xfc] sm:$0xff]
      %v2314 = vld [vmem:[%s199 + $0x104] sm:$0xff]
      %v2315 = vld [vmem:[%s199 + $0x10c] sm:$0xff]
      %v2316 = vld [vmem:[%s199 + $0x114] sm:$0xff]
      %v2317 = vld [vmem:[%s199 + $0x11c] sm:$0xff]
      %v2318 = vld [vmem:[%s199 + $0x124] sm:$0xff]
      %v2319 = vld [vmem:[%s199 + $0x12c] sm:$0xff]
      %v2320 = vld [vmem:[%s1 + $0x14] sm:$0xf]
      %v2322 = vsel %vm283, %v2284, 0
      %v2325 = vsel %vm283, %v2285, 0
      %v2328 = vsel %vm283, %v2286, 0
      %v2331 = vsel %vm283, %v2287, 0
      %v2334 = vsel %vm283, %v2288, 0
      %v2337 = vsel %vm283, %v2289, 0
      %v2340 = vsel %vm283, %v2290, 0
      %v2343 = vsel %vm283, %v2291, 0
      %v2346 = vsel %vm283, %v2292, 0
      %v2349 = vsel %vm283, %v2293, 0
      %v2352 = vsel %vm283, %v2294, 0
      %v2355 = vsel %vm283, %v2295, 0
      %v2358 = vsel %vm283, %v2296, 0
      %v2361 = vsel %vm283, %v2297, 0
      %v2364 = vsel %vm283, %v2298, 0
      %v2367 = vsel %vm283, %v2299, 0
      %v2370 = vsel %vm283, %v2300, 0
      %v2373 = vsel %vm283, %v2301, 0
      %v2376 = vsel %vm283, %v2302, 0
      %v2379 = vsel %vm283, %v2303, 0
      %v2382 = vsel %vm283, %v2304, 0
      %v2385 = vsel %vm283, %v2305, 0
      %v2388 = vsel %vm283, %v2306, 0
      %v2391 = vsel %vm283, %v2307, 0
      %v2394 = vsel %vm283, %v2308, 0
      %v2397 = vsel %vm283, %v2309, 0
      %v2400 = vsel %vm283, %v2310, 0
      %v2403 = vsel %vm283, %v2311, 0
      %v2406 = vsel %vm283, %v2312, 0
      %v2409 = vsel %vm283, %v2313, 0
      %v2412 = vsel %vm283, %v2314, 0
      %v2415 = vsel %vm283, %v2315, 0
      %v2418 = vsel %vm283, %v2316, 0
      %v2421 = vsel %vm283, %v2317, 0
      %v2424 = vsel %vm283, %v2318, 0
      %v2427 = vsel %vm283, %v2319, 0
      %v2430 = vsel %vm392, %v2320, 0
      %2432 = vmatprep.subr.mxu0 0.0
      %2433 = vmatpush1.msra.mxu0 0.0
      %2434 = vmatprep.subr.mxu0 0.0
      %2435 = vmatpush1.msra.mxu0 0.0
      %2436 = vmatprep.subr.mxu0 0.0
      %2437 = vmatpush1.msra.mxu0 0.0
      %2438 = vmatprep.subr.mxu0 0.0
      %2439 = vmatpush1.msra.mxu0 0.0
      %2440 = vmatprep.subr.mxu0 0.0
      %2441 = vmatpush1.msra.mxu0 0.0
      %2442 = vmatprep.subr.mxu0 0.0
      %2443 = vmatpush1.msra.mxu0 0.0
      %2444 = vmatprep.subr.mxu0 0.0
      %2445 = vmatpush1.msra.mxu0 0.0
      %2446 = vmatprep.subr.mxu0 0.0
      %2447 = vmatpush1.msra.mxu0 0.0
      %2448 = vmatprep.subr.mxu0 0.0
      %2449 = vmatpush1.msra.mxu0 0.0
      %2450 = vmatprep.subr.mxu0 0.0
      %2451 = vmatpush1.msra.mxu0 0.0
      %2452 = vmatprep.subr.mxu0 0.0
      %2453 = vmatpush1.msra.mxu0 0.0
      %2454 = vmatprep.subr.mxu0 0.0
      %2455 = vmatpush1.msra.mxu0 0.0
      %2456 = vmatprep.subr.mxu0 0.0
      %2457 = vmatpush1.msra.mxu0 0.0
      %2458 = vmatprep.subr.mxu0 0.0
      %2459 = vmatpush1.msra.mxu0 0.0
      %2460 = vmatprep.subr.mxu0 0.0
      %2461 = vmatpush1.msra.mxu0 0.0
      %2462 = vmatprep.subr.mxu0 0.0
      %2463 = vmatpush1.msra.mxu0 %v2430
      %2464 = vmatprep.subr.mxu0 0.0
      %2465 = vmatpush2.msra.mxu0 0.0
      %2466 = vmatprep.subr.mxu0 0.0
      %2467 = vmatpush2.msra.mxu0 0.0
      %2468 = vmatprep.subr.mxu0 0.0
      %2469 = vmatpush2.msra.mxu0 0.0
      %2470 = vmatprep.subr.mxu0 0.0
      %2471 = vmatpush2.msra.mxu0 0.0
      %2472 = vmatprep.subr.mxu0 0.0
      %2473 = vmatpush2.msra.mxu0 0.0
      %2474 = vmatprep.subr.mxu0 0.0
      %2475 = vmatpush2.msra.mxu0 0.0
      %2476 = vmatprep.subr.mxu0 0.0
      %2477 = vmatpush2.msra.mxu0 0.0
      %2478 = vmatprep.subr.mxu0 0.0
      %2479 = vmatpush2.msra.mxu0 0.0
      %2480 = vmatprep.subr.mxu0 0.0
      %2481 = vmatpush2.msra.mxu0 0.0
      %2482 = vmatprep.subr.mxu0 0.0
      %2483 = vmatpush2.msra.mxu0 0.0
      %2484 = vmatprep.subr.mxu0 0.0
      %2485 = vmatpush2.msra.mxu0 0.0
      %2486 = vmatprep.subr.mxu0 0.0
      %2487 = vmatpush2.msra.mxu0 0.0
      %2488 = vmatprep.subr.mxu0 0.0
      %2489 = vmatpush2.msra.mxu0 0.0
      %2490 = vmatprep.subr.mxu0 0.0
      %2491 = vmatpush2.msra.mxu0 0.0
      %2492 = vmatprep.subr.mxu0 0.0
      %2493 = vmatpush2.msra.mxu0 0.0
      %2494 = vmatprep.subr.mxu0 0.0
      %2495 = vmatpush2.msra.mxu0 0.0
      %2496 = vmatprep.mubr.f32.mxu0 0.0
      %2497 = vmatmul.mubr.f32.gmra.mxu0 %v2322
      %v2498 = vpop.f32.mrf.mxu0
      %v2499 = vadd.f32 0.0, %v2498
      %v2500 = vpop.f32.mrf.mxu0
      %2501 = vmatprep.mubr.f32.mxu0 0.0
      %2502 = vmatmul.mubr.f32.gmra.mxu0 %v2325
      %v2503 = vpop.f32.mrf.mxu0
      %v2504 = vadd.f32 0.0, %v2503
      %v2505 = vpop.f32.mrf.mxu0
      %2506 = vmatprep.mubr.f32.mxu0 0.0
      %2507 = vmatmul.mubr.f32.gmra.mxu0 %v2328
      %v2508 = vpop.f32.mrf.mxu0
      %v2509 = vadd.f32 0.0, %v2508
      %v2510 = vpop.f32.mrf.mxu0
      %2511 = vmatprep.mubr.f32.mxu0 0.0
      %2512 = vmatmul.mubr.f32.gmra.mxu0 %v2331
      %v2513 = vpop.f32.mrf.mxu0
      %v2514 = vadd.f32 0.0, %v2513
      %v2515 = vpop.f32.mrf.mxu0
      %2516 = vmatprep.mubr.f32.mxu0 0.0
      %2517 = vmatmul.mubr.f32.gmra.mxu0 %v2334
      %v2518 = vpop.f32.mrf.mxu0
      %v2519 = vadd.f32 0.0, %v2518
      %v2520 = vpop.f32.mrf.mxu0
      %2521 = vmatprep.mubr.f32.mxu0 0.0
      %2522 = vmatmul.mubr.f32.gmra.mxu0 %v2337
      %v2523 = vpop.f32.mrf.mxu0
      %v2524 = vadd.f32 0.0, %v2523
      %v2525 = vpop.f32.mrf.mxu0
      %2526 = vmatprep.mubr.f32.mxu0 0.0
      %2527 = vmatmul.mubr.f32.gmra.mxu0 %v2340
      %v2528 = vpop.f32.mrf.mxu0
      %v2529 = vadd.f32 0.0, %v2528
      %v2530 = vpop.f32.mrf.mxu0
      %2531 = vmatprep.mubr.f32.mxu0 0.0
      %2532 = vmatmul.mubr.f32.gmra.mxu0 %v2343
      %v2533 = vpop.f32.mrf.mxu0
      %v2534 = vadd.f32 0.0, %v2533
      %v2535 = vpop.f32.mrf.mxu0
      %2536 = vmatprep.mubr.f32.mxu0 0.0
      %2537 = vmatmul.mubr.f32.gmra.mxu0 %v2346
      %v2538 = vpop.f32.mrf.mxu0
      %v2539 = vadd.f32 0.0, %v2538
      %v2540 = vpop.f32.mrf.mxu0
      %2541 = vmatprep.mubr.f32.mxu0 0.0
      %2542 = vmatmul.mubr.f32.gmra.mxu0 %v2349
      %v2543 = vpop.f32.mrf.mxu0
      %v2544 = vadd.f32 0.0, %v2543
      %v2545 = vpop.f32.mrf.mxu0
      %2546 = vmatprep.mubr.f32.mxu0 0.0
      %2547 = vmatmul.mubr.f32.gmra.mxu0 %v2352
      %v2548 = vpop.f32.mrf.mxu0
      %v2549 = vadd.f32 0.0, %v2548
      %v2550 = vpop.f32.mrf.mxu0
      %2551 = vmatprep.mubr.f32.mxu0 0.0
      %2552 = vmatmul.mubr.f32.gmra.mxu0 %v2355
      %v2553 = vpop.f32.mrf.mxu0
      %v2554 = vadd.f32 0.0, %v2553
      %v2555 = vpop.f32.mrf.mxu0
      %2556 = vmatprep.mubr.f32.mxu0 0.0
      %2557 = vmatmul.mubr.f32.gmra.mxu0 %v2358
      %v2558 = vpop.f32.mrf.mxu0
      %v2559 = vadd.f32 0.0, %v2558
      %v2560 = vpop.f32.mrf.mxu0
      %2561 = vmatprep.mubr.f32.mxu0 0.0
      %2562 = vmatmul.mubr.f32.gmra.mxu0 %v2361
      %v2563 = vpop.f32.mrf.mxu0
      %v2564 = vadd.f32 0.0, %v2563
      %v2565 = vpop.f32.mrf.mxu0
      %2566 = vmatprep.mubr.f32.mxu0 0.0
      %2567 = vmatmul.mubr.f32.gmra.mxu0 %v2364
      %v2568 = vpop.f32.mrf.mxu0
      %v2569 = vadd.f32 0.0, %v2568
      %v2570 = vpop.f32.mrf.mxu0
      %2571 = vmatprep.mubr.f32.mxu0 0.0
      %2572 = vmatmul.mubr.f32.gmra.mxu0 %v2367
      %v2573 = vpop.f32.mrf.mxu0
      %v2574 = vadd.f32 0.0, %v2573
      %v2575 = vpop.f32.mrf.mxu0
      %2576 = vmatprep.mubr.f32.mxu0 0.0
      %2577 = vmatmul.mubr.f32.gmra.mxu0 %v2370
      %v2578 = vpop.f32.mrf.mxu0
      %v2579 = vadd.f32 0.0, %v2578
      %v2580 = vpop.f32.mrf.mxu0
      %2581 = vmatprep.mubr.f32.mxu0 0.0
      %2582 = vmatmul.mubr.f32.gmra.mxu0 %v2373
      %v2583 = vpop.f32.mrf.mxu0
      %v2584 = vadd.f32 0.0, %v2583
      %v2585 = vpop.f32.mrf.mxu0
      %2586 = vmatprep.mubr.f32.mxu0 0.0
      %2587 = vmatmul.mubr.f32.gmra.mxu0 %v2376
      %v2588 = vpop.f32.mrf.mxu0
      %v2589 = vadd.f32 0.0, %v2588
      %v2590 = vpop.f32.mrf.mxu0
      %2591 = vmatprep.mubr.f32.mxu0 0.0
      %2592 = vmatmul.mubr.f32.gmra.mxu0 %v2379
      %v2593 = vpop.f32.mrf.mxu0
      %v2594 = vadd.f32 0.0, %v2593
      %v2595 = vpop.f32.mrf.mxu0
      %2596 = vmatprep.mubr.f32.mxu0 0.0
      %2597 = vmatmul.mubr.f32.gmra.mxu0 %v2382
      %v2598 = vpop.f32.mrf.mxu0
      %v2599 = vadd.f32 0.0, %v2598
      %v2600 = vpop.f32.mrf.mxu0
      %2601 = vmatprep.mubr.f32.mxu0 0.0
      %2602 = vmatmul.mubr.f32.gmra.mxu0 %v2385
      %v2603 = vpop.f32.mrf.mxu0
      %v2604 = vadd.f32 0.0, %v2603
      %v2605 = vpop.f32.mrf.mxu0
      %2606 = vmatprep.mubr.f32.mxu0 0.0
      %2607 = vmatmul.mubr.f32.gmra.mxu0 %v2388
      %v2608 = vpop.f32.mrf.mxu0
      %v2609 = vadd.f32 0.0, %v2608
      %v2610 = vpop.f32.mrf.mxu0
      %2611 = vmatprep.mubr.f32.mxu0 0.0
      %2612 = vmatmul.mubr.f32.gmra.mxu0 %v2391
      %v2613 = vpop.f32.mrf.mxu0
      %v2614 = vadd.f32 0.0, %v2613
      %v2615 = vpop.f32.mrf.mxu0
      %2616 = vmatprep.mubr.f32.mxu0 0.0
      %2617 = vmatmul.mubr.f32.gmra.mxu0 %v2394
      %v2618 = vpop.f32.mrf.mxu0
      %v2619 = vadd.f32 0.0, %v2618
      %v2620 = vpop.f32.mrf.mxu0
      %2621 = vmatprep.mubr.f32.mxu0 0.0
      %2622 = vmatmul.mubr.f32.gmra.mxu0 %v2397
      %v2623 = vpop.f32.mrf.mxu0
      %v2624 = vadd.f32 0.0, %v2623
      %v2625 = vpop.f32.mrf.mxu0
      %2626 = vmatprep.mubr.f32.mxu0 0.0
      %2627 = vmatmul.mubr.f32.gmra.mxu0 %v2400
      %v2628 = vpop.f32.mrf.mxu0
      %v2629 = vadd.f32 0.0, %v2628
      %v2630 = vpop.f32.mrf.mxu0
      %2631 = vmatprep.mubr.f32.mxu0 0.0
      %2632 = vmatmul.mubr.f32.gmra.mxu0 %v2403
      %v2633 = vpop.f32.mrf.mxu0
      %v2634 = vadd.f32 0.0, %v2633
      %v2635 = vpop.f32.mrf.mxu0
      %2636 = vmatprep.mubr.f32.mxu0 0.0
      %2637 = vmatmul.mubr.f32.gmra.mxu0 %v2406
      %v2638 = vpop.f32.mrf.mxu0
      %v2639 = vadd.f32 0.0, %v2638
      %v2640 = vpop.f32.mrf.mxu0
      %2641 = vmatprep.mubr.f32.mxu0 0.0
      %2642 = vmatmul.mubr.f32.gmra.mxu0 %v2409
      %v2643 = vpop.f32.mrf.mxu0
      %v2644 = vadd.f32 0.0, %v2643
      %v2645 = vpop.f32.mrf.mxu0
      %2646 = vmatprep.mubr.f32.mxu0 0.0
      %2647 = vmatmul.mubr.f32.gmra.mxu0 %v2412
      %v2648 = vpop.f32.mrf.mxu0
      %v2649 = vadd.f32 0.0, %v2648
      %v2650 = vpop.f32.mrf.mxu0
      %2651 = vmatprep.mubr.f32.mxu0 0.0
      %2652 = vmatmul.mubr.f32.gmra.mxu0 %v2415
      %v2653 = vpop.f32.mrf.mxu0
      %v2654 = vadd.f32 0.0, %v2653
      %v2655 = vpop.f32.mrf.mxu0
      %2656 = vmatprep.mubr.f32.mxu0 0.0
      %2657 = vmatmul.mubr.f32.gmra.mxu0 %v2418
      %v2658 = vpop.f32.mrf.mxu0
      %v2659 = vadd.f32 0.0, %v2658
      %v2660 = vpop.f32.mrf.mxu0
      %2661 = vmatprep.mubr.f32.mxu0 0.0
      %2662 = vmatmul.mubr.f32.gmra.mxu0 %v2421
      %v2663 = vpop.f32.mrf.mxu0
      %v2664 = vadd.f32 0.0, %v2663
      %v2665 = vpop.f32.mrf.mxu0
      %2666 = vmatprep.mubr.f32.mxu0 0.0
      %2667 = vmatmul.mubr.f32.gmra.mxu0 %v2424
      %v2668 = vpop.f32.mrf.mxu0
      %v2669 = vadd.f32 0.0, %v2668
      %v2670 = vpop.f32.mrf.mxu0
      %2671 = vmatprep.mubr.f32.mxu0 0.0
      %2672 = vmatmul.mubr.f32.gmra.mxu0 %v2427
      %v2673 = vpop.f32.mrf.mxu0
      %v2674 = vadd.f32 0.0, %v2673
      %v2675 = vpop.f32.mrf.mxu0
      %2676 = vdwg.mxu0
      %v2677 = vadd.f32 %v2248, %v2499
      %v2678 = vadd.f32 %v2249, %v2504
      %v2679 = vadd.f32 %v2250, %v2509
      %v2680 = vadd.f32 %v2251, %v2514
      %v2681 = vadd.f32 %v2252, %v2519
      %v2682 = vadd.f32 %v2253, %v2524
      %v2683 = vadd.f32 %v2254, %v2529
      %v2684 = vadd.f32 %v2255, %v2534
      %v2685 = vadd.f32 %v2256, %v2539
      %v2686 = vadd.f32 %v2257, %v2544
      %v2687 = vadd.f32 %v2258, %v2549
      %v2688 = vadd.f32 %v2259, %v2554
      %v2689 = vadd.f32 %v2260, %v2559
      %v2690 = vadd.f32 %v2261, %v2564
      %v2691 = vadd.f32 %v2262, %v2569
      %v2692 = vadd.f32 %v2263, %v2574
      %v2693 = vadd.f32 %v2264, %v2579
      %v2694 = vadd.f32 %v2265, %v2584
      %v2695 = vadd.f32 %v2266, %v2589
      %v2696 = vadd.f32 %v2267, %v2594
      %v2697 = vadd.f32 %v2268, %v2599
      %v2698 = vadd.f32 %v2269, %v2604
      %v2699 = vadd.f32 %v2270, %v2609
      %v2700 = vadd.f32 %v2271, %v2614
      %v2701 = vadd.f32 %v2272, %v2619
      %v2702 = vadd.f32 %v2273, %v2624
      %v2703 = vadd.f32 %v2274, %v2629
      %v2704 = vadd.f32 %v2275, %v2634
      %v2705 = vadd.f32 %v2276, %v2639
      %v2706 = vadd.f32 %v2277, %v2644
      %v2707 = vadd.f32 %v2278, %v2649
      %v2708 = vadd.f32 %v2279, %v2654
      %v2709 = vadd.f32 %v2280, %v2659
      %v2710 = vadd.f32 %v2281, %v2664
      %v2711 = vadd.f32 %v2282, %v2669
      %v2712 = vadd.f32 %v2283, %v2674
      %v2713 = vld [vmem:[%s199 + $0x24] sm:$0xff]
      %v2714 = vld [vmem:[%s199 + $0x2c] sm:$0xff]
      %v2715 = vld [vmem:[%s199 + $0x34] sm:$0xff]
      %v2716 = vld [vmem:[%s199 + $0x3c] sm:$0xff]
      %v2717 = vld [vmem:[%s199 + $0x44] sm:$0xff]
      %v2718 = vld [vmem:[%s199 + $0x4c] sm:$0xff]
      %v2719 = vld [vmem:[%s199 + $0x54] sm:$0xff]
      %v2720 = vld [vmem:[%s199 + $0x5c] sm:$0xff]
      %v2721 = vld [vmem:[%s199 + $0x64] sm:$0xff]
      %v2722 = vld [vmem:[%s199 + $0x6c] sm:$0xff]
      %v2723 = vld [vmem:[%s199 + $0x74] sm:$0xff]
      %v2724 = vld [vmem:[%s199 + $0x7c] sm:$0xff]
      %v2725 = vld [vmem:[%s199 + $0x84] sm:$0xff]
      %v2726 = vld [vmem:[%s199 + $0x8c] sm:$0xff]
      %v2727 = vld [vmem:[%s199 + $0x94] sm:$0xff]
      %v2728 = vld [vmem:[%s199 + $0x9c] sm:$0xff]
      %v2729 = vld [vmem:[%s199 + $0xa4] sm:$0xff]
      %v2730 = vld [vmem:[%s199 + $0xac] sm:$0xff]
      %v2731 = vld [vmem:[%s199 + $0xb4] sm:$0xff]
      %v2732 = vld [vmem:[%s199 + $0xbc] sm:$0xff]
      %v2733 = vld [vmem:[%s199 + $0xc4] sm:$0xff]
      %v2734 = vld [vmem:[%s199 + $0xcc] sm:$0xff]
      %v2735 = vld [vmem:[%s199 + $0xd4] sm:$0xff]
      %v2736 = vld [vmem:[%s199 + $0xdc] sm:$0xff]
      %v2737 = vld [vmem:[%s199 + $0xe4] sm:$0xff]
      %v2738 = vld [vmem:[%s199 + $0xec] sm:$0xff]
      %v2739 = vld [vmem:[%s199 + $0xf4] sm:$0xff]
      %v2740 = vld [vmem:[%s199 + $0xfc] sm:$0xff]
      %v2741 = vld [vmem:[%s199 + $0x104] sm:$0xff]
      %v2742 = vld [vmem:[%s199 + $0x10c] sm:$0xff]
      %v2743 = vld [vmem:[%s199 + $0x114] sm:$0xff]
      %v2744 = vld [vmem:[%s199 + $0x11c] sm:$0xff]
      %v2745 = vld [vmem:[%s199 + $0x124] sm:$0xff]
      %v2746 = vld [vmem:[%s199 + $0x12c] sm:$0xff]
      %v2747 = vld [vmem:[%s199 + $0x134] sm:$0xff]
      %v2748 = vld [vmem:[%s199 + $0x13c] sm:$0xff]
      %v2749 = vld [vmem:[%s1 + $0x18] sm:$0xf]
      %v2751 = vsel %vm283, %v2713, 0
      %v2754 = vsel %vm283, %v2714, 0
      %v2757 = vsel %vm283, %v2715, 0
      %v2760 = vsel %vm283, %v2716, 0
      %v2763 = vsel %vm283, %v2717, 0
      %v2766 = vsel %vm283, %v2718, 0
      %v2769 = vsel %vm283, %v2719, 0
      %v2772 = vsel %vm283, %v2720, 0
      %v2775 = vsel %vm283, %v2721, 0
      %v2778 = vsel %vm283, %v2722, 0
      %v2781 = vsel %vm283, %v2723, 0
      %v2784 = vsel %vm283, %v2724, 0
      %v2787 = vsel %vm283, %v2725, 0
      %v2790 = vsel %vm283, %v2726, 0
      %v2793 = vsel %vm283, %v2727, 0
      %v2796 = vsel %vm283, %v2728, 0
      %v2799 = vsel %vm283, %v2729, 0
      %v2802 = vsel %vm283, %v2730, 0
      %v2805 = vsel %vm283, %v2731, 0
      %v2808 = vsel %vm283, %v2732, 0
      %v2811 = vsel %vm283, %v2733, 0
      %v2814 = vsel %vm283, %v2734, 0
      %v2817 = vsel %vm283, %v2735, 0
      %v2820 = vsel %vm283, %v2736, 0
      %v2823 = vsel %vm283, %v2737, 0
      %v2826 = vsel %vm283, %v2738, 0
      %v2829 = vsel %vm283, %v2739, 0
      %v2832 = vsel %vm283, %v2740, 0
      %v2835 = vsel %vm283, %v2741, 0
      %v2838 = vsel %vm283, %v2742, 0
      %v2841 = vsel %vm283, %v2743, 0
      %v2844 = vsel %vm283, %v2744, 0
      %v2847 = vsel %vm283, %v2745, 0
      %v2850 = vsel %vm283, %v2746, 0
      %v2853 = vsel %vm283, %v2747, 0
      %v2856 = vsel %vm283, %v2748, 0
      %v2859 = vsel %vm392, %v2749, 0
      %2861 = vmatprep.subr.mxu0 0.0
      %2862 = vmatpush1.msra.mxu0 0.0
      %2863 = vmatprep.subr.mxu0 0.0
      %2864 = vmatpush1.msra.mxu0 0.0
      %2865 = vmatprep.subr.mxu0 0.0
      %2866 = vmatpush1.msra.mxu0 0.0
      %2867 = vmatprep.subr.mxu0 0.0
      %2868 = vmatpush1.msra.mxu0 0.0
      %2869 = vmatprep.subr.mxu0 0.0
      %2870 = vmatpush1.msra.mxu0 0.0
      %2871 = vmatprep.subr.mxu0 0.0
      %2872 = vmatpush1.msra.mxu0 0.0
      %2873 = vmatprep.subr.mxu0 0.0
      %2874 = vmatpush1.msra.mxu0 0.0
      %2875 = vmatprep.subr.mxu0 0.0
      %2876 = vmatpush1.msra.mxu0 0.0
      %2877 = vmatprep.subr.mxu0 0.0
      %2878 = vmatpush1.msra.mxu0 0.0
      %2879 = vmatprep.subr.mxu0 0.0
      %2880 = vmatpush1.msra.mxu0 0.0
      %2881 = vmatprep.subr.mxu0 0.0
      %2882 = vmatpush1.msra.mxu0 0.0
      %2883 = vmatprep.subr.mxu0 0.0
      %2884 = vmatpush1.msra.mxu0 0.0
      %2885 = vmatprep.subr.mxu0 0.0
      %2886 = vmatpush1.msra.mxu0 0.0
      %2887 = vmatprep.subr.mxu0 0.0
      %2888 = vmatpush1.msra.mxu0 0.0
      %2889 = vmatprep.subr.mxu0 0.0
      %2890 = vmatpush1.msra.mxu0 0.0
      %2891 = vmatprep.subr.mxu0 0.0
      %2892 = vmatpush1.msra.mxu0 %v2859
      %2893 = vmatprep.subr.mxu0 0.0
      %2894 = vmatpush2.msra.mxu0 0.0
      %2895 = vmatprep.subr.mxu0 0.0
      %2896 = vmatpush2.msra.mxu0 0.0
      %2897 = vmatprep.subr.mxu0 0.0
      %2898 = vmatpush2.msra.mxu0 0.0
      %2899 = vmatprep.subr.mxu0 0.0
      %2900 = vmatpush2.msra.mxu0 0.0
      %2901 = vmatprep.subr.mxu0 0.0
      %2902 = vmatpush2.msra.mxu0 0.0
      %2903 = vmatprep.subr.mxu0 0.0
      %2904 = vmatpush2.msra.mxu0 0.0
      %2905 = vmatprep.subr.mxu0 0.0
      %2906 = vmatpush2.msra.mxu0 0.0
      %2907 = vmatprep.subr.mxu0 0.0
      %2908 = vmatpush2.msra.mxu0 0.0
      %2909 = vmatprep.subr.mxu0 0.0
      %2910 = vmatpush2.msra.mxu0 0.0
      %2911 = vmatprep.subr.mxu0 0.0
      %2912 = vmatpush2.msra.mxu0 0.0
      %2913 = vmatprep.subr.mxu0 0.0
      %2914 = vmatpush2.msra.mxu0 0.0
      %2915 = vmatprep.subr.mxu0 0.0
      %2916 = vmatpush2.msra.mxu0 0.0
      %2917 = vmatprep.subr.mxu0 0.0
      %2918 = vmatpush2.msra.mxu0 0.0
      %2919 = vmatprep.subr.mxu0 0.0
      %2920 = vmatpush2.msra.mxu0 0.0
      %2921 = vmatprep.subr.mxu0 0.0
      %2922 = vmatpush2.msra.mxu0 0.0
      %2923 = vmatprep.subr.mxu0 0.0
      %2924 = vmatpush2.msra.mxu0 0.0
      %2925 = vmatprep.mubr.f32.mxu0 0.0
      %2926 = vmatmul.mubr.f32.gmra.mxu0 %v2751
      %v2927 = vpop.f32.mrf.mxu0
      %v2928 = vadd.f32 0.0, %v2927
      %v2929 = vpop.f32.mrf.mxu0
      %2930 = vmatprep.mubr.f32.mxu0 0.0
      %2931 = vmatmul.mubr.f32.gmra.mxu0 %v2754
      %v2932 = vpop.f32.mrf.mxu0
      %v2933 = vadd.f32 0.0, %v2932
      %v2934 = vpop.f32.mrf.mxu0
      %2935 = vmatprep.mubr.f32.mxu0 0.0
      %2936 = vmatmul.mubr.f32.gmra.mxu0 %v2757
      %v2937 = vpop.f32.mrf.mxu0
      %v2938 = vadd.f32 0.0, %v2937
      %v2939 = vpop.f32.mrf.mxu0
      %2940 = vmatprep.mubr.f32.mxu0 0.0
      %2941 = vmatmul.mubr.f32.gmra.mxu0 %v2760
      %v2942 = vpop.f32.mrf.mxu0
      %v2943 = vadd.f32 0.0, %v2942
      %v2944 = vpop.f32.mrf.mxu0
      %2945 = vmatprep.mubr.f32.mxu0 0.0
      %2946 = vmatmul.mubr.f32.gmra.mxu0 %v2763
      %v2947 = vpop.f32.mrf.mxu0
      %v2948 = vadd.f32 0.0, %v2947
      %v2949 = vpop.f32.mrf.mxu0
      %2950 = vmatprep.mubr.f32.mxu0 0.0
      %2951 = vmatmul.mubr.f32.gmra.mxu0 %v2766
      %v2952 = vpop.f32.mrf.mxu0
      %v2953 = vadd.f32 0.0, %v2952
      %v2954 = vpop.f32.mrf.mxu0
      %2955 = vmatprep.mubr.f32.mxu0 0.0
      %2956 = vmatmul.mubr.f32.gmra.mxu0 %v2769
      %v2957 = vpop.f32.mrf.mxu0
      %v2958 = vadd.f32 0.0, %v2957
      %v2959 = vpop.f32.mrf.mxu0
      %2960 = vmatprep.mubr.f32.mxu0 0.0
      %2961 = vmatmul.mubr.f32.gmra.mxu0 %v2772
      %v2962 = vpop.f32.mrf.mxu0
      %v2963 = vadd.f32 0.0, %v2962
      %v2964 = vpop.f32.mrf.mxu0
      %2965 = vmatprep.mubr.f32.mxu0 0.0
      %2966 = vmatmul.mubr.f32.gmra.mxu0 %v2775
      %v2967 = vpop.f32.mrf.mxu0
      %v2968 = vadd.f32 0.0, %v2967
      %v2969 = vpop.f32.mrf.mxu0
      %2970 = vmatprep.mubr.f32.mxu0 0.0
      %2971 = vmatmul.mubr.f32.gmra.mxu0 %v2778
      %v2972 = vpop.f32.mrf.mxu0
      %v2973 = vadd.f32 0.0, %v2972
      %v2974 = vpop.f32.mrf.mxu0
      %2975 = vmatprep.mubr.f32.mxu0 0.0
      %2976 = vmatmul.mubr.f32.gmra.mxu0 %v2781
      %v2977 = vpop.f32.mrf.mxu0
      %v2978 = vadd.f32 0.0, %v2977
      %v2979 = vpop.f32.mrf.mxu0
      %2980 = vmatprep.mubr.f32.mxu0 0.0
      %2981 = vmatmul.mubr.f32.gmra.mxu0 %v2784
      %v2982 = vpop.f32.mrf.mxu0
      %v2983 = vadd.f32 0.0, %v2982
      %v2984 = vpop.f32.mrf.mxu0
      %2985 = vmatprep.mubr.f32.mxu0 0.0
      %2986 = vmatmul.mubr.f32.gmra.mxu0 %v2787
      %v2987 = vpop.f32.mrf.mxu0
      %v2988 = vadd.f32 0.0, %v2987
      %v2989 = vpop.f32.mrf.mxu0
      %2990 = vmatprep.mubr.f32.mxu0 0.0
      %2991 = vmatmul.mubr.f32.gmra.mxu0 %v2790
      %v2992 = vpop.f32.mrf.mxu0
      %v2993 = vadd.f32 0.0, %v2992
      %v2994 = vpop.f32.mrf.mxu0
      %2995 = vmatprep.mubr.f32.mxu0 0.0
      %2996 = vmatmul.mubr.f32.gmra.mxu0 %v2793
      %v2997 = vpop.f32.mrf.mxu0
      %v2998 = vadd.f32 0.0, %v2997
      %v2999 = vpop.f32.mrf.mxu0
      %3000 = vmatprep.mubr.f32.mxu0 0.0
      %3001 = vmatmul.mubr.f32.gmra.mxu0 %v2796
      %v3002 = vpop.f32.mrf.mxu0
      %v3003 = vadd.f32 0.0, %v3002
      %v3004 = vpop.f32.mrf.mxu0
      %3005 = vmatprep.mubr.f32.mxu0 0.0
      %3006 = vmatmul.mubr.f32.gmra.mxu0 %v2799
      %v3007 = vpop.f32.mrf.mxu0
      %v3008 = vadd.f32 0.0, %v3007
      %v3009 = vpop.f32.mrf.mxu0
      %3010 = vmatprep.mubr.f32.mxu0 0.0
      %3011 = vmatmul.mubr.f32.gmra.mxu0 %v2802
      %v3012 = vpop.f32.mrf.mxu0
      %v3013 = vadd.f32 0.0, %v3012
      %v3014 = vpop.f32.mrf.mxu0
      %3015 = vmatprep.mubr.f32.mxu0 0.0
      %3016 = vmatmul.mubr.f32.gmra.mxu0 %v2805
      %v3017 = vpop.f32.mrf.mxu0
      %v3018 = vadd.f32 0.0, %v3017
      %v3019 = vpop.f32.mrf.mxu0
      %3020 = vmatprep.mubr.f32.mxu0 0.0
      %3021 = vmatmul.mubr.f32.gmra.mxu0 %v2808
      %v3022 = vpop.f32.mrf.mxu0
      %v3023 = vadd.f32 0.0, %v3022
      %v3024 = vpop.f32.mrf.mxu0
      %3025 = vmatprep.mubr.f32.mxu0 0.0
      %3026 = vmatmul.mubr.f32.gmra.mxu0 %v2811
      %v3027 = vpop.f32.mrf.mxu0
      %v3028 = vadd.f32 0.0, %v3027
      %v3029 = vpop.f32.mrf.mxu0
      %3030 = vmatprep.mubr.f32.mxu0 0.0
      %3031 = vmatmul.mubr.f32.gmra.mxu0 %v2814
      %v3032 = vpop.f32.mrf.mxu0
      %v3033 = vadd.f32 0.0, %v3032
      %v3034 = vpop.f32.mrf.mxu0
      %3035 = vmatprep.mubr.f32.mxu0 0.0
      %3036 = vmatmul.mubr.f32.gmra.mxu0 %v2817
      %v3037 = vpop.f32.mrf.mxu0
      %v3038 = vadd.f32 0.0, %v3037
      %v3039 = vpop.f32.mrf.mxu0
      %3040 = vmatprep.mubr.f32.mxu0 0.0
      %3041 = vmatmul.mubr.f32.gmra.mxu0 %v2820
      %v3042 = vpop.f32.mrf.mxu0
      %v3043 = vadd.f32 0.0, %v3042
      %v3044 = vpop.f32.mrf.mxu0
      %3045 = vmatprep.mubr.f32.mxu0 0.0
      %3046 = vmatmul.mubr.f32.gmra.mxu0 %v2823
      %v3047 = vpop.f32.mrf.mxu0
      %v3048 = vadd.f32 0.0, %v3047
      %v3049 = vpop.f32.mrf.mxu0
      %3050 = vmatprep.mubr.f32.mxu0 0.0
      %3051 = vmatmul.mubr.f32.gmra.mxu0 %v2826
      %v3052 = vpop.f32.mrf.mxu0
      %v3053 = vadd.f32 0.0, %v3052
      %v3054 = vpop.f32.mrf.mxu0
      %3055 = vmatprep.mubr.f32.mxu0 0.0
      %3056 = vmatmul.mubr.f32.gmra.mxu0 %v2829
      %v3057 = vpop.f32.mrf.mxu0
      %v3058 = vadd.f32 0.0, %v3057
      %v3059 = vpop.f32.mrf.mxu0
      %3060 = vmatprep.mubr.f32.mxu0 0.0
      %3061 = vmatmul.mubr.f32.gmra.mxu0 %v2832
      %v3062 = vpop.f32.mrf.mxu0
      %v3063 = vadd.f32 0.0, %v3062
      %v3064 = vpop.f32.mrf.mxu0
      %3065 = vmatprep.mubr.f32.mxu0 0.0
      %3066 = vmatmul.mubr.f32.gmra.mxu0 %v2835
      %v3067 = vpop.f32.mrf.mxu0
      %v3068 = vadd.f32 0.0, %v3067
      %v3069 = vpop.f32.mrf.mxu0
      %3070 = vmatprep.mubr.f32.mxu0 0.0
      %3071 = vmatmul.mubr.f32.gmra.mxu0 %v2838
      %v3072 = vpop.f32.mrf.mxu0
      %v3073 = vadd.f32 0.0, %v3072
      %v3074 = vpop.f32.mrf.mxu0
      %3075 = vmatprep.mubr.f32.mxu0 0.0
      %3076 = vmatmul.mubr.f32.gmra.mxu0 %v2841
      %v3077 = vpop.f32.mrf.mxu0
      %v3078 = vadd.f32 0.0, %v3077
      %v3079 = vpop.f32.mrf.mxu0
      %3080 = vmatprep.mubr.f32.mxu0 0.0
      %3081 = vmatmul.mubr.f32.gmra.mxu0 %v2844
      %v3082 = vpop.f32.mrf.mxu0
      %v3083 = vadd.f32 0.0, %v3082
      %v3084 = vpop.f32.mrf.mxu0
      %3085 = vmatprep.mubr.f32.mxu0 0.0
      %3086 = vmatmul.mubr.f32.gmra.mxu0 %v2847
      %v3087 = vpop.f32.mrf.mxu0
      %v3088 = vadd.f32 0.0, %v3087
      %v3089 = vpop.f32.mrf.mxu0
      %3090 = vmatprep.mubr.f32.mxu0 0.0
      %3091 = vmatmul.mubr.f32.gmra.mxu0 %v2850
      %v3092 = vpop.f32.mrf.mxu0
      %v3093 = vadd.f32 0.0, %v3092
      %v3094 = vpop.f32.mrf.mxu0
      %3095 = vmatprep.mubr.f32.mxu0 0.0
      %3096 = vmatmul.mubr.f32.gmra.mxu0 %v2853
      %v3097 = vpop.f32.mrf.mxu0
      %v3098 = vadd.f32 0.0, %v3097
      %v3099 = vpop.f32.mrf.mxu0
      %3100 = vmatprep.mubr.f32.mxu0 0.0
      %3101 = vmatmul.mubr.f32.gmra.mxu0 %v2856
      %v3102 = vpop.f32.mrf.mxu0
      %v3103 = vadd.f32 0.0, %v3102
      %v3104 = vpop.f32.mrf.mxu0
      %3105 = vdwg.mxu0
      %v3106 = vadd.f32 %v2677, %v2928
      %v3107 = vadd.f32 %v2678, %v2933
      %v3108 = vadd.f32 %v2679, %v2938
      %v3109 = vadd.f32 %v2680, %v2943
      %v3110 = vadd.f32 %v2681, %v2948
      %v3111 = vadd.f32 %v2682, %v2953
      %v3112 = vadd.f32 %v2683, %v2958
      %v3113 = vadd.f32 %v2684, %v2963
      %v3114 = vadd.f32 %v2685, %v2968
      %v3115 = vadd.f32 %v2686, %v2973
      %v3116 = vadd.f32 %v2687, %v2978
      %v3117 = vadd.f32 %v2688, %v2983
      %v3118 = vadd.f32 %v2689, %v2988
      %v3119 = vadd.f32 %v2690, %v2993
      %v3120 = vadd.f32 %v2691, %v2998
      %v3121 = vadd.f32 %v2692, %v3003
      %v3122 = vadd.f32 %v2693, %v3008
      %v3123 = vadd.f32 %v2694, %v3013
      %v3124 = vadd.f32 %v2695, %v3018
      %v3125 = vadd.f32 %v2696, %v3023
      %v3126 = vadd.f32 %v2697, %v3028
      %v3127 = vadd.f32 %v2698, %v3033
      %v3128 = vadd.f32 %v2699, %v3038
      %v3129 = vadd.f32 %v2700, %v3043
      %v3130 = vadd.f32 %v2701, %v3048
      %v3131 = vadd.f32 %v2702, %v3053
      %v3132 = vadd.f32 %v2703, %v3058
      %v3133 = vadd.f32 %v2704, %v3063
      %v3134 = vadd.f32 %v2705, %v3068
      %v3135 = vadd.f32 %v2706, %v3073
      %v3136 = vadd.f32 %v2707, %v3078
      %v3137 = vadd.f32 %v2708, %v3083
      %v3138 = vadd.f32 %v2709, %v3088
      %v3139 = vadd.f32 %v2710, %v3093
      %v3140 = vadd.f32 %v2711, %v3098
      %v3141 = vadd.f32 %v2712, %v3103
      %v3142 = vld [vmem:[%s199 + $0x25] sm:$0xff]
      %v3143 = vld [vmem:[%s199 + $0x2d] sm:$0xff]
      %v3144 = vld [vmem:[%s199 + $0x35] sm:$0xff]
      %v3145 = vld [vmem:[%s199 + $0x3d] sm:$0xff]
      %v3146 = vld [vmem:[%s199 + $0x45] sm:$0xff]
      %v3147 = vld [vmem:[%s199 + $0x4d] sm:$0xff]
      %v3148 = vld [vmem:[%s199 + $0x55] sm:$0xff]
      %v3149 = vld [vmem:[%s199 + $0x5d] sm:$0xff]
      %v3150 = vld [vmem:[%s199 + $0x65] sm:$0xff]
      %v3151 = vld [vmem:[%s199 + $0x6d] sm:$0xff]
      %v3152 = vld [vmem:[%s199 + $0x75] sm:$0xff]
      %v3153 = vld [vmem:[%s199 + $0x7d] sm:$0xff]
      %v3154 = vld [vmem:[%s199 + $0x85] sm:$0xff]
      %v3155 = vld [vmem:[%s199 + $0x8d] sm:$0xff]
      %v3156 = vld [vmem:[%s199 + $0x95] sm:$0xff]
      %v3157 = vld [vmem:[%s199 + $0x9d] sm:$0xff]
      %v3158 = vld [vmem:[%s199 + $0xa5] sm:$0xff]
      %v3159 = vld [vmem:[%s199 + $0xad] sm:$0xff]
      %v3160 = vld [vmem:[%s199 + $0xb5] sm:$0xff]
      %v3161 = vld [vmem:[%s199 + $0xbd] sm:$0xff]
      %v3162 = vld [vmem:[%s199 + $0xc5] sm:$0xff]
      %v3163 = vld [vmem:[%s199 + $0xcd] sm:$0xff]
      %v3164 = vld [vmem:[%s199 + $0xd5] sm:$0xff]
      %v3165 = vld [vmem:[%s199 + $0xdd] sm:$0xff]
      %v3166 = vld [vmem:[%s199 + $0xe5] sm:$0xff]
      %v3167 = vld [vmem:[%s199 + $0xed] sm:$0xff]
      %v3168 = vld [vmem:[%s199 + $0xf5] sm:$0xff]
      %v3169 = vld [vmem:[%s199 + $0xfd] sm:$0xff]
      %v3170 = vld [vmem:[%s199 + $0x105] sm:$0xff]
      %v3171 = vld [vmem:[%s199 + $0x10d] sm:$0xff]
      %v3172 = vld [vmem:[%s199 + $0x115] sm:$0xff]
      %v3173 = vld [vmem:[%s199 + $0x11d] sm:$0xff]
      %v3174 = vld [vmem:[%s199 + $0x125] sm:$0xff]
      %v3175 = vld [vmem:[%s199 + $0x12d] sm:$0xff]
      %v3176 = vld [vmem:[%s199 + $0x135] sm:$0xff]
      %v3177 = vld [vmem:[%s199 + $0x13d] sm:$0xff]
      %v3178 = vld [vmem:[%s1 + $0x1c] sm:$0xf]
      %v3180 = vsel %vm283, %v3142, 0
      %v3183 = vsel %vm283, %v3143, 0
      %v3186 = vsel %vm283, %v3144, 0
      %v3189 = vsel %vm283, %v3145, 0
      %v3192 = vsel %vm283, %v3146, 0
      %v3195 = vsel %vm283, %v3147, 0
      %v3198 = vsel %vm283, %v3148, 0
      %v3201 = vsel %vm283, %v3149, 0
      %v3204 = vsel %vm283, %v3150, 0
      %v3207 = vsel %vm283, %v3151, 0
      %v3210 = vsel %vm283, %v3152, 0
      %v3213 = vsel %vm283, %v3153, 0
      %v3216 = vsel %vm283, %v3154, 0
      %v3219 = vsel %vm283, %v3155, 0
      %v3222 = vsel %vm283, %v3156, 0
      %v3225 = vsel %vm283, %v3157, 0
      %v3228 = vsel %vm283, %v3158, 0
      %v3231 = vsel %vm283, %v3159, 0
      %v3234 = vsel %vm283, %v3160, 0
      %v3237 = vsel %vm283, %v3161, 0
      %v3240 = vsel %vm283, %v3162, 0
      %v3243 = vsel %vm283, %v3163, 0
      %v3246 = vsel %vm283, %v3164, 0
      %v3249 = vsel %vm283, %v3165, 0
      %v3252 = vsel %vm283, %v3166, 0
      %v3255 = vsel %vm283, %v3167, 0
      %v3258 = vsel %vm283, %v3168, 0
      %v3261 = vsel %vm283, %v3169, 0
      %v3264 = vsel %vm283, %v3170, 0
      %v3267 = vsel %vm283, %v3171, 0
      %v3270 = vsel %vm283, %v3172, 0
      %v3273 = vsel %vm283, %v3173, 0
      %v3276 = vsel %vm283, %v3174, 0
      %v3279 = vsel %vm283, %v3175, 0
      %v3282 = vsel %vm283, %v3176, 0
      %v3285 = vsel %vm283, %v3177, 0
      %v3288 = vsel %vm392, %v3178, 0
      %3290 = vmatprep.subr.mxu0 0.0
      %3291 = vmatpush1.msra.mxu0 0.0
      %3292 = vmatprep.subr.mxu0 0.0
      %3293 = vmatpush1.msra.mxu0 0.0
      %3294 = vmatprep.subr.mxu0 0.0
      %3295 = vmatpush1.msra.mxu0 0.0
      %3296 = vmatprep.subr.mxu0 0.0
      %3297 = vmatpush1.msra.mxu0 0.0
      %3298 = vmatprep.subr.mxu0 0.0
      %3299 = vmatpush1.msra.mxu0 0.0
      %3300 = vmatprep.subr.mxu0 0.0
      %3301 = vmatpush1.msra.mxu0 0.0
      %3302 = vmatprep.subr.mxu0 0.0
      %3303 = vmatpush1.msra.mxu0 0.0
      %3304 = vmatprep.subr.mxu0 0.0
      %3305 = vmatpush1.msra.mxu0 0.0
      %3306 = vmatprep.subr.mxu0 0.0
      %3307 = vmatpush1.msra.mxu0 0.0
      %3308 = vmatprep.subr.mxu0 0.0
      %3309 = vmatpush1.msra.mxu0 0.0
      %3310 = vmatprep.subr.mxu0 0.0
      %3311 = vmatpush1.msra.mxu0 0.0
      %3312 = vmatprep.subr.mxu0 0.0
      %3313 = vmatpush1.msra.mxu0 0.0
      %3314 = vmatprep.subr.mxu0 0.0
      %3315 = vmatpush1.msra.mxu0 0.0
      %3316 = vmatprep.subr.mxu0 0.0
      %3317 = vmatpush1.msra.mxu0 0.0
      %3318 = vmatprep.subr.mxu0 0.0
      %3319 = vmatpush1.msra.mxu0 0.0
      %3320 = vmatprep.subr.mxu0 0.0
      %3321 = vmatpush1.msra.mxu0 %v3288
      %3322 = vmatprep.subr.mxu0 0.0
      %3323 = vmatpush2.msra.mxu0 0.0
      %3324 = vmatprep.subr.mxu0 0.0
      %3325 = vmatpush2.msra.mxu0 0.0
      %3326 = vmatprep.subr.mxu0 0.0
      %3327 = vmatpush2.msra.mxu0 0.0
      %3328 = vmatprep.subr.mxu0 0.0
      %3329 = vmatpush2.msra.mxu0 0.0
      %3330 = vmatprep.subr.mxu0 0.0
      %3331 = vmatpush2.msra.mxu0 0.0
      %3332 = vmatprep.subr.mxu0 0.0
      %3333 = vmatpush2.msra.mxu0 0.0
      %3334 = vmatprep.subr.mxu0 0.0
      %3335 = vmatpush2.msra.mxu0 0.0
      %3336 = vmatprep.subr.mxu0 0.0
      %3337 = vmatpush2.msra.mxu0 0.0
      %3338 = vmatprep.subr.mxu0 0.0
      %3339 = vmatpush2.msra.mxu0 0.0
      %3340 = vmatprep.subr.mxu0 0.0
      %3341 = vmatpush2.msra.mxu0 0.0
      %3342 = vmatprep.subr.mxu0 0.0
      %3343 = vmatpush2.msra.mxu0 0.0
      %3344 = vmatprep.subr.mxu0 0.0
      %3345 = vmatpush2.msra.mxu0 0.0
      %3346 = vmatprep.subr.mxu0 0.0
      %3347 = vmatpush2.msra.mxu0 0.0
      %3348 = vmatprep.subr.mxu0 0.0
      %3349 = vmatpush2.msra.mxu0 0.0
      %3350 = vmatprep.subr.mxu0 0.0
      %3351 = vmatpush2.msra.mxu0 0.0
      %3352 = vmatprep.subr.mxu0 0.0
      %3353 = vmatpush2.msra.mxu0 0.0
      %3354 = vmatprep.mubr.f32.mxu0 0.0
      %3355 = vmatmul.mubr.f32.gmra.mxu0 %v3180
      %v3356 = vpop.f32.mrf.mxu0
      %v3357 = vadd.f32 0.0, %v3356
      %v3358 = vpop.f32.mrf.mxu0
      %3359 = vmatprep.mubr.f32.mxu0 0.0
      %3360 = vmatmul.mubr.f32.gmra.mxu0 %v3183
      %v3361 = vpop.f32.mrf.mxu0
      %v3362 = vadd.f32 0.0, %v3361
      %v3363 = vpop.f32.mrf.mxu0
      %3364 = vmatprep.mubr.f32.mxu0 0.0
      %3365 = vmatmul.mubr.f32.gmra.mxu0 %v3186
      %v3366 = vpop.f32.mrf.mxu0
      %v3367 = vadd.f32 0.0, %v3366
      %v3368 = vpop.f32.mrf.mxu0
      %3369 = vmatprep.mubr.f32.mxu0 0.0
      %3370 = vmatmul.mubr.f32.gmra.mxu0 %v3189
      %v3371 = vpop.f32.mrf.mxu0
      %v3372 = vadd.f32 0.0, %v3371
      %v3373 = vpop.f32.mrf.mxu0
      %3374 = vmatprep.mubr.f32.mxu0 0.0
      %3375 = vmatmul.mubr.f32.gmra.mxu0 %v3192
      %v3376 = vpop.f32.mrf.mxu0
      %v3377 = vadd.f32 0.0, %v3376
      %v3378 = vpop.f32.mrf.mxu0
      %3379 = vmatprep.mubr.f32.mxu0 0.0
      %3380 = vmatmul.mubr.f32.gmra.mxu0 %v3195
      %v3381 = vpop.f32.mrf.mxu0
      %v3382 = vadd.f32 0.0, %v3381
      %v3383 = vpop.f32.mrf.mxu0
      %3384 = vmatprep.mubr.f32.mxu0 0.0
      %3385 = vmatmul.mubr.f32.gmra.mxu0 %v3198
      %v3386 = vpop.f32.mrf.mxu0
      %v3387 = vadd.f32 0.0, %v3386
      %v3388 = vpop.f32.mrf.mxu0
      %3389 = vmatprep.mubr.f32.mxu0 0.0
      %3390 = vmatmul.mubr.f32.gmra.mxu0 %v3201
      %v3391 = vpop.f32.mrf.mxu0
      %v3392 = vadd.f32 0.0, %v3391
      %v3393 = vpop.f32.mrf.mxu0
      %3394 = vmatprep.mubr.f32.mxu0 0.0
      %3395 = vmatmul.mubr.f32.gmra.mxu0 %v3204
      %v3396 = vpop.f32.mrf.mxu0
      %v3397 = vadd.f32 0.0, %v3396
      %v3398 = vpop.f32.mrf.mxu0
      %3399 = vmatprep.mubr.f32.mxu0 0.0
      %3400 = vmatmul.mubr.f32.gmra.mxu0 %v3207
      %v3401 = vpop.f32.mrf.mxu0
      %v3402 = vadd.f32 0.0, %v3401
      %v3403 = vpop.f32.mrf.mxu0
      %3404 = vmatprep.mubr.f32.mxu0 0.0
      %3405 = vmatmul.mubr.f32.gmra.mxu0 %v3210
      %v3406 = vpop.f32.mrf.mxu0
      %v3407 = vadd.f32 0.0, %v3406
      %v3408 = vpop.f32.mrf.mxu0
      %3409 = vmatprep.mubr.f32.mxu0 0.0
      %3410 = vmatmul.mubr.f32.gmra.mxu0 %v3213
      %v3411 = vpop.f32.mrf.mxu0
      %v3412 = vadd.f32 0.0, %v3411
      %v3413 = vpop.f32.mrf.mxu0
      %3414 = vmatprep.mubr.f32.mxu0 0.0
      %3415 = vmatmul.mubr.f32.gmra.mxu0 %v3216
      %v3416 = vpop.f32.mrf.mxu0
      %v3417 = vadd.f32 0.0, %v3416
      %v3418 = vpop.f32.mrf.mxu0
      %3419 = vmatprep.mubr.f32.mxu0 0.0
      %3420 = vmatmul.mubr.f32.gmra.mxu0 %v3219
      %v3421 = vpop.f32.mrf.mxu0
      %v3422 = vadd.f32 0.0, %v3421
      %v3423 = vpop.f32.mrf.mxu0
      %3424 = vmatprep.mubr.f32.mxu0 0.0
      %3425 = vmatmul.mubr.f32.gmra.mxu0 %v3222
      %v3426 = vpop.f32.mrf.mxu0
      %v3427 = vadd.f32 0.0, %v3426
      %v3428 = vpop.f32.mrf.mxu0
      %3429 = vmatprep.mubr.f32.mxu0 0.0
      %3430 = vmatmul.mubr.f32.gmra.mxu0 %v3225
      %v3431 = vpop.f32.mrf.mxu0
      %v3432 = vadd.f32 0.0, %v3431
      %v3433 = vpop.f32.mrf.mxu0
      %3434 = vmatprep.mubr.f32.mxu0 0.0
      %3435 = vmatmul.mubr.f32.gmra.mxu0 %v3228
      %v3436 = vpop.f32.mrf.mxu0
      %v3437 = vadd.f32 0.0, %v3436
      %v3438 = vpop.f32.mrf.mxu0
      %3439 = vmatprep.mubr.f32.mxu0 0.0
      %3440 = vmatmul.mubr.f32.gmra.mxu0 %v3231
      %v3441 = vpop.f32.mrf.mxu0
      %v3442 = vadd.f32 0.0, %v3441
      %v3443 = vpop.f32.mrf.mxu0
      %3444 = vmatprep.mubr.f32.mxu0 0.0
      %3445 = vmatmul.mubr.f32.gmra.mxu0 %v3234
      %v3446 = vpop.f32.mrf.mxu0
      %v3447 = vadd.f32 0.0, %v3446
      %v3448 = vpop.f32.mrf.mxu0
      %3449 = vmatprep.mubr.f32.mxu0 0.0
      %3450 = vmatmul.mubr.f32.gmra.mxu0 %v3237
      %v3451 = vpop.f32.mrf.mxu0
      %v3452 = vadd.f32 0.0, %v3451
      %v3453 = vpop.f32.mrf.mxu0
      %3454 = vmatprep.mubr.f32.mxu0 0.0
      %3455 = vmatmul.mubr.f32.gmra.mxu0 %v3240
      %v3456 = vpop.f32.mrf.mxu0
      %v3457 = vadd.f32 0.0, %v3456
      %v3458 = vpop.f32.mrf.mxu0
      %3459 = vmatprep.mubr.f32.mxu0 0.0
      %3460 = vmatmul.mubr.f32.gmra.mxu0 %v3243
      %v3461 = vpop.f32.mrf.mxu0
      %v3462 = vadd.f32 0.0, %v3461
      %v3463 = vpop.f32.mrf.mxu0
      %3464 = vmatprep.mubr.f32.mxu0 0.0
      %3465 = vmatmul.mubr.f32.gmra.mxu0 %v3246
      %v3466 = vpop.f32.mrf.mxu0
      %v3467 = vadd.f32 0.0, %v3466
      %v3468 = vpop.f32.mrf.mxu0
      %3469 = vmatprep.mubr.f32.mxu0 0.0
      %3470 = vmatmul.mubr.f32.gmra.mxu0 %v3249
      %v3471 = vpop.f32.mrf.mxu0
      %v3472 = vadd.f32 0.0, %v3471
      %v3473 = vpop.f32.mrf.mxu0
      %3474 = vmatprep.mubr.f32.mxu0 0.0
      %3475 = vmatmul.mubr.f32.gmra.mxu0 %v3252
      %v3476 = vpop.f32.mrf.mxu0
      %v3477 = vadd.f32 0.0, %v3476
      %v3478 = vpop.f32.mrf.mxu0
      %3479 = vmatprep.mubr.f32.mxu0 0.0
      %3480 = vmatmul.mubr.f32.gmra.mxu0 %v3255
      %v3481 = vpop.f32.mrf.mxu0
      %v3482 = vadd.f32 0.0, %v3481
      %v3483 = vpop.f32.mrf.mxu0
      %3484 = vmatprep.mubr.f32.mxu0 0.0
      %3485 = vmatmul.mubr.f32.gmra.mxu0 %v3258
      %v3486 = vpop.f32.mrf.mxu0
      %v3487 = vadd.f32 0.0, %v3486
      %v3488 = vpop.f32.mrf.mxu0
      %3489 = vmatprep.mubr.f32.mxu0 0.0
      %3490 = vmatmul.mubr.f32.gmra.mxu0 %v3261
      %v3491 = vpop.f32.mrf.mxu0
      %v3492 = vadd.f32 0.0, %v3491
      %v3493 = vpop.f32.mrf.mxu0
      %3494 = vmatprep.mubr.f32.mxu0 0.0
      %3495 = vmatmul.mubr.f32.gmra.mxu0 %v3264
      %v3496 = vpop.f32.mrf.mxu0
      %v3497 = vadd.f32 0.0, %v3496
      %v3498 = vpop.f32.mrf.mxu0
      %3499 = vmatprep.mubr.f32.mxu0 0.0
      %3500 = vmatmul.mubr.f32.gmra.mxu0 %v3267
      %v3501 = vpop.f32.mrf.mxu0
      %v3502 = vadd.f32 0.0, %v3501
      %v3503 = vpop.f32.mrf.mxu0
      %3504 = vmatprep.mubr.f32.mxu0 0.0
      %3505 = vmatmul.mubr.f32.gmra.mxu0 %v3270
      %v3506 = vpop.f32.mrf.mxu0
      %v3507 = vadd.f32 0.0, %v3506
      %v3508 = vpop.f32.mrf.mxu0
      %3509 = vmatprep.mubr.f32.mxu0 0.0
      %3510 = vmatmul.mubr.f32.gmra.mxu0 %v3273
      %v3511 = vpop.f32.mrf.mxu0
      %v3512 = vadd.f32 0.0, %v3511
      %v3513 = vpop.f32.mrf.mxu0
      %3514 = vmatprep.mubr.f32.mxu0 0.0
      %3515 = vmatmul.mubr.f32.gmra.mxu0 %v3276
      %v3516 = vpop.f32.mrf.mxu0
      %v3517 = vadd.f32 0.0, %v3516
      %v3518 = vpop.f32.mrf.mxu0
      %3519 = vmatprep.mubr.f32.mxu0 0.0
      %3520 = vmatmul.mubr.f32.gmra.mxu0 %v3279
      %v3521 = vpop.f32.mrf.mxu0
      %v3522 = vadd.f32 0.0, %v3521
      %v3523 = vpop.f32.mrf.mxu0
      %3524 = vmatprep.mubr.f32.mxu0 0.0
      %3525 = vmatmul.mubr.f32.gmra.mxu0 %v3282
      %v3526 = vpop.f32.mrf.mxu0
      %v3527 = vadd.f32 0.0, %v3526
      %v3528 = vpop.f32.mrf.mxu0
      %3529 = vmatprep.mubr.f32.mxu0 0.0
      %3530 = vmatmul.mubr.f32.gmra.mxu0 %v3285
      %v3531 = vpop.f32.mrf.mxu0
      %v3532 = vadd.f32 0.0, %v3531
      %v3533 = vpop.f32.mrf.mxu0
      %3534 = vdwg.mxu0
      %v3535 = vadd.f32 %v3106, %v3357
      %v3536 = vadd.f32 %v3107, %v3362
      %v3537 = vadd.f32 %v3108, %v3367
      %v3538 = vadd.f32 %v3109, %v3372
      %v3539 = vadd.f32 %v3110, %v3377
      %v3540 = vadd.f32 %v3111, %v3382
      %v3541 = vadd.f32 %v3112, %v3387
      %v3542 = vadd.f32 %v3113, %v3392
      %v3543 = vadd.f32 %v3114, %v3397
      %v3544 = vadd.f32 %v3115, %v3402
      %v3545 = vadd.f32 %v3116, %v3407
      %v3546 = vadd.f32 %v3117, %v3412
      %v3547 = vadd.f32 %v3118, %v3417
      %v3548 = vadd.f32 %v3119, %v3422
      %v3549 = vadd.f32 %v3120, %v3427
      %v3550 = vadd.f32 %v3121, %v3432
      %v3551 = vadd.f32 %v3122, %v3437
      %v3552 = vadd.f32 %v3123, %v3442
      %v3553 = vadd.f32 %v3124, %v3447
      %v3554 = vadd.f32 %v3125, %v3452
      %v3555 = vadd.f32 %v3126, %v3457
      %v3556 = vadd.f32 %v3127, %v3462
      %v3557 = vadd.f32 %v3128, %v3467
      %v3558 = vadd.f32 %v3129, %v3472
      %v3559 = vadd.f32 %v3130, %v3477
      %v3560 = vadd.f32 %v3131, %v3482
      %v3561 = vadd.f32 %v3132, %v3487
      %v3562 = vadd.f32 %v3133, %v3492
      %v3563 = vadd.f32 %v3134, %v3497
      %v3564 = vadd.f32 %v3135, %v3502
      %v3565 = vadd.f32 %v3136, %v3507
      %v3566 = vadd.f32 %v3137, %v3512
      %v3567 = vadd.f32 %v3138, %v3517
      %v3568 = vadd.f32 %v3139, %v3522
      %v3569 = vadd.f32 %v3140, %v3527
      %v3570 = vadd.f32 %v3141, %v3532
      %v3571 = vld [vmem:[%s199 + $0x26] sm:$0xff]
      %v3572 = vld [vmem:[%s199 + $0x2e] sm:$0xff]
      %v3573 = vld [vmem:[%s199 + $0x36] sm:$0xff]
      %v3574 = vld [vmem:[%s199 + $0x3e] sm:$0xff]
      %v3575 = vld [vmem:[%s199 + $0x46] sm:$0xff]
      %v3576 = vld [vmem:[%s199 + $0x4e] sm:$0xff]
      %v3577 = vld [vmem:[%s199 + $0x56] sm:$0xff]
      %v3578 = vld [vmem:[%s199 + $0x5e] sm:$0xff]
      %v3579 = vld [vmem:[%s199 + $0x66] sm:$0xff]
      %v3580 = vld [vmem:[%s199 + $0x6e] sm:$0xff]
      %v3581 = vld [vmem:[%s199 + $0x76] sm:$0xff]
      %v3582 = vld [vmem:[%s199 + $0x7e] sm:$0xff]
      %v3583 = vld [vmem:[%s199 + $0x86] sm:$0xff]
      %v3584 = vld [vmem:[%s199 + $0x8e] sm:$0xff]
      %v3585 = vld [vmem:[%s199 + $0x96] sm:$0xff]
      %v3586 = vld [vmem:[%s199 + $0x9e] sm:$0xff]
      %v3587 = vld [vmem:[%s199 + $0xa6] sm:$0xff]
      %v3588 = vld [vmem:[%s199 + $0xae] sm:$0xff]
      %v3589 = vld [vmem:[%s199 + $0xb6] sm:$0xff]
      %v3590 = vld [vmem:[%s199 + $0xbe] sm:$0xff]
      %v3591 = vld [vmem:[%s199 + $0xc6] sm:$0xff]
      %v3592 = vld [vmem:[%s199 + $0xce] sm:$0xff]
      %v3593 = vld [vmem:[%s199 + $0xd6] sm:$0xff]
      %v3594 = vld [vmem:[%s199 + $0xde] sm:$0xff]
      %v3595 = vld [vmem:[%s199 + $0xe6] sm:$0xff]
      %v3596 = vld [vmem:[%s199 + $0xee] sm:$0xff]
      %v3597 = vld [vmem:[%s199 + $0xf6] sm:$0xff]
      %v3598 = vld [vmem:[%s199 + $0xfe] sm:$0xff]
      %v3599 = vld [vmem:[%s199 + $0x106] sm:$0xff]
      %v3600 = vld [vmem:[%s199 + $0x10e] sm:$0xff]
      %v3601 = vld [vmem:[%s199 + $0x116] sm:$0xff]
      %v3602 = vld [vmem:[%s199 + $0x11e] sm:$0xff]
      %v3603 = vld [vmem:[%s199 + $0x126] sm:$0xff]
      %v3604 = vld [vmem:[%s199 + $0x12e] sm:$0xff]
      %v3605 = vld [vmem:[%s199 + $0x136] sm:$0xff]
      %v3606 = vld [vmem:[%s199 + $0x13e] sm:$0xff]
      %v3607 = vld [vmem:[%s1 + $0x20] sm:$0xf]
      %v3609 = vsel %vm283, %v3571, 0
      %v3612 = vsel %vm283, %v3572, 0
      %v3615 = vsel %vm283, %v3573, 0
      %v3618 = vsel %vm283, %v3574, 0
      %v3621 = vsel %vm283, %v3575, 0
      %v3624 = vsel %vm283, %v3576, 0
      %v3627 = vsel %vm283, %v3577, 0
      %v3630 = vsel %vm283, %v3578, 0
      %v3633 = vsel %vm283, %v3579, 0
      %v3636 = vsel %vm283, %v3580, 0
      %v3639 = vsel %vm283, %v3581, 0
      %v3642 = vsel %vm283, %v3582, 0
      %v3645 = vsel %vm283, %v3583, 0
      %v3648 = vsel %vm283, %v3584, 0
      %v3651 = vsel %vm283, %v3585, 0
      %v3654 = vsel %vm283, %v3586, 0
      %v3657 = vsel %vm283, %v3587, 0
      %v3660 = vsel %vm283, %v3588, 0
      %v3663 = vsel %vm283, %v3589, 0
      %v3666 = vsel %vm283, %v3590, 0
      %v3669 = vsel %vm283, %v3591, 0
      %v3672 = vsel %vm283, %v3592, 0
      %v3675 = vsel %vm283, %v3593, 0
      %v3678 = vsel %vm283, %v3594, 0
      %v3681 = vsel %vm283, %v3595, 0
      %v3684 = vsel %vm283, %v3596, 0
      %v3687 = vsel %vm283, %v3597, 0
      %v3690 = vsel %vm283, %v3598, 0
      %v3693 = vsel %vm283, %v3599, 0
      %v3696 = vsel %vm283, %v3600, 0
      %v3699 = vsel %vm283, %v3601, 0
      %v3702 = vsel %vm283, %v3602, 0
      %v3705 = vsel %vm283, %v3603, 0
      %v3708 = vsel %vm283, %v3604, 0
      %v3711 = vsel %vm283, %v3605, 0
      %v3714 = vsel %vm283, %v3606, 0
      %v3717 = vsel %vm392, %v3607, 0
      %3719 = vmatprep.subr.mxu0 0.0
      %3720 = vmatpush1.msra.mxu0 0.0
      %3721 = vmatprep.subr.mxu0 0.0
      %3722 = vmatpush1.msra.mxu0 0.0
      %3723 = vmatprep.subr.mxu0 0.0
      %3724 = vmatpush1.msra.mxu0 0.0
      %3725 = vmatprep.subr.mxu0 0.0
      %3726 = vmatpush1.msra.mxu0 0.0
      %3727 = vmatprep.subr.mxu0 0.0
      %3728 = vmatpush1.msra.mxu0 0.0
      %3729 = vmatprep.subr.mxu0 0.0
      %3730 = vmatpush1.msra.mxu0 0.0
      %3731 = vmatprep.subr.mxu0 0.0
      %3732 = vmatpush1.msra.mxu0 0.0
      %3733 = vmatprep.subr.mxu0 0.0
      %3734 = vmatpush1.msra.mxu0 0.0
      %3735 = vmatprep.subr.mxu0 0.0
      %3736 = vmatpush1.msra.mxu0 0.0
      %3737 = vmatprep.subr.mxu0 0.0
      %3738 = vmatpush1.msra.mxu0 0.0
      %3739 = vmatprep.subr.mxu0 0.0
      %3740 = vmatpush1.msra.mxu0 0.0
      %3741 = vmatprep.subr.mxu0 0.0
      %3742 = vmatpush1.msra.mxu0 0.0
      %3743 = vmatprep.subr.mxu0 0.0
      %3744 = vmatpush1.msra.mxu0 0.0
      %3745 = vmatprep.subr.mxu0 0.0
      %3746 = vmatpush1.msra.mxu0 0.0
      %3747 = vmatprep.subr.mxu0 0.0
      %3748 = vmatpush1.msra.mxu0 0.0
      %3749 = vmatprep.subr.mxu0 0.0
      %3750 = vmatpush1.msra.mxu0 %v3717
      %3751 = vmatprep.subr.mxu0 0.0
      %3752 = vmatpush2.msra.mxu0 0.0
      %3753 = vmatprep.subr.mxu0 0.0
      %3754 = vmatpush2.msra.mxu0 0.0
      %3755 = vmatprep.subr.mxu0 0.0
      %3756 = vmatpush2.msra.mxu0 0.0
      %3757 = vmatprep.subr.mxu0 0.0
      %3758 = vmatpush2.msra.mxu0 0.0
      %3759 = vmatprep.subr.mxu0 0.0
      %3760 = vmatpush2.msra.mxu0 0.0
      %3761 = vmatprep.subr.mxu0 0.0
      %3762 = vmatpush2.msra.mxu0 0.0
      %3763 = vmatprep.subr.mxu0 0.0
      %3764 = vmatpush2.msra.mxu0 0.0
      %3765 = vmatprep.subr.mxu0 0.0
      %3766 = vmatpush2.msra.mxu0 0.0
      %3767 = vmatprep.subr.mxu0 0.0
      %3768 = vmatpush2.msra.mxu0 0.0
      %3769 = vmatprep.subr.mxu0 0.0
      %3770 = vmatpush2.msra.mxu0 0.0
      %3771 = vmatprep.subr.mxu0 0.0
      %3772 = vmatpush2.msra.mxu0 0.0
      %3773 = vmatprep.subr.mxu0 0.0
      %3774 = vmatpush2.msra.mxu0 0.0
      %3775 = vmatprep.subr.mxu0 0.0
      %3776 = vmatpush2.msra.mxu0 0.0
      %3777 = vmatprep.subr.mxu0 0.0
      %3778 = vmatpush2.msra.mxu0 0.0
      %3779 = vmatprep.subr.mxu0 0.0
      %3780 = vmatpush2.msra.mxu0 0.0
      %3781 = vmatprep.subr.mxu0 0.0
      %3782 = vmatpush2.msra.mxu0 0.0
      %3783 = vmatprep.mubr.f32.mxu0 0.0
      %3784 = vmatmul.mubr.f32.gmra.mxu0 %v3609
      %v3785 = vpop.f32.mrf.mxu0
      %v3786 = vadd.f32 0.0, %v3785
      %v3787 = vpop.f32.mrf.mxu0
      %3788 = vmatprep.mubr.f32.mxu0 0.0
      %3789 = vmatmul.mubr.f32.gmra.mxu0 %v3612
      %v3790 = vpop.f32.mrf.mxu0
      %v3791 = vadd.f32 0.0, %v3790
      %v3792 = vpop.f32.mrf.mxu0
      %3793 = vmatprep.mubr.f32.mxu0 0.0
      %3794 = vmatmul.mubr.f32.gmra.mxu0 %v3615
      %v3795 = vpop.f32.mrf.mxu0
      %v3796 = vadd.f32 0.0, %v3795
      %v3797 = vpop.f32.mrf.mxu0
      %3798 = vmatprep.mubr.f32.mxu0 0.0
      %3799 = vmatmul.mubr.f32.gmra.mxu0 %v3618
      %v3800 = vpop.f32.mrf.mxu0
      %v3801 = vadd.f32 0.0, %v3800
      %v3802 = vpop.f32.mrf.mxu0
      %3803 = vmatprep.mubr.f32.mxu0 0.0
      %3804 = vmatmul.mubr.f32.gmra.mxu0 %v3621
      %v3805 = vpop.f32.mrf.mxu0
      %v3806 = vadd.f32 0.0, %v3805
      %v3807 = vpop.f32.mrf.mxu0
      %3808 = vmatprep.mubr.f32.mxu0 0.0
      %3809 = vmatmul.mubr.f32.gmra.mxu0 %v3624
      %v3810 = vpop.f32.mrf.mxu0
      %v3811 = vadd.f32 0.0, %v3810
      %v3812 = vpop.f32.mrf.mxu0
      %3813 = vmatprep.mubr.f32.mxu0 0.0
      %3814 = vmatmul.mubr.f32.gmra.mxu0 %v3627
      %v3815 = vpop.f32.mrf.mxu0
      %v3816 = vadd.f32 0.0, %v3815
      %v3817 = vpop.f32.mrf.mxu0
      %3818 = vmatprep.mubr.f32.mxu0 0.0
      %3819 = vmatmul.mubr.f32.gmra.mxu0 %v3630
      %v3820 = vpop.f32.mrf.mxu0
      %v3821 = vadd.f32 0.0, %v3820
      %v3822 = vpop.f32.mrf.mxu0
      %3823 = vmatprep.mubr.f32.mxu0 0.0
      %3824 = vmatmul.mubr.f32.gmra.mxu0 %v3633
      %v3825 = vpop.f32.mrf.mxu0
      %v3826 = vadd.f32 0.0, %v3825
      %v3827 = vpop.f32.mrf.mxu0
      %3828 = vmatprep.mubr.f32.mxu0 0.0
      %3829 = vmatmul.mubr.f32.gmra.mxu0 %v3636
      %v3830 = vpop.f32.mrf.mxu0
      %v3831 = vadd.f32 0.0, %v3830
      %v3832 = vpop.f32.mrf.mxu0
      %3833 = vmatprep.mubr.f32.mxu0 0.0
      %3834 = vmatmul.mubr.f32.gmra.mxu0 %v3639
      %v3835 = vpop.f32.mrf.mxu0
      %v3836 = vadd.f32 0.0, %v3835
      %v3837 = vpop.f32.mrf.mxu0
      %3838 = vmatprep.mubr.f32.mxu0 0.0
      %3839 = vmatmul.mubr.f32.gmra.mxu0 %v3642
      %v3840 = vpop.f32.mrf.mxu0
      %v3841 = vadd.f32 0.0, %v3840
      %v3842 = vpop.f32.mrf.mxu0
      %3843 = vmatprep.mubr.f32.mxu0 0.0
      %3844 = vmatmul.mubr.f32.gmra.mxu0 %v3645
      %v3845 = vpop.f32.mrf.mxu0
      %v3846 = vadd.f32 0.0, %v3845
      %v3847 = vpop.f32.mrf.mxu0
      %3848 = vmatprep.mubr.f32.mxu0 0.0
      %3849 = vmatmul.mubr.f32.gmra.mxu0 %v3648
      %v3850 = vpop.f32.mrf.mxu0
      %v3851 = vadd.f32 0.0, %v3850
      %v3852 = vpop.f32.mrf.mxu0
      %3853 = vmatprep.mubr.f32.mxu0 0.0
      %3854 = vmatmul.mubr.f32.gmra.mxu0 %v3651
      %v3855 = vpop.f32.mrf.mxu0
      %v3856 = vadd.f32 0.0, %v3855
      %v3857 = vpop.f32.mrf.mxu0
      %3858 = vmatprep.mubr.f32.mxu0 0.0
      %3859 = vmatmul.mubr.f32.gmra.mxu0 %v3654
      %v3860 = vpop.f32.mrf.mxu0
      %v3861 = vadd.f32 0.0, %v3860
      %v3862 = vpop.f32.mrf.mxu0
      %3863 = vmatprep.mubr.f32.mxu0 0.0
      %3864 = vmatmul.mubr.f32.gmra.mxu0 %v3657
      %v3865 = vpop.f32.mrf.mxu0
      %v3866 = vadd.f32 0.0, %v3865
      %v3867 = vpop.f32.mrf.mxu0
      %3868 = vmatprep.mubr.f32.mxu0 0.0
      %3869 = vmatmul.mubr.f32.gmra.mxu0 %v3660
      %v3870 = vpop.f32.mrf.mxu0
      %v3871 = vadd.f32 0.0, %v3870
      %v3872 = vpop.f32.mrf.mxu0
      %3873 = vmatprep.mubr.f32.mxu0 0.0
      %3874 = vmatmul.mubr.f32.gmra.mxu0 %v3663
      %v3875 = vpop.f32.mrf.mxu0
      %v3876 = vadd.f32 0.0, %v3875
      %v3877 = vpop.f32.mrf.mxu0
      %3878 = vmatprep.mubr.f32.mxu0 0.0
      %3879 = vmatmul.mubr.f32.gmra.mxu0 %v3666
      %v3880 = vpop.f32.mrf.mxu0
      %v3881 = vadd.f32 0.0, %v3880
      %v3882 = vpop.f32.mrf.mxu0
      %3883 = vmatprep.mubr.f32.mxu0 0.0
      %3884 = vmatmul.mubr.f32.gmra.mxu0 %v3669
      %v3885 = vpop.f32.mrf.mxu0
      %v3886 = vadd.f32 0.0, %v3885
      %v3887 = vpop.f32.mrf.mxu0
      %3888 = vmatprep.mubr.f32.mxu0 0.0
      %3889 = vmatmul.mubr.f32.gmra.mxu0 %v3672
      %v3890 = vpop.f32.mrf.mxu0
      %v3891 = vadd.f32 0.0, %v3890
      %v3892 = vpop.f32.mrf.mxu0
      %3893 = vmatprep.mubr.f32.mxu0 0.0
      %3894 = vmatmul.mubr.f32.gmra.mxu0 %v3675
      %v3895 = vpop.f32.mrf.mxu0
      %v3896 = vadd.f32 0.0, %v3895
      %v3897 = vpop.f32.mrf.mxu0
      %3898 = vmatprep.mubr.f32.mxu0 0.0
      %3899 = vmatmul.mubr.f32.gmra.mxu0 %v3678
      %v3900 = vpop.f32.mrf.mxu0
      %v3901 = vadd.f32 0.0, %v3900
      %v3902 = vpop.f32.mrf.mxu0
      %3903 = vmatprep.mubr.f32.mxu0 0.0
      %3904 = vmatmul.mubr.f32.gmra.mxu0 %v3681
      %v3905 = vpop.f32.mrf.mxu0
      %v3906 = vadd.f32 0.0, %v3905
      %v3907 = vpop.f32.mrf.mxu0
      %3908 = vmatprep.mubr.f32.mxu0 0.0
      %3909 = vmatmul.mubr.f32.gmra.mxu0 %v3684
      %v3910 = vpop.f32.mrf.mxu0
      %v3911 = vadd.f32 0.0, %v3910
      %v3912 = vpop.f32.mrf.mxu0
      %3913 = vmatprep.mubr.f32.mxu0 0.0
      %3914 = vmatmul.mubr.f32.gmra.mxu0 %v3687
      %v3915 = vpop.f32.mrf.mxu0
      %v3916 = vadd.f32 0.0, %v3915
      %v3917 = vpop.f32.mrf.mxu0
      %3918 = vmatprep.mubr.f32.mxu0 0.0
      %3919 = vmatmul.mubr.f32.gmra.mxu0 %v3690
      %v3920 = vpop.f32.mrf.mxu0
      %v3921 = vadd.f32 0.0, %v3920
      %v3922 = vpop.f32.mrf.mxu0
      %3923 = vmatprep.mubr.f32.mxu0 0.0
      %3924 = vmatmul.mubr.f32.gmra.mxu0 %v3693
      %v3925 = vpop.f32.mrf.mxu0
      %v3926 = vadd.f32 0.0, %v3925
      %v3927 = vpop.f32.mrf.mxu0
      %3928 = vmatprep.mubr.f32.mxu0 0.0
      %3929 = vmatmul.mubr.f32.gmra.mxu0 %v3696
      %v3930 = vpop.f32.mrf.mxu0
      %v3931 = vadd.f32 0.0, %v3930
      %v3932 = vpop.f32.mrf.mxu0
      %3933 = vmatprep.mubr.f32.mxu0 0.0
      %3934 = vmatmul.mubr.f32.gmra.mxu0 %v3699
      %v3935 = vpop.f32.mrf.mxu0
      %v3936 = vadd.f32 0.0, %v3935
      %v3937 = vpop.f32.mrf.mxu0
      %3938 = vmatprep.mubr.f32.mxu0 0.0
      %3939 = vmatmul.mubr.f32.gmra.mxu0 %v3702
      %v3940 = vpop.f32.mrf.mxu0
      %v3941 = vadd.f32 0.0, %v3940
      %v3942 = vpop.f32.mrf.mxu0
      %3943 = vmatprep.mubr.f32.mxu0 0.0
      %3944 = vmatmul.mubr.f32.gmra.mxu0 %v3705
      %v3945 = vpop.f32.mrf.mxu0
      %v3946 = vadd.f32 0.0, %v3945
      %v3947 = vpop.f32.mrf.mxu0
      %3948 = vmatprep.mubr.f32.mxu0 0.0
      %3949 = vmatmul.mubr.f32.gmra.mxu0 %v3708
      %v3950 = vpop.f32.mrf.mxu0
      %v3951 = vadd.f32 0.0, %v3950
      %v3952 = vpop.f32.mrf.mxu0
      %3953 = vmatprep.mubr.f32.mxu0 0.0
      %3954 = vmatmul.mubr.f32.gmra.mxu0 %v3711
      %v3955 = vpop.f32.mrf.mxu0
      %v3956 = vadd.f32 0.0, %v3955
      %v3957 = vpop.f32.mrf.mxu0
      %3958 = vmatprep.mubr.f32.mxu0 0.0
      %3959 = vmatmul.mubr.f32.gmra.mxu0 %v3714
      %v3960 = vpop.f32.mrf.mxu0
      %v3961 = vadd.f32 0.0, %v3960
      %v3962 = vpop.f32.mrf.mxu0
      %3963 = vdwg.mxu0
      %v3964 = vadd.f32 %v3535, %v3786
      %v3965 = vadd.f32 %v3536, %v3791
      %v3966 = vadd.f32 %v3537, %v3796
      %v3967 = vadd.f32 %v3538, %v3801
      %v3968 = vadd.f32 %v3539, %v3806
      %v3969 = vadd.f32 %v3540, %v3811
      %v3970 = vadd.f32 %v3541, %v3816
      %v3971 = vadd.f32 %v3542, %v3821
      %v3972 = vadd.f32 %v3543, %v3826
      %v3973 = vadd.f32 %v3544, %v3831
      %v3974 = vadd.f32 %v3545, %v3836
      %v3975 = vadd.f32 %v3546, %v3841
      %v3976 = vadd.f32 %v3547, %v3846
      %v3977 = vadd.f32 %v3548, %v3851
      %v3978 = vadd.f32 %v3549, %v3856
      %v3979 = vadd.f32 %v3550, %v3861
      %v3980 = vadd.f32 %v3551, %v3866
      %v3981 = vadd.f32 %v3552, %v3871
      %v3982 = vadd.f32 %v3553, %v3876
      %v3983 = vadd.f32 %v3554, %v3881
      %v3984 = vadd.f32 %v3555, %v3886
      %v3985 = vadd.f32 %v3556, %v3891
      %v3986 = vadd.f32 %v3557, %v3896
      %v3987 = vadd.f32 %v3558, %v3901
      %v3988 = vadd.f32 %v3559, %v3906
      %v3989 = vadd.f32 %v3560, %v3911
      %v3990 = vadd.f32 %v3561, %v3916
      %v3991 = vadd.f32 %v3562, %v3921
      %v3992 = vadd.f32 %v3563, %v3926
      %v3993 = vadd.f32 %v3564, %v3931
      %v3994 = vadd.f32 %v3565, %v3936
      %v3995 = vadd.f32 %v3566, %v3941
      %v3996 = vadd.f32 %v3567, %v3946
      %v3997 = vadd.f32 %v3568, %v3951
      %v3998 = vadd.f32 %v3569, %v3956
      %v3999 = vadd.f32 %v3570, %v3961
      %4000 = vst [vmem:[%s204] sm:$0xff] %v3964
      %4001 = vst [vmem:[%s204 + $0x8] sm:$0xff] %v3965
      %4002 = vst [vmem:[%s204 + $0x10] sm:$0xff] %v3966
      %4003 = vst [vmem:[%s204 + $0x18] sm:$0xff] %v3967
      %4004 = vst [vmem:[%s204 + $0x20] sm:$0xff] %v3968
      %4005 = vst [vmem:[%s204 + $0x28] sm:$0xff] %v3969
      %4006 = vst [vmem:[%s204 + $0x30] sm:$0xff] %v3970
      %4007 = vst [vmem:[%s204 + $0x38] sm:$0xff] %v3971
      %4008 = vst [vmem:[%s204 + $0x40] sm:$0xff] %v3972
      %4009 = vst [vmem:[%s204 + $0x48] sm:$0xff] %v3973
      %4010 = vst [vmem:[%s204 + $0x50] sm:$0xff] %v3974
      %4011 = vst [vmem:[%s204 + $0x58] sm:$0xff] %v3975
      %4012 = vst [vmem:[%s204 + $0x60] sm:$0xff] %v3976
      %4013 = vst [vmem:[%s204 + $0x68] sm:$0xff] %v3977
      %4014 = vst [vmem:[%s204 + $0x70] sm:$0xff] %v3978
      %4015 = vst [vmem:[%s204 + $0x78] sm:$0xff] %v3979
      %4016 = vst [vmem:[%s204 + $0x80] sm:$0xff] %v3980
      %4017 = vst [vmem:[%s204 + $0x88] sm:$0xff] %v3981
      %4018 = vst [vmem:[%s204 + $0x90] sm:$0xff] %v3982
      %4019 = vst [vmem:[%s204 + $0x98] sm:$0xff] %v3983
      %4020 = vst [vmem:[%s204 + $0xa0] sm:$0xff] %v3984
      %4021 = vst [vmem:[%s204 + $0xa8] sm:$0xff] %v3985
      %4022 = vst [vmem:[%s204 + $0xb0] sm:$0xff] %v3986
      %4023 = vst [vmem:[%s204 + $0xb8] sm:$0xff] %v3987
      %4024 = vst [vmem:[%s204 + $0xc0] sm:$0xff] %v3988
      %4025 = vst [vmem:[%s204 + $0xc8] sm:$0xff] %v3989
      %4026 = vst [vmem:[%s204 + $0xd0] sm:$0xff] %v3990
      %4027 = vst [vmem:[%s204 + $0xd8] sm:$0xff] %v3991
      %4028 = vst [vmem:[%s204 + $0xe0] sm:$0xff] %v3992
      %4029 = vst [vmem:[%s204 + $0xe8] sm:$0xff] %v3993
      %4030 = vst [vmem:[%s204 + $0xf0] sm:$0xff] %v3994
      %4031 = vst [vmem:[%s204 + $0xf8] sm:$0xff] %v3995
      %4032 = vst [vmem:[%s204 + $0x100] sm:$0xff] %v3996
      %4033 = vst [vmem:[%s204 + $0x108] sm:$0xff] %v3997
      %4034 = vst [vmem:[%s204 + $0x110] sm:$0xff] %v3998
      %4035 = vst [vmem:[%s204 + $0x118] sm:$0xff] %v3999
      %v4036 = vld [vmem:[%s2] sm:$0xff]
      %v4037 = vld [vmem:[%s2 + $0x8] sm:$0xff]
      %v4038 = vld [vmem:[%s2 + $0x10] sm:$0xff]
      %v4039 = vld [vmem:[%s2 + $0x18] sm:$0xff]
      %v4040 = vld [vmem:[%s2 + $0x20] sm:$0xff]
      %v4041 = vld [vmem:[%s2 + $0x28] sm:$0xff]
      %v4042 = vld [vmem:[%s2 + $0x30] sm:$0xff]
      %v4043 = vld [vmem:[%s2 + $0x38] sm:$0xff]
      %v4044 = vld [vmem:[%s2 + $0x40] sm:$0xff]
      %v4045 = vld [vmem:[%s2 + $0x48] sm:$0xff]
      %v4046 = vld [vmem:[%s2 + $0x50] sm:$0xff]
      %v4047 = vld [vmem:[%s2 + $0x58] sm:$0xff]
      %v4048 = vld [vmem:[%s2 + $0x60] sm:$0xff]
      %v4049 = vld [vmem:[%s2 + $0x68] sm:$0xff]
      %v4050 = vld [vmem:[%s2 + $0x70] sm:$0xff]
      %v4051 = vld [vmem:[%s2 + $0x78] sm:$0xff]
      %v4052 = vld [vmem:[%s2 + $0x80] sm:$0xff]
      %v4053 = vld [vmem:[%s2 + $0x88] sm:$0xff]
      %v4054 = vld [vmem:[%s2 + $0x90] sm:$0xff]
      %v4055 = vld [vmem:[%s2 + $0x98] sm:$0xff]
      %v4056 = vld [vmem:[%s2 + $0xa0] sm:$0xff]
      %v4057 = vld [vmem:[%s2 + $0xa8] sm:$0xff]
      %v4058 = vld [vmem:[%s2 + $0xb0] sm:$0xff]
      %v4059 = vld [vmem:[%s2 + $0xb8] sm:$0xff]
      %v4060 = vld [vmem:[%s2 + $0xc0] sm:$0xff]
      %v4061 = vld [vmem:[%s2 + $0xc8] sm:$0xff]
      %v4062 = vld [vmem:[%s2 + $0xd0] sm:$0xff]
      %v4063 = vld [vmem:[%s2 + $0xd8] sm:$0xff]
      %v4064 = vld [vmem:[%s2 + $0xe0] sm:$0xff]
      %v4065 = vld [vmem:[%s2 + $0xe8] sm:$0xff]
      %v4066 = vld [vmem:[%s2 + $0xf0] sm:$0xff]
      %v4067 = vld [vmem:[%s2 + $0xf8] sm:$0xff]
      %v4068 = vld [vmem:[%s2 + $0x100] sm:$0xff]
      %v4069 = vld [vmem:[%s2 + $0x108] sm:$0xff]
      %v4070 = vld [vmem:[%s2 + $0x110] sm:$0xff]
      %v4071 = vld [vmem:[%s2 + $0x118] sm:$0xff]
      %4073 = vset.pattern.permute.xlu0 0
      %4074 = vperm.xlu0 %4073, %v4036
      %v4075 = vpop.permute.xlu0 %4074
      %4078 = vset.pattern.permute.xlu0 0
      %4079 = vperm.xlu0 %4078, %v4037
      %v4080 = vpop.permute.xlu0 %4079
      %4083 = vset.pattern.permute.xlu0 0
      %4084 = vperm.xlu0 %4083, %v4038
      %v4085 = vpop.permute.xlu0 %4084
      %4088 = vset.pattern.permute.xlu0 0
      %4089 = vperm.xlu0 %4088, %v4039
      %v4090 = vpop.permute.xlu0 %4089
      %4093 = vset.pattern.permute.xlu0 0
      %4094 = vperm.xlu0 %4093, %v4040
      %v4095 = vpop.permute.xlu0 %4094
      %4098 = vset.pattern.permute.xlu0 0
      %4099 = vperm.xlu0 %4098, %v4041
      %v4100 = vpop.permute.xlu0 %4099
      %4103 = vset.pattern.permute.xlu0 0
      %4104 = vperm.xlu0 %4103, %v4042
      %v4105 = vpop.permute.xlu0 %4104
      %4108 = vset.pattern.permute.xlu0 0
      %4109 = vperm.xlu0 %4108, %v4043
      %v4110 = vpop.permute.xlu0 %4109
      %4113 = vset.pattern.permute.xlu0 0
      %4114 = vperm.xlu0 %4113, %v4044
      %v4115 = vpop.permute.xlu0 %4114
      %4118 = vset.pattern.permute.xlu0 0
      %4119 = vperm.xlu0 %4118, %v4045
      %v4120 = vpop.permute.xlu0 %4119
      %4123 = vset.pattern.permute.xlu0 0
      %4124 = vperm.xlu0 %4123, %v4046
      %v4125 = vpop.permute.xlu0 %4124
      %4128 = vset.pattern.permute.xlu0 0
      %4129 = vperm.xlu0 %4128, %v4047
      %v4130 = vpop.permute.xlu0 %4129
      %4133 = vset.pattern.permute.xlu0 0
      %4134 = vperm.xlu0 %4133, %v4048
      %v4135 = vpop.permute.xlu0 %4134
      %4138 = vset.pattern.permute.xlu0 0
      %4139 = vperm.xlu0 %4138, %v4049
      %v4140 = vpop.permute.xlu0 %4139
      %4143 = vset.pattern.permute.xlu0 0
      %4144 = vperm.xlu0 %4143, %v4050
      %v4145 = vpop.permute.xlu0 %4144
      %4148 = vset.pattern.permute.xlu0 0
      %4149 = vperm.xlu0 %4148, %v4051
      %v4150 = vpop.permute.xlu0 %4149
      %4153 = vset.pattern.permute.xlu0 0
      %4154 = vperm.xlu0 %4153, %v4052
      %v4155 = vpop.permute.xlu0 %4154
      %4158 = vset.pattern.permute.xlu0 0
      %4159 = vperm.xlu0 %4158, %v4053
      %v4160 = vpop.permute.xlu0 %4159
      %4163 = vset.pattern.permute.xlu0 0
      %4164 = vperm.xlu0 %4163, %v4054
      %v4165 = vpop.permute.xlu0 %4164
      %4168 = vset.pattern.permute.xlu0 0
      %4169 = vperm.xlu0 %4168, %v4055
      %v4170 = vpop.permute.xlu0 %4169
      %4173 = vset.pattern.permute.xlu0 0
      %4174 = vperm.xlu0 %4173, %v4056
      %v4175 = vpop.permute.xlu0 %4174
      %4178 = vset.pattern.permute.xlu0 0
      %4179 = vperm.xlu0 %4178, %v4057
      %v4180 = vpop.permute.xlu0 %4179
      %4183 = vset.pattern.permute.xlu0 0
      %4184 = vperm.xlu0 %4183, %v4058
      %v4185 = vpop.permute.xlu0 %4184
      %4188 = vset.pattern.permute.xlu0 0
      %4189 = vperm.xlu0 %4188, %v4059
      %v4190 = vpop.permute.xlu0 %4189
      %4193 = vset.pattern.permute.xlu0 0
      %4194 = vperm.xlu0 %4193, %v4060
      %v4195 = vpop.permute.xlu0 %4194
      %4198 = vset.pattern.permute.xlu0 0
      %4199 = vperm.xlu0 %4198, %v4061
      %v4200 = vpop.permute.xlu0 %4199
      %4203 = vset.pattern.permute.xlu0 0
      %4204 = vperm.xlu0 %4203, %v4062
      %v4205 = vpop.permute.xlu0 %4204
      %4208 = vset.pattern.permute.xlu0 0
      %4209 = vperm.xlu0 %4208, %v4063
      %v4210 = vpop.permute.xlu0 %4209
      %4213 = vset.pattern.permute.xlu0 0
      %4214 = vperm.xlu0 %4213, %v4064
      %v4215 = vpop.permute.xlu0 %4214
      %4218 = vset.pattern.permute.xlu0 0
      %4219 = vperm.xlu0 %4218, %v4065
      %v4220 = vpop.permute.xlu0 %4219
      %4223 = vset.pattern.permute.xlu0 0
      %4224 = vperm.xlu0 %4223, %v4066
      %v4225 = vpop.permute.xlu0 %4224
      %4228 = vset.pattern.permute.xlu0 0
      %4229 = vperm.xlu0 %4228, %v4067
      %v4230 = vpop.permute.xlu0 %4229
      %4233 = vset.pattern.permute.xlu0 0
      %4234 = vperm.xlu0 %4233, %v4068
      %v4235 = vpop.permute.xlu0 %4234
      %4238 = vset.pattern.permute.xlu0 0
      %4239 = vperm.xlu0 %4238, %v4069
      %v4240 = vpop.permute.xlu0 %4239
      %4243 = vset.pattern.permute.xlu0 0
      %4244 = vperm.xlu0 %4243, %v4070
      %v4245 = vpop.permute.xlu0 %4244
      %4248 = vset.pattern.permute.xlu0 0
      %4249 = vperm.xlu0 %4248, %v4071
      %v4250 = vpop.permute.xlu0 %4249
      %v4252 = vmul.f32 %v3964, %v4075
      %v4253 = vmul.f32 %v3965, %v4080
      %v4254 = vmul.f32 %v3966, %v4085
      %v4255 = vmul.f32 %v3967, %v4090
      %v4256 = vmul.f32 %v3968, %v4095
      %v4257 = vmul.f32 %v3969, %v4100
      %v4258 = vmul.f32 %v3970, %v4105
      %v4259 = vmul.f32 %v3971, %v4110
      %v4260 = vmul.f32 %v3972, %v4115
      %v4261 = vmul.f32 %v3973, %v4120
      %v4262 = vmul.f32 %v3974, %v4125
      %v4263 = vmul.f32 %v3975, %v4130
      %v4264 = vmul.f32 %v3976, %v4135
      %v4265 = vmul.f32 %v3977, %v4140
      %v4266 = vmul.f32 %v3978, %v4145
      %v4267 = vmul.f32 %v3979, %v4150
      %v4268 = vmul.f32 %v3980, %v4155
      %v4269 = vmul.f32 %v3981, %v4160
      %v4270 = vmul.f32 %v3982, %v4165
      %v4271 = vmul.f32 %v3983, %v4170
      %v4272 = vmul.f32 %v3984, %v4175
      %v4273 = vmul.f32 %v3985, %v4180
      %v4274 = vmul.f32 %v3986, %v4185
      %v4275 = vmul.f32 %v3987, %v4190
      %v4276 = vmul.f32 %v3988, %v4195
      %v4277 = vmul.f32 %v3989, %v4200
      %v4278 = vmul.f32 %v3990, %v4205
      %v4279 = vmul.f32 %v3991, %v4210
      %v4280 = vmul.f32 %v3992, %v4215
      %v4281 = vmul.f32 %v3993, %v4220
      %v4282 = vmul.f32 %v3994, %v4225
      %v4283 = vmul.f32 %v3995, %v4230
      %v4284 = vmul.f32 %v3996, %v4235
      %v4285 = vmul.f32 %v3997, %v4240
      %v4286 = vmul.f32 %v3998, %v4245
      %v4287 = vmul.f32 %v3999, %v4250
      %v4288 = vadd.f32 %v4252, %v4253
      %v4289 = vadd.f32 %v4288, %v4254
      %v4290 = vadd.f32 %v4289, %v4255
      %v4291 = vadd.f32 %v4290, %v4256
      %v4292 = vadd.f32 %v4291, %v4257
      %v4293 = vadd.f32 %v4292, %v4258
      %v4294 = vadd.f32 %v4293, %v4259
      %v4295 = vadd.f32 %v4294, %v4260
      %v4296 = vadd.f32 %v4295, %v4261
      %v4297 = vadd.f32 %v4296, %v4262
      %v4298 = vadd.f32 %v4297, %v4263
      %v4299 = vadd.f32 %v4298, %v4264
      %v4300 = vadd.f32 %v4299, %v4265
      %v4301 = vadd.f32 %v4300, %v4266
      %v4302 = vadd.f32 %v4301, %v4267
      %v4303 = vadd.f32 %v4302, %v4268
      %v4304 = vadd.f32 %v4303, %v4269
      %v4305 = vadd.f32 %v4304, %v4270
      %v4306 = vadd.f32 %v4305, %v4271
      %v4307 = vadd.f32 %v4306, %v4272
      %v4308 = vadd.f32 %v4307, %v4273
      %v4309 = vadd.f32 %v4308, %v4274
      %v4310 = vadd.f32 %v4309, %v4275
      %v4311 = vadd.f32 %v4310, %v4276
      %v4312 = vadd.f32 %v4311, %v4277
      %v4313 = vadd.f32 %v4312, %v4278
      %v4314 = vadd.f32 %v4313, %v4279
      %v4315 = vadd.f32 %v4314, %v4280
      %v4316 = vadd.f32 %v4315, %v4281
      %v4317 = vadd.f32 %v4316, %v4282
      %v4318 = vadd.f32 %v4317, %v4283
      %v4319 = vadd.f32 %v4318, %v4284
      %v4320 = vadd.f32 %v4319, %v4285
      %v4321 = vadd.f32 %v4320, %v4286
      %v4322 = vadd.f32 %v4321, %v4287
      %v4323 = vrot.slane %v4322, 4
      %v4324 = vadd.f32 %v4322, %v4323
      %v4325 = vrot.slane %v4324, 2
      %v4326 = vadd.f32 %v4324, %v4325
      %v4327 = vrot.slane %v4326, 1
      %v4328 = vadd.f32 %v4326, %v4327
      %v4329 = vmul.f32 %v4252, %v4252
      %v4330 = vmul.f32 %v4253, %v4253
      %v4331 = vmul.f32 %v4254, %v4254
      %v4332 = vmul.f32 %v4255, %v4255
      %v4333 = vmul.f32 %v4256, %v4256
      %v4334 = vmul.f32 %v4257, %v4257
      %v4335 = vmul.f32 %v4258, %v4258
      %v4336 = vmul.f32 %v4259, %v4259
      %v4337 = vmul.f32 %v4260, %v4260
      %v4338 = vmul.f32 %v4261, %v4261
      %v4339 = vmul.f32 %v4262, %v4262
      %v4340 = vmul.f32 %v4263, %v4263
      %v4341 = vmul.f32 %v4264, %v4264
      %v4342 = vmul.f32 %v4265, %v4265
      %v4343 = vmul.f32 %v4266, %v4266
      %v4344 = vmul.f32 %v4267, %v4267
      %v4345 = vmul.f32 %v4268, %v4268
      %v4346 = vmul.f32 %v4269, %v4269
      %v4347 = vmul.f32 %v4270, %v4270
      %v4348 = vmul.f32 %v4271, %v4271
      %v4349 = vmul.f32 %v4272, %v4272
      %v4350 = vmul.f32 %v4273, %v4273
      %v4351 = vmul.f32 %v4274, %v4274
      %v4352 = vmul.f32 %v4275, %v4275
      %v4353 = vmul.f32 %v4276, %v4276
      %v4354 = vmul.f32 %v4277, %v4277
      %v4355 = vmul.f32 %v4278, %v4278
      %v4356 = vmul.f32 %v4279, %v4279
      %v4357 = vmul.f32 %v4280, %v4280
      %v4358 = vmul.f32 %v4281, %v4281
      %v4359 = vmul.f32 %v4282, %v4282
      %v4360 = vmul.f32 %v4283, %v4283
      %v4361 = vmul.f32 %v4284, %v4284
      %v4362 = vmul.f32 %v4285, %v4285
      %v4363 = vmul.f32 %v4286, %v4286
      %v4364 = vmul.f32 %v4287, %v4287
      %v4365 = vadd.f32 %v4329, %v4330
      %v4366 = vadd.f32 %v4365, %v4331
      %v4367 = vadd.f32 %v4366, %v4332
      %v4368 = vadd.f32 %v4367, %v4333
      %v4369 = vadd.f32 %v4368, %v4334
      %v4370 = vadd.f32 %v4369, %v4335
      %v4371 = vadd.f32 %v4370, %v4336
      %v4372 = vadd.f32 %v4371, %v4337
      %v4373 = vadd.f32 %v4372, %v4338
      %v4374 = vadd.f32 %v4373, %v4339
      %v4375 = vadd.f32 %v4374, %v4340
      %v4376 = vadd.f32 %v4375, %v4341
      %v4377 = vadd.f32 %v4376, %v4342
      %v4378 = vadd.f32 %v4377, %v4343
      %v4379 = vadd.f32 %v4378, %v4344
      %v4380 = vadd.f32 %v4379, %v4345
      %v4381 = vadd.f32 %v4380, %v4346
      %v4382 = vadd.f32 %v4381, %v4347
      %v4383 = vadd.f32 %v4382, %v4348
      %v4384 = vadd.f32 %v4383, %v4349
      %v4385 = vadd.f32 %v4384, %v4350
      %v4386 = vadd.f32 %v4385, %v4351
      %v4387 = vadd.f32 %v4386, %v4352
      %v4388 = vadd.f32 %v4387, %v4353
      %v4389 = vadd.f32 %v4388, %v4354
      %v4390 = vadd.f32 %v4389, %v4355
      %v4391 = vadd.f32 %v4390, %v4356
      %v4392 = vadd.f32 %v4391, %v4357
      %v4393 = vadd.f32 %v4392, %v4358
      %v4394 = vadd.f32 %v4393, %v4359
      %v4395 = vadd.f32 %v4394, %v4360
      %v4396 = vadd.f32 %v4395, %v4361
      %v4397 = vadd.f32 %v4396, %v4362
      %v4398 = vadd.f32 %v4397, %v4363
      %v4399 = vadd.f32 %v4398, %v4364
      %v4400 = vrot.slane %v4399, 4
      %v4401 = vadd.f32 %v4399, %v4400
      %v4402 = vrot.slane %v4401, 2
      %v4403 = vadd.f32 %v4401, %v4402
      %v4404 = vrot.slane %v4403, 1
      %v4405 = vadd.f32 %v4403, %v4404
      %vm4406 = vcmask 1040384
      %v4407 = vsel %vm4406, %v4328, %v4405
      %4408 = vst [vmem:[%s208] sm:$0x3] %v4407
      %p4409 = scmp.lt.s32.totalorder %s16, 1
      %s4410 = scalar_select %p4409, %s16, 1
      %s4411 = smul.addr %s4410, 36
      %s4412 = smul.addr %s4411, 8
      %s4413 = scalar_lea.vmem %s3, %s4412
      %p4414 = scmp.lt.s32.totalorder %s16, 1
      %s4415 = scalar_select %p4414, %s16, 1
      %s4416 = smul.addr %s4415, 2
      %s4417 = scalar_lea.vmem %s4, %s4416
      // Predicated region
      $region33: #{conv_block_forward.2} parent=31 // pred_check
        %p4418 = pneg %p102
      $region34: #{conv_block_forward.2} parent=31 // pred_check_branch
        %4420 = sbr.rel (%p4418) target = $region36
      $region35: #{conv_block_forward.2} parent=31 // pred_region
        _
      $region36: #{conv_block_forward.2} parent=31 // pred_fallthru
        _
      // Predicated region
      $region37: #{conv_block_forward.2} parent=31 // pred_check
        %p4421 = pneg %p128
      $region38: #{conv_block_forward.2} parent=31 // pred_check_branch
        %4423 = sbr.rel (%p4421) target = $region40
      $region39: #{conv_block_forward.2} parent=31 // pred_region
        _
      $region40: #{conv_block_forward.2} parent=31 // pred_fallthru
        _
    $region32: #{conv_block_forward.2} parent=5 // pred_fallthru
      _
    %p4424 = scmp.le.s32.totalorder 2, %s11
    // Predicated region
    $region41: #{conv_block_forward.2} parent=5 // pred_check
      %p4425 = pneg %p4424
    $region42: #{conv_block_forward.2} parent=5 // pred_check_branch
      %4427 = sbr.rel (%p4425) target = $region44
    $region43: #{conv_block_forward.2} parent=5 // pred_region
      %s4428 = ssub.s32 %s11, 2
      // Predicated region
      $region45: #{conv_block_forward.2} parent=43 // pred_check
        %p4429 = pneg %p108
      $region46: #{conv_block_forward.2} parent=43 // pred_check_branch
        %4431 = sbr.rel (%p4429) target = $region48
      $region47: #{conv_block_forward.2} parent=43 // pred_region
        %p4432 = scmp.lt.s32.totalorder %s17, 1
        %s4433 = scalar_select %p4432, %s17, 1
        %s4434 = smul.addr %s4433, 36
        %s4435 = smul.addr %s4434, 8
        %s4436 = scalar_lea.vmem %s3, %s4435
      $region48: #{conv_block_forward.2} parent=43 // pred_fallthru
        _
      // Predicated region
      $region49: #{conv_block_forward.2} parent=43 // pred_check
        %p4437 = pneg %p134
      $region50: #{conv_block_forward.2} parent=43 // pred_check_branch
        %4439 = sbr.rel (%p4437) target = $region52
      $region51: #{conv_block_forward.2} parent=43 // pred_region
        %p4440 = scmp.lt.s32.totalorder %s17, 1
        %s4441 = scalar_select %p4440, %s17, 1
        %s4442 = smul.addr %s4441, 2
        %s4443 = scalar_lea.vmem %s4, %s4442
      $region52: #{conv_block_forward.2} parent=43 // pred_fallthru
        _
    $region44: #{conv_block_forward.2} parent=5 // pred_fallthru
      _
  $region6: #{conv_block_forward.2} parent=0 // loop_footer
    %s15 = sadd.s32 1, %s11
  $region7: #{conv_block_forward.2} parent=0 // loop_footer_branch
    %10 = sbr.rel target = $region3
  $region8: #{conv_block_forward.2} parent=0 // loop_exit
    _

</llo_original>
